<compile_context>
chip_gen: v7x
topology: tpu7x:2x2x1
jax: 0.10.0
libtpu: 0.0.40
codegen_flags: <defaults>
</compile_context>

<pallas_src>
import jax
import jax.numpy as jnp
import numpy as np
from jax import lax
from jax.experimental import pallas as pl
from jax.experimental.pallas import tpu as pltpu

N_BATCH = 2
C_IN = 4
SPATIAL = 14                  # AvgPool(5,3): (14-5)//3 + 1 = 4  -> 128*4*4 = 2048
HW = SPATIAL * SPATIAL        # 196
C_CONV = 128
POOL_K = 5
POOL_S = 3
POOL_OUT = (SPATIAL - POOL_K) // POOL_S + 1    # 4
POOL_PIX = POOL_OUT * POOL_OUT                 # 16
FC1_IN = C_CONV * POOL_PIX                     # 2048
FC1_OUT = 1024
NUM_CLASSES = 10
PAD_CLASSES = 128             # lane-dense fc2 output; sliced back to NUM_CLASSES


def _tensorcores_per_chip():
    """2 TensorCores on v7x-class chips; v5e / v6e are single-TC."""
    try:
        kind = jax.devices()[0].device_kind.lower().replace(" ", "")
    except Exception:
        return 1
    return 2 if ("v7" in kind or "tpu7" in kind) else 1


N_PAR = _tensorcores_per_chip()   # "parallel" grid axis (1 on v5e/v6e, 2 on v7x)
TILE_N = FC1_OUT // N_PAR         # one fc1 column chunk per TensorCore


# ---------------------------------------------------------------------------
# Fused kernel (one grid step per TensorCore):
#   start this core's fc1-weight DMA  ->  pool+conv+ReLU+flatten (hidden under
#   the DMA)  ->  wait  ->  fc1 (bf16 MXU) + ReLU  ->  fc2 partial.
#
#   x_ref  : (N*196, Cin) f32          pm_ref : (N*16, N*196) f32 pooling matrix
#   wc_ref : (Cin, 128) f32            bc_ref : (1, 128) f32
#   b1_ref : (1, 1, TILE_N) f32        w2_ref : (1, TILE_N, 128) bf16
#   w1_hbm : (N_PAR, 2048, TILE_N) bf16 in HBM (memory_space=pl.ANY)
#   o_ref  : (1, N, 128) f32
#   w1_vmem: (2048, TILE_N) bf16 VMEM scratch,  sem: DMA semaphore
# ---------------------------------------------------------------------------
def inception_aux_kernel(x_ref, pm_ref, wc_ref, bc_ref, b1_ref, w2_ref, w1_hbm,
                         o_ref, w1_vmem, sem):
    p = pl.program_id(0)

    # Kick off this core's fc1-weight stream first so the cold path below is
    # fully overlapped with the (dominant) HBM DMA.
    w1_copy = pltpu.make_async_copy(w1_hbm.at[p], w1_vmem, sem)
    w1_copy.start()

    n = o_ref.shape[1]
    # 1x1 conv as a channel matmul on the un-pooled map (lane-dense 128 out),
    # then AvgPool(5,3) for the whole batch via a block-diagonal pooling
    # matrix (lane-dense 128 out), bias, ReLU.
    cx = jnp.dot(x_ref[...], wc_ref[...],
                 preferred_element_type=jnp.float32)                 # (N*196, 128)
    act = jnp.dot(pm_ref[...], cx,
                  preferred_element_type=jnp.float32) + bc_ref[...]  # (N*16, 128)
    act = jnp.maximum(act, 0.0)
    # Row-major flatten gives flat index = pix*128 + c; fc1 rows were permuted
    # in prepare_params() to match this order.
    flat = act.reshape(n, FC1_IN).astype(jnp.bfloat16)               # (N, 2048)

    w1_copy.wait()

    # TODO(synk): F.dropout(p=0.5) in training mode (random mask) not
    # implemented; eval-mode identity is used, matching PyTorch .eval().
    h = jnp.dot(flat, w1_vmem[...],
                preferred_element_type=jnp.float32) + b1_ref[0]      # (N, TILE_N)
    h = jnp.maximum(h, 0.0).astype(jnp.bfloat16)
    o_ref[0] = jnp.dot(h, w2_ref[0], preferred_element_type=jnp.float32)


# ---------------------------------------------------------------------------
# One-time weight preparation (layout + dtype). NOT in the per-call path.
# ---------------------------------------------------------------------------
def prepare_params(params):
    conv_w, conv_b, fc1_w, fc1_b, fc2_w, fc2_b = params

    # Single-image pooling matrix: pooled[o, s] averages the 5x5 window
    # (stride 3); block-diagonal over the static batch so pooling of the whole
    # batch is one matmul.
    pm1 = np.zeros((POOL_PIX, HW), dtype=np.float32)
    for oh in range(POOL_OUT):
        for ow in range(POOL_OUT):
            o = oh * POOL_OUT + ow
            for dh in range(POOL_K):
                for dw in range(POOL_K):
                    s = (oh * POOL_S + dh) * SPATIAL + (ow * POOL_S + dw)
                    pm1[o, s] = 1.0 / (POOL_K * POOL_K)
    pm = jnp.asarray(np.kron(np.eye(N_BATCH, dtype=np.float32), pm1))  # (N*16, N*196)

    wc_t = jnp.transpose(conv_w.reshape(C_CONV, C_IN))            # (Cin, 128)
    bc = conv_b.reshape(1, C_CONV)

    # fc1: permute rows from PyTorch flat order (c*16 + pix) to the kernel's
    # (pix*128 + c) order, transpose to (in, out), split into one contiguous
    # column chunk per TensorCore, cast to bf16 (halves the HBM weight stream,
    # the dominant cost of this module).
    w1 = jnp.transpose(fc1_w.reshape(FC1_OUT, C_CONV, POOL_PIX),
                       (2, 1, 0)).reshape(FC1_IN, FC1_OUT)
    w1 = jnp.transpose(w1.reshape(FC1_IN, N_PAR, TILE_N),
                       (1, 0, 2)).astype(jnp.bfloat16)             # (N_PAR, 2048, TILE_N)
    b1 = fc1_b.reshape(N_PAR, 1, TILE_N)

    # fc2: transpose, pad class dim to 128 lanes, bf16, split per core
    # (bias added in the wrapper).
    w2 = jnp.zeros((FC1_OUT, PAD_CLASSES), jnp.float32).at[:, :NUM_CLASSES].set(
        jnp.transpose(fc2_w))
    w2 = w2.reshape(N_PAR, TILE_N, PAD_CLASSES).astype(jnp.bfloat16)
    return pm, wc_t, bc, w1, b1, w2, fc2_b


@jax.jit
def inception_aux_forward(x_nchw, prepared):
    pm, wc_t, bc, w1, b1, w2, fc2_b = prepared
    n = x_nchw.shape[0]
    # NCHW -> (N*H*W, Cin); tiny (~6 KB) layout glue for the conv matmul.
    x2 = jnp.transpose(x_nchw, (0, 2, 3, 1)).reshape(n * HW, C_IN)

    cost = pl.CostEstimate(
        flops=2 * n * (HW * C_IN * C_CONV + POOL_PIX * HW * C_CONV
                       + FC1_IN * FC1_OUT + FC1_OUT * PAD_CLASSES),
        transcendentals=0,
        bytes_accessed=w1.size * 2 + w2.size * 2 + x2.size * 4 + pm.size * 4
                       + N_PAR * n * PAD_CLASSES * 4)

    partial = pl.pallas_call(
        inception_aux_kernel,
        out_shape=jax.ShapeDtypeStruct((N_PAR, n, PAD_CLASSES), jnp.float32),
        grid_spec=pltpu.PrefetchScalarGridSpec(
            num_scalar_prefetch=0,
            grid=(N_PAR,),
            in_specs=[
                pl.BlockSpec((n * HW, C_IN), lambda p: (0, 0)),            # x
                pl.BlockSpec((n * POOL_PIX, n * HW), lambda p: (0, 0)),    # pool mat
                pl.BlockSpec((C_IN, C_CONV), lambda p: (0, 0)),            # conv w
                pl.BlockSpec((1, C_CONV), lambda p: (0, 0)),               # conv b
                pl.BlockSpec((1, 1, TILE_N), lambda p: (p, 0, 0)),         # fc1 b chunk
                pl.BlockSpec((1, TILE_N, PAD_CLASSES), lambda p: (p, 0, 0)),  # fc2 w chunk
                pl.BlockSpec(memory_space=pl.ANY),                         # fc1 w (HBM)
            ],
            out_specs=pl.BlockSpec((1, n, PAD_CLASSES), lambda p: (p, 0, 0)),
            scratch_shapes=[pltpu.VMEM((FC1_IN, TILE_N), jnp.bfloat16),
                            pltpu.SemaphoreType.DMA(())],
        ),
        compiler_params=pltpu.CompilerParams(
            dimension_semantics=("parallel",),
            vmem_limit_bytes=32 * 1024 * 1024),
        cost_estimate=cost,
    )(x2, pm, wc_t, bc, b1, w2, w1)

    # Combine per-core partial fc2 outputs (no-op on single-TC chips),
    # add fc2 bias, drop the class padding.
    out = partial[0] if N_PAR == 1 else jnp.sum(partial, axis=0)
    return out[:, :NUM_CLASSES] + fc2_b


# ---------------------------------------------------------------------------
# Pure-JAX reference (eval mode), precision-matched to the kernel (fc1 weight,
# flattened activations, fc1 output and fc2 weight rounded to bf16).
# ---------------------------------------------------------------------------
def reference_forward(x_nchw, params):
    conv_w, conv_b, fc1_w, fc1_b, fc2_w, fc2_b = params
    pooled = lax.reduce_window(
        x_nchw, 0.0, lax.add,
        window_dimensions=(1, 1, POOL_K, POOL_K),
        window_strides=(1, 1, POOL_S, POOL_S),
        padding="VALID") / float(POOL_K * POOL_K)
    conv = jnp.einsum("nchw,kc->nkhw", pooled, conv_w.reshape(C_CONV, C_IN))
    conv = jnp.maximum(conv + conv_b[None, :, None, None], 0.0)
    flat = conv.reshape(x_nchw.shape[0], -1)
    flat = flat.astype(jnp.bfloat16).astype(jnp.float32)
    w1 = fc1_w.astype(jnp.bfloat16).astype(jnp.float32)
    h = jnp.maximum(flat @ w1.T + fc1_b, 0.0)
    h = h.astype(jnp.bfloat16).astype(jnp.float32)
    w2 = fc2_w.astype(jnp.bfloat16).astype(jnp.float32)
    return h @ w2.T + fc2_b


if __name__ == "__main__":
    key = jax.random.PRNGKey(0)
    k_x, k_cw, k_cb, k_w1, k_b1, k_w2, k_b2 = jax.random.split(key, 7)

    x = jax.random.normal(k_x, (N_BATCH, C_IN, SPATIAL, SPATIAL), dtype=jnp.float32)
    conv_w = 0.1 * jax.random.normal(k_cw, (C_CONV, C_IN, 1, 1), dtype=jnp.float32)
    conv_b = 0.1 * jax.random.normal(k_cb, (C_CONV,), dtype=jnp.float32)
    fc1_w = 0.02 * jax.random.normal(k_w1, (FC1_OUT, FC1_IN), dtype=jnp.float32)
    fc1_b = 0.02 * jax.random.normal(k_b1, (FC1_OUT,), dtype=jnp.float32)
    fc2_w = 0.02 * jax.random.normal(k_w2, (NUM_CLASSES, FC1_OUT), dtype=jnp.float32)
    fc2_b = 0.02 * jax.random.normal(k_b2, (NUM_CLASSES,), dtype=jnp.float32)
    params = (conv_w, conv_b, fc1_w, fc1_b, fc2_w, fc2_b)

    prepared = prepare_params(params)          # one-time layout / dtype prep
    out = jax.block_until_ready(inception_aux_forward(x, prepared))
    ref = jax.block_until_ready(reference_forward(x, params))

    assert out.shape == (N_BATCH, NUM_CLASSES), out.shape
    max_diff = float(jnp.max(jnp.abs(out - ref)))
    assert jnp.allclose(out, ref, rtol=3e-3, atol=3e-3), \
        f"mismatch: max abs diff {max_diff}"
    print("KERNEL_OK")
</pallas_src>

<mosaic_0001>
module attributes {stable_mosaic.version = 11 : i64} {
  func.func @inception_aux_kernel(%arg0: i32, %arg1: memref<392x4xf32, #tpu.memory_space<vmem>>, %arg2: memref<32x392xf32, #tpu.memory_space<vmem>>, %arg3: memref<4x128xf32, #tpu.memory_space<vmem>>, %arg4: memref<1x128xf32, #tpu.memory_space<vmem>>, %arg5: memref<1x1x1024xf32, #tpu.memory_space<vmem>>, %arg6: memref<1x1024x128xbf16, #tpu.memory_space<vmem>>, %arg7: memref<1x2048x1024xbf16, #tpu.memory_space<any>>, %arg8: memref<1x2x128xf32, #tpu.memory_space<vmem>>, %arg9: memref<2048x1024xbf16, #tpu.memory_space<vmem>>, %arg10: memref<!tpu.dma_semaphore, #tpu.memory_space<semaphore_mem>>) attributes {dimension_semantics = [#tpu.dimension_semantics<parallel>], iteration_bounds = array<i64: 1>, scalar_prefetch = 0 : i64, scratch_operands = 2 : i64, tpu.core_type = #tpu.core_type<tc>, window_params = [{pipeline_mode = #tpu.pipeline_mode<synchronous>, transform_indices = @transform_0, window_bounds = array<i64: 392, 4>}, {pipeline_mode = #tpu.pipeline_mode<synchronous>, transform_indices = @transform_1, window_bounds = array<i64: 32, 392>}, {pipeline_mode = #tpu.pipeline_mode<synchronous>, transform_indices = @transform_2, window_bounds = array<i64: 4, 128>}, {pipeline_mode = #tpu.pipeline_mode<synchronous>, transform_indices = @transform_3, window_bounds = array<i64: 1, 128>}, {transform_indices = @transform_4, window_bounds = array<i64: 1, 1, 1024>}, {transform_indices = @transform_5, window_bounds = array<i64: 1, 1024, 128>}, {}, {transform_indices = @transform_7, window_bounds = array<i64: 1, 2, 128>}]} {
    %c0_i32 = arith.constant 0 : i32
    %c0_i32_0 = arith.constant 0 : i32
    %0 = tpu.memref_slice %arg7[%arg0, %c0_i32, %c0_i32_0] : memref<1x2048x1024xbf16, #tpu.memory_space<any>> -> memref<1x2048x1024xbf16, #tpu.memory_space<any>>
    %1 = tpu.memref_squeeze %0 : memref<1x2048x1024xbf16, #tpu.memory_space<any>> -> memref<2048x1024xbf16, #tpu.memory_space<any>>
    tpu.enqueue_dma source(%1 : memref<2048x1024xbf16, #tpu.memory_space<any>>) target(%arg9 : memref<2048x1024xbf16, #tpu.memory_space<vmem>>) target_semaphore(%arg10 : memref<!tpu.dma_semaphore, #tpu.memory_space<semaphore_mem>>)
    %c0 = arith.constant 0 : index
    %c0_1 = arith.constant 0 : index
    %2 = vector.load %arg1[%c0, %c0_1] : memref<392x4xf32, #tpu.memory_space<vmem>>, vector<392x4xf32>
    %c0_2 = arith.constant 0 : index
    %c0_3 = arith.constant 0 : index
    %3 = vector.load %arg3[%c0_2, %c0_3] : memref<4x128xf32, #tpu.memory_space<vmem>>, vector<4x128xf32>
    %cst = arith.constant dense<0.000000e+00> : vector<392x128xf32>
    %4 = tpu.matmul %2, %3, %cst {dimension_numbers = #tpu.dot_dimension_numbers<[1], [0], [0], [1], [0, 0, 1, 1], [], []>} : vector<392x4xf32>, vector<4x128xf32>, vector<392x128xf32> -> vector<392x128xf32>
    %c0_4 = arith.constant 0 : index
    %c0_5 = arith.constant 0 : index
    %5 = vector.load %arg2[%c0_4, %c0_5] : memref<32x392xf32, #tpu.memory_space<vmem>>, vector<32x392xf32>
    %cst_6 = arith.constant dense<0.000000e+00> : vector<32x128xf32>
    %6 = tpu.matmul %5, %4, %cst_6 {dimension_numbers = #tpu.dot_dimension_numbers<[1], [0], [0], [1], [0, 0, 1, 1], [], []>} : vector<32x392xf32>, vector<392x128xf32>, vector<32x128xf32> -> vector<32x128xf32>
    %c0_7 = arith.constant 0 : index
    %c0_8 = arith.constant 0 : index
    %7 = vector.load %arg4[%c0_7, %c0_8] : memref<1x128xf32, #tpu.memory_space<vmem>>, vector<1x128xf32>
    %8 = vector.broadcast %7 : vector<1x128xf32> to vector<32x128xf32>
    %9 = arith.addf %6, %8 : vector<32x128xf32>
    %cst_9 = arith.constant 0.000000e+00 : f32
    %10 = vector.broadcast %cst_9 : f32 to vector<32x128xf32>
    %11 = arith.maximumf %9, %10 : vector<32x128xf32>
    %12 = vector.shape_cast %11 : vector<32x128xf32> to vector<2x2048xf32>
    %13 = arith.truncf %12 : vector<2x2048xf32> to vector<2x2048xbf16>
    %c0_i32_10 = arith.constant 0 : i32
    %c0_i32_11 = arith.constant 0 : i32
    %14 = tpu.memref_slice %arg7[%arg0, %c0_i32_10, %c0_i32_11] : memref<1x2048x1024xbf16, #tpu.memory_space<any>> -> memref<1x2048x1024xbf16, #tpu.memory_space<any>>
    %15 = tpu.memref_squeeze %14 : memref<1x2048x1024xbf16, #tpu.memory_space<any>> -> memref<2048x1024xbf16, #tpu.memory_space<any>>
    tpu.wait_dma2 semaphore(%arg10 : memref<!tpu.dma_semaphore, #tpu.memory_space<semaphore_mem>>) src(%15 : memref<2048x1024xbf16, #tpu.memory_space<any>>) dst(%arg9 : memref<2048x1024xbf16, #tpu.memory_space<vmem>>)
    %c0_12 = arith.constant 0 : index
    %c0_13 = arith.constant 0 : index
    %16 = vector.load %arg9[%c0_12, %c0_13] : memref<2048x1024xbf16, #tpu.memory_space<vmem>>, vector<2048x1024xbf16>
    %cst_14 = arith.constant dense<0.000000e+00> : vector<2x1024xf32>
    %17 = tpu.matmul %13, %16, %cst_14 {dimension_numbers = #tpu.dot_dimension_numbers<[1], [0], [0], [1], [0, 0, 1, 1], [], []>} : vector<2x2048xbf16>, vector<2048x1024xbf16>, vector<2x1024xf32> -> vector<2x1024xf32>
    %c0_15 = arith.constant 0 : index
    %c0_16 = arith.constant 0 : index
    %c0_17 = arith.constant 0 : index
    %18 = vector.load %arg5[%c0_15, %c0_16, %c0_17] : memref<1x1x1024xf32, #tpu.memory_space<vmem>>, vector<1x1x1024xf32>
    %19 = vector.shape_cast %18 : vector<1x1x1024xf32> to vector<1x1024xf32>
    %20 = vector.broadcast %19 : vector<1x1024xf32> to vector<2x1024xf32>
    %21 = arith.addf %17, %20 : vector<2x1024xf32>
    %cst_18 = arith.constant 0.000000e+00 : f32
    %22 = vector.broadcast %cst_18 : f32 to vector<2x1024xf32>
    %23 = arith.maximumf %21, %22 : vector<2x1024xf32>
    %24 = arith.truncf %23 : vector<2x1024xf32> to vector<2x1024xbf16>
    %c0_19 = arith.constant 0 : index
    %c0_20 = arith.constant 0 : index
    %c0_21 = arith.constant 0 : index
    %25 = vector.load %arg6[%c0_19, %c0_20, %c0_21] : memref<1x1024x128xbf16, #tpu.memory_space<vmem>>, vector<1x1024x128xbf16>
    %26 = vector.shape_cast %25 : vector<1x1024x128xbf16> to vector<1024x128xbf16>
    %cst_22 = arith.constant dense<0.000000e+00> : vector<2x128xf32>
    %27 = tpu.matmul %24, %26, %cst_22 {dimension_numbers = #tpu.dot_dimension_numbers<[1], [0], [0], [1], [0, 0, 1, 1], [], []>} : vector<2x1024xbf16>, vector<1024x128xbf16>, vector<2x128xf32> -> vector<2x128xf32>
    %c0_23 = arith.constant 0 : index
    %c0_24 = arith.constant 0 : index
    %c0_25 = arith.constant 0 : index
    %28 = vector.load %arg8[%c0_23, %c0_24, %c0_25] : memref<1x2x128xf32, #tpu.memory_space<vmem>>, vector<1x2x128xf32>
    %29 = vector.shape_cast %28 : vector<1x2x128xf32> to vector<2x128xf32>
    %30 = vector.shape_cast %27 : vector<2x128xf32> to vector<1x2x128xf32>
    tpu.vector_store %arg8[%c0_23, %c0_24, %c0_25], %30 {strides = array<i32>} : memref<1x2x128xf32, #tpu.memory_space<vmem>>, vector<1x2x128xf32>,
    return
  }
  func.func @transform_0(%arg0: i32) -> (i32, i32) {
    %c0_i32 = arith.constant 0 : i32
    %c0_i32_0 = arith.constant 0 : i32
    %c0_i32_1 = arith.constant 0 : i32
    return %c0_i32, %c0_i32_0 : i32, i32
  }
  func.func @transform_1(%arg0: i32) -> (i32, i32) {
    %c0_i32 = arith.constant 0 : i32
    %c0_i32_0 = arith.constant 0 : i32
    %c0_i32_1 = arith.constant 0 : i32
    return %c0_i32, %c0_i32_0 : i32, i32
  }
  func.func @transform_2(%arg0: i32) -> (i32, i32) {
    %c0_i32 = arith.constant 0 : i32
    %c0_i32_0 = arith.constant 0 : i32
    %c0_i32_1 = arith.constant 0 : i32
    return %c0_i32, %c0_i32_0 : i32, i32
  }
  func.func @transform_3(%arg0: i32) -> (i32, i32) {
    %c0_i32 = arith.constant 0 : i32
    %c0_i32_0 = arith.constant 0 : i32
    %c0_i32_1 = arith.constant 0 : i32
    return %c0_i32, %c0_i32_0 : i32, i32
  }
  func.func @transform_4(%arg0: i32) -> (i32, i32, i32) {
    %c0_i32 = arith.constant 0 : i32
    %c0_i32_0 = arith.constant 0 : i32
    %c0_i32_1 = arith.constant 0 : i32
    return %arg0, %c0_i32, %c0_i32_0 : i32, i32, i32
  }
  func.func @transform_5(%arg0: i32) -> (i32, i32, i32) {
    %c0_i32 = arith.constant 0 : i32
    %c0_i32_0 = arith.constant 0 : i32
    %c0_i32_1 = arith.constant 0 : i32
    return %arg0, %c0_i32, %c0_i32_0 : i32, i32, i32
  }
  func.func @transform_7(%arg0: i32) -> (i32, i32, i32) {
    %c0_i32 = arith.constant 0 : i32
    %c0_i32_0 = arith.constant 0 : i32
    %c0_i32_1 = arith.constant 0 : i32
    return %arg0, %c0_i32, %c0_i32_0 : i32, i32, i32
  }
}

</mosaic_0001>

<llo_original>
// kernel: inception_aux_forward.1
$region0: #{inception_aux_forward.1}
  #allocation0 [shape = 'u32[]', space=smem, size = 0x4, offset = 0x4, fixed_abs, tag = 'smem constant byte address 0x4 - core index']
  #allocation1 [shape = 'u32[144,128]{1,0:T(1,128)}', space=vmem, size = 0x12000, scoped, tag = 'internal scratch']
  #allocation2 [shape = 'bf16[2048,1024]{1,0:T(16,128)(2,1)}', space=vmem, size = 0x400000, scoped, tag = 'scratch operand']
  #allocation3 [shape = 's32[1]{0}', space=sflag, size = 0x4, scoped, tag = 'scratch operand']
  #allocation12 [shape = 's32[]', space=sflag, size = 0x4, offset = 0, fixed_abs, tag = 'sflag constant byte address 0x0 - dummy sync flag']
  %s0 = inlined_call_operand.vmem [shape: f32[392,4], index: 0, kind: input, shape index: {}]
  %s1 = inlined_call_operand.hbm [shape: f32[32,392], index: 1, kind: input, shape index: {}]
  %s2 = inlined_call_operand.hbm [shape: f32[4,128], index: 2, kind: input, shape index: {}]
  %s3 = inlined_call_operand.hbm [shape: f32[1,128], index: 3, kind: input, shape index: {}]
  %s4 = inlined_call_operand.hbm [shape: f32[1,1,1024], index: 4, kind: input, shape index: {}]
  %s5 = inlined_call_operand.hbm [shape: bf16[1,1024,128], index: 5, kind: input, shape index: {}]
  %s6 = inlined_call_operand.hbm [shape: bf16[1,2048,1024], index: 6, kind: input, shape index: {}]
  %s7 = inlined_call_operand.vmem [shape: f32[1,2,128], index: 7, kind: output, shape index: {}]
  %s8 = sld [smem:[#allocation0]]
  $region54: #{inception_aux_forward.1} parent=0
    _
  %s10 = ssub.s32 1, %s8
  %s11 = scalar_select 0, %s10, %s8
  $region1: #{inception_aux_forward.1} parent=0
    #allocation4 [shape = 'u8[65536]{0}', space=vmem, size = 0x10000, scoped, tag = 'input window, operand 1, single buffered']
    #allocation5 [shape = 's32[1]{0}', space=sflag, size = 0x4, scoped, tag = 'scoped memory for inception_aux_forward.1']
    #allocation6 [shape = 'u8[2048]{0}', space=vmem, size = 0x800, scoped, tag = 'input window, operand 2, single buffered']
    #allocation7 [shape = 's32[1]{0}', space=sflag, size = 0x4, scoped, tag = 'scoped memory for inception_aux_forward.1']
    #allocation8 [shape = 'u8[512]{0}', space=vmem, size = 0x400, scoped, tag = 'input window, operand 3, single buffered']
    #allocation9 [shape = 'u8[4096]{0}', space=vmem, size = 0x1000, scoped, tag = 'input window, operand 4, single buffered']
    #allocation10 [shape = 's32[1]{0}', space=sflag, size = 0x4, scoped, tag = 'scoped memory for inception_aux_forward.1']
    #allocation11 [shape = 'u8[262144]{0}', space=vmem, size = 0x40000, scoped, tag = 'input window, operand 5, single buffered']
    #allocation13 [shape = 'u32[9]{0}', space=smem, size = 0x24, scoped, tag = 'DMA stride descriptor']
    %12 = vsyncpa [#allocation5], 0
    %13 = vsyncpa [#allocation7], 0
    %14 = vsyncpa [#allocation10], 0
    // Predicated region
    $region2: #{inception_aux_forward.1} parent=1 // pred_check
      _
    $region3: #{inception_aux_forward.1} parent=1 // pred_check_branch
      %16 = sbr.rel (0) target = $region5
    $region4: #{inception_aux_forward.1} parent=1 // pred_region
      _
    $region5: #{inception_aux_forward.1} parent=1 // pred_fallthru
      _
    // Predicated region
    $region6: #{inception_aux_forward.1} parent=1 // pred_check
      _
    $region7: #{inception_aux_forward.1} parent=1 // pred_check_branch
      %18 = sbr.rel (0) target = $region9
    $region8: #{inception_aux_forward.1} parent=1 // pred_region
      %s20 = ssub.s32 2048, 2048
      %21 = vsyncadd [#allocation5], %s20
      %s22 = sshll.u32 [#allocation4], 4
      %s23 = int_to_ptr.vmem [resolvable:$true] %s22
      %28 = dma.hbm_to_vmem [thread:$0]  %s1, 2048, %s23, [#allocation5], 512, 512, 32
    $region9: #{inception_aux_forward.1} parent=1 // pred_fallthru
      _
    // Predicated region
    $region10: #{inception_aux_forward.1} parent=1 // pred_check
      _
    $region11: #{inception_aux_forward.1} parent=1 // pred_check_branch
      %30 = sbr.rel (0) target = $region13
    $region12: #{inception_aux_forward.1} parent=1 // pred_region
      %s32 = ssub.s32 64, 64
      %33 = vsyncadd [#allocation7], %s32
      %s35 = sshll.u32 [#allocation6], 4
      %s36 = int_to_ptr.vmem [resolvable:$true] %s35
      %38 = dma.hbm_to_vmem [thread:$0]  %s2, 64, %s36, [#allocation7]
    $region13: #{inception_aux_forward.1} parent=1 // pred_fallthru
      _
    // Predicated region
    $region14: #{inception_aux_forward.1} parent=1 // pred_check
      _
    $region15: #{inception_aux_forward.1} parent=1 // pred_check_branch
      %40 = sbr.rel (0) target = $region17
    $region16: #{inception_aux_forward.1} parent=1 // pred_region
      %s42 = ssub.s32 16, 16
      %43 = vsyncadd [#allocation7], %s42
      %s45 = sshll.u32 [#allocation8], 4
      %s46 = int_to_ptr.vmem [resolvable:$true] %s45
      %48 = dma.hbm_to_vmem [thread:$0]  %s3, 16, %s46, [#allocation7]
    $region17: #{inception_aux_forward.1} parent=1 // pred_fallthru
      _
    // Predicated region
    $region18: #{inception_aux_forward.1} parent=1 // pred_check
      _
    $region19: #{inception_aux_forward.1} parent=1 // pred_check_branch
      %50 = sbr.rel (0) target = $region21
    $region20: #{inception_aux_forward.1} parent=1 // pred_region
      %s52 = ssub.s32 128, 128
      %53 = vsyncadd [#allocation10], %s52
      %s55 = sshll.u32 [#allocation9], 4
      %s56 = int_to_ptr.vmem [resolvable:$true] %s55
      %58 = dma.hbm_to_vmem [thread:$0]  %s4, 128, %s56, [#allocation10]
    $region21: #{inception_aux_forward.1} parent=1 // pred_fallthru
      _
    // Predicated region
    $region22: #{inception_aux_forward.1} parent=1 // pred_check
      _
    $region23: #{inception_aux_forward.1} parent=1 // pred_check_branch
      %60 = sbr.rel (0) target = $region25
    $region24: #{inception_aux_forward.1} parent=1 // pred_region
      %s62 = ssub.s32 8192, 8192
      %63 = vsyncadd [#allocation10], %s62
      %s64 = sshll.u32 [#allocation11], 4
      %s65 = int_to_ptr.vmem [resolvable:$true] %s64
      %70 = dma.hbm_to_vmem [thread:$0]  %s5, 8192, %s65, [#allocation10], 64, 64, 4
    $region25: #{inception_aux_forward.1} parent=1 // pred_fallthru
      _
    // Predicated region
    $region26: #{inception_aux_forward.1} parent=1 // pred_check
      _
    $region27: #{inception_aux_forward.1} parent=1 // pred_check_branch
      %72 = sbr.rel (0) target = $region29
    $region28: #{inception_aux_forward.1} parent=1 // pred_region
      %73 = dma.done [#allocation5], 2048
    $region29: #{inception_aux_forward.1} parent=1 // pred_fallthru
      _
    // Predicated region
    $region30: #{inception_aux_forward.1} parent=1 // pred_check
      _
    $region31: #{inception_aux_forward.1} parent=1 // pred_check_branch
      %75 = sbr.rel (0) target = $region33
    $region32: #{inception_aux_forward.1} parent=1 // pred_region
      %76 = dma.done [#allocation7], 64
    $region33: #{inception_aux_forward.1} parent=1 // pred_fallthru
      _
    // Predicated region
    $region34: #{inception_aux_forward.1} parent=1 // pred_check
      _
    $region35: #{inception_aux_forward.1} parent=1 // pred_check_branch
      %78 = sbr.rel (0) target = $region37
    $region36: #{inception_aux_forward.1} parent=1 // pred_region
      %79 = dma.done [#allocation7], 16
    $region37: #{inception_aux_forward.1} parent=1 // pred_fallthru
      _
    // Predicated region
    $region38: #{inception_aux_forward.1} parent=1 // pred_check
      _
    $region39: #{inception_aux_forward.1} parent=1 // pred_check_branch
      %81 = sbr.rel (0) target = $region41
    $region40: #{inception_aux_forward.1} parent=1 // pred_region
      %82 = dma.done [#allocation10], 128
    $region41: #{inception_aux_forward.1} parent=1 // pred_fallthru
      _
    // Predicated region
    $region42: #{inception_aux_forward.1} parent=1 // pred_check
      _
    $region43: #{inception_aux_forward.1} parent=1 // pred_check_branch
      %84 = sbr.rel (0) target = $region45
    $region44: #{inception_aux_forward.1} parent=1 // pred_region
      %85 = dma.done [#allocation10], 8192
    $region45: #{inception_aux_forward.1} parent=1 // pred_fallthru
      _
    %s87 = smul.u32 0, 2048
    %s88 = smul.addr %s87, 64
    %s89 = scalar_lea.hbm %s6, %s88
    %s91 = sshll.u32 1, 14
    %s92 = sxor.u32 4294967295, %s91
    %s94 = sld [smem:[#allocation0]]
    %s95 = sadd.s32 2, %s94
    %s97 = sshll.u32 7, 26
    %s98 = sxor.u32 4294967295, %s97
    %s99 = sand.u32 0, %s98
    %s100 = sshll.u32 %s95, 26
    %s101 = sor.u32 %s99, %s100
    %s102 = sshll.u32 [#allocation2], 4
    %s103 = int_to_ptr.vmem [resolvable:$true] %s102
    %106 = sst [smem:[#allocation13]] 1024
    %s107 = scalar_lea.smem [#allocation13], 1
    %108 = sst [smem:[%s107]] 1024
    %s109 = scalar_lea.smem [#allocation13], 2
    %110 = sst [smem:[%s109]] 8
    %s111 = scalar_lea.smem [#allocation13], 3
    %112 = sst [smem:[%s111]] 64
    %s113 = scalar_lea.smem [#allocation13], 4
    %114 = sst [smem:[%s113]] 128
    %s115 = scalar_lea.smem [#allocation13], 5
    %116 = sst [smem:[%s115]] 2
    %s117 = scalar_lea.smem [#allocation13], 6
    %118 = sst [smem:[%s117]] 512
    %s119 = scalar_lea.smem [#allocation13], 7
    %120 = sst [smem:[%s119]] 64
    %s121 = scalar_lea.smem [#allocation13], 8
    %122 = sst [smem:[%s121]] 4
    %124 = dma.general %s89, 131072, %s103, [#allocation3], [#allocation12], [#allocation13], %s101, 0
    %v125 = vld [vmem:[%s0] sm:$0xff]
    %v126 = vld [vmem:[%s0 + $0x8] sm:$0xff]
    %v127 = vld [vmem:[%s0 + $0x10] sm:$0xff]
    %v128 = vld [vmem:[%s0 + $0x18] sm:$0xff]
    %v129 = vld [vmem:[%s0 + $0x20] sm:$0xff]
    %v130 = vld [vmem:[%s0 + $0x28] sm:$0xff]
    %v131 = vld [vmem:[%s0 + $0x30] sm:$0xff]
    %v132 = vld [vmem:[%s0 + $0x38] sm:$0xff]
    %v133 = vld [vmem:[%s0 + $0x40] sm:$0xff]
    %v134 = vld [vmem:[%s0 + $0x48] sm:$0xff]
    %v135 = vld [vmem:[%s0 + $0x50] sm:$0xff]
    %v136 = vld [vmem:[%s0 + $0x58] sm:$0xff]
    %v137 = vld [vmem:[%s0 + $0x60] sm:$0xff]
    %v138 = vld [vmem:[%s0 + $0x68] sm:$0xff]
    %v139 = vld [vmem:[%s0 + $0x70] sm:$0xff]
    %v140 = vld [vmem:[%s0 + $0x78] sm:$0xff]
    %v141 = vld [vmem:[%s0 + $0x80] sm:$0xff]
    %v142 = vld [vmem:[%s0 + $0x88] sm:$0xff]
    %v143 = vld [vmem:[%s0 + $0x90] sm:$0xff]
    %v144 = vld [vmem:[%s0 + $0x98] sm:$0xff]
    %v145 = vld [vmem:[%s0 + $0xa0] sm:$0xff]
    %v146 = vld [vmem:[%s0 + $0xa8] sm:$0xff]
    %v147 = vld [vmem:[%s0 + $0xb0] sm:$0xff]
    %v148 = vld [vmem:[%s0 + $0xb8] sm:$0xff]
    %v149 = vld [vmem:[%s0 + $0xc0] sm:$0xff]
    %v150 = vld [vmem:[%s0 + $0xc8] sm:$0xff]
    %v151 = vld [vmem:[%s0 + $0xd0] sm:$0xff]
    %v152 = vld [vmem:[%s0 + $0xd8] sm:$0xff]
    %v153 = vld [vmem:[%s0 + $0xe0] sm:$0xff]
    %v154 = vld [vmem:[%s0 + $0xe8] sm:$0xff]
    %v155 = vld [vmem:[%s0 + $0xf0] sm:$0xff]
    %v156 = vld [vmem:[%s0 + $0xf8] sm:$0xff]
    %v157 = vld [vmem:[%s0 + $0x100] sm:$0xff]
    %v158 = vld [vmem:[%s0 + $0x108] sm:$0xff]
    %v159 = vld [vmem:[%s0 + $0x110] sm:$0xff]
    %v160 = vld [vmem:[%s0 + $0x118] sm:$0xff]
    %v161 = vld [vmem:[%s0 + $0x120] sm:$0xff]
    %v162 = vld [vmem:[%s0 + $0x128] sm:$0xff]
    %v163 = vld [vmem:[%s0 + $0x130] sm:$0xff]
    %v164 = vld [vmem:[%s0 + $0x138] sm:$0xff]
    %v165 = vld [vmem:[%s0 + $0x140] sm:$0xff]
    %v166 = vld [vmem:[%s0 + $0x148] sm:$0xff]
    %v167 = vld [vmem:[%s0 + $0x150] sm:$0xff]
    %v168 = vld [vmem:[%s0 + $0x158] sm:$0xff]
    %v169 = vld [vmem:[%s0 + $0x160] sm:$0xff]
    %v170 = vld [vmem:[%s0 + $0x168] sm:$0xff]
    %v171 = vld [vmem:[%s0 + $0x170] sm:$0xff]
    %v172 = vld [vmem:[%s0 + $0x178] sm:$0xff]
    %v173 = vld [vmem:[%s0 + $0x180] sm:$0xff]
    %v174 = vld [vmem:[#allocation6] sm:$0xf]
    %vm175 = vcmask 31744
    %v177 = vsel %vm175, %v125, 0
    %v180 = vsel %vm175, %v126, 0
    %v183 = vsel %vm175, %v127, 0
    %v186 = vsel %vm175, %v128, 0
    %v189 = vsel %vm175, %v129, 0
    %v192 = vsel %vm175, %v130, 0
    %v195 = vsel %vm175, %v131, 0
    %v198 = vsel %vm175, %v132, 0
    %v201 = vsel %vm175, %v133, 0
    %v204 = vsel %vm175, %v134, 0
    %v207 = vsel %vm175, %v135, 0
    %v210 = vsel %vm175, %v136, 0
    %v213 = vsel %vm175, %v137, 0
    %v216 = vsel %vm175, %v138, 0
    %v219 = vsel %vm175, %v139, 0
    %v222 = vsel %vm175, %v140, 0
    %v225 = vsel %vm175, %v141, 0
    %v228 = vsel %vm175, %v142, 0
    %v231 = vsel %vm175, %v143, 0
    %v234 = vsel %vm175, %v144, 0
    %v237 = vsel %vm175, %v145, 0
    %v240 = vsel %vm175, %v146, 0
    %v243 = vsel %vm175, %v147, 0
    %v246 = vsel %vm175, %v148, 0
    %v249 = vsel %vm175, %v149, 0
    %v252 = vsel %vm175, %v150, 0
    %v255 = vsel %vm175, %v151, 0
    %v258 = vsel %vm175, %v152, 0
    %v261 = vsel %vm175, %v153, 0
    %v264 = vsel %vm175, %v154, 0
    %v267 = vsel %vm175, %v155, 0
    %v270 = vsel %vm175, %v156, 0
    %v273 = vsel %vm175, %v157, 0
    %v276 = vsel %vm175, %v158, 0
    %v279 = vsel %vm175, %v159, 0
    %v282 = vsel %vm175, %v160, 0
    %v285 = vsel %vm175, %v161, 0
    %v288 = vsel %vm175, %v162, 0
    %v291 = vsel %vm175, %v163, 0
    %v294 = vsel %vm175, %v164, 0
    %v297 = vsel %vm175, %v165, 0
    %v300 = vsel %vm175, %v166, 0
    %v303 = vsel %vm175, %v167, 0
    %v306 = vsel %vm175, %v168, 0
    %v309 = vsel %vm175, %v169, 0
    %v312 = vsel %vm175, %v170, 0
    %v315 = vsel %vm175, %v171, 0
    %v318 = vsel %vm175, %v172, 0
    %v321 = vsel %vm175, %v173, 0
    %vm323 = vcmask 1043456
    %v325 = vsel %vm323, %v174, 0
    %327 = vmatprep.subr.mxu0 0.0
    %328 = vmatpush1.msra.mxu0 %v325
    %329 = vmatprep.subr.mxu0 0.0
    %330 = vmatpush1.msra.mxu0 0.0
    %331 = vmatprep.subr.mxu0 0.0
    %332 = vmatpush1.msra.mxu0 0.0
    %333 = vmatprep.subr.mxu0 0.0
    %334 = vmatpush1.msra.mxu0 0.0
    %335 = vmatprep.subr.mxu0 0.0
    %336 = vmatpush1.msra.mxu0 0.0
    %337 = vmatprep.subr.mxu0 0.0
    %338 = vmatpush1.msra.mxu0 0.0
    %339 = vmatprep.subr.mxu0 0.0
    %340 = vmatpush1.msra.mxu0 0.0
    %341 = vmatprep.subr.mxu0 0.0
    %342 = vmatpush1.msra.mxu0 0.0
    %343 = vmatprep.subr.mxu0 0.0
    %344 = vmatpush1.msra.mxu0 0.0
    %345 = vmatprep.subr.mxu0 0.0
    %346 = vmatpush1.msra.mxu0 0.0
    %347 = vmatprep.subr.mxu0 0.0
    %348 = vmatpush1.msra.mxu0 0.0
    %349 = vmatprep.subr.mxu0 0.0
    %350 = vmatpush1.msra.mxu0 0.0
    %351 = vmatprep.subr.mxu0 0.0
    %352 = vmatpush1.msra.mxu0 0.0
    %353 = vmatprep.subr.mxu0 0.0
    %354 = vmatpush1.msra.mxu0 0.0
    %355 = vmatprep.subr.mxu0 0.0
    %356 = vmatpush1.msra.mxu0 0.0
    %357 = vmatprep.subr.mxu0 0.0
    %358 = vmatpush1.msra.mxu0 0.0
    %359 = vmatprep.subr.mxu0 0.0
    %360 = vmatpush1.msra.mxu0 0.0
    %361 = vmatprep.subr.mxu0 0.0
    %362 = vmatpush1.msra.mxu0 0.0
    %363 = vmatprep.subr.mxu0 0.0
    %364 = vmatpush1.msra.mxu0 0.0
    %365 = vmatprep.subr.mxu0 0.0
    %366 = vmatpush1.msra.mxu0 0.0
    %367 = vmatprep.subr.mxu0 0.0
    %368 = vmatpush1.msra.mxu0 0.0
    %369 = vmatprep.subr.mxu0 0.0
    %370 = vmatpush1.msra.mxu0 0.0
    %371 = vmatprep.subr.mxu0 0.0
    %372 = vmatpush1.msra.mxu0 0.0
    %373 = vmatprep.subr.mxu0 0.0
    %374 = vmatpush1.msra.mxu0 0.0
    %375 = vmatprep.subr.mxu0 0.0
    %376 = vmatpush1.msra.mxu0 0.0
    %377 = vmatprep.subr.mxu0 0.0
    %378 = vmatpush1.msra.mxu0 0.0
    %379 = vmatprep.subr.mxu0 0.0
    %380 = vmatpush1.msra.mxu0 0.0
    %381 = vmatprep.subr.mxu0 0.0
    %382 = vmatpush1.msra.mxu0 0.0
    %383 = vmatprep.subr.mxu0 0.0
    %384 = vmatpush1.msra.mxu0 0.0
    %385 = vmatprep.subr.mxu0 0.0
    %386 = vmatpush1.msra.mxu0 0.0
    %387 = vmatprep.subr.mxu0 0.0
    %388 = vmatpush1.msra.mxu0 0.0
    %389 = vmatprep.subr.mxu0 0.0
    %390 = vmatpush1.msra.mxu0 0.0
    %391 = vmatprep.mubr.f32.mxu0 0.0
    %392 = vmatmul.mubr.f32.gmra.mrb[0].mxu0 %v177
    %v393 = vpop.f32.mrb[0].mxu0
    %v394 = vadd.f32 0.0, %v393
    %v395 = vpop.f32.mrb[0].mxu0
    %396 = vmatprep.mubr.f32.mxu0 0.0
    %397 = vmatmul.mubr.f32.gmra.mrb[0].mxu0 %v180
    %v398 = vpop.f32.mrb[0].mxu0
    %v399 = vadd.f32 0.0, %v398
    %v400 = vpop.f32.mrb[0].mxu0
    %401 = vmatprep.mubr.f32.mxu0 0.0
    %402 = vmatmul.mubr.f32.gmra.mrb[0].mxu0 %v183
    %v403 = vpop.f32.mrb[0].mxu0
    %v404 = vadd.f32 0.0, %v403
    %v405 = vpop.f32.mrb[0].mxu0
    %406 = vmatprep.mubr.f32.mxu0 0.0
    %407 = vmatmul.mubr.f32.gmra.mrb[0].mxu0 %v186
    %v408 = vpop.f32.mrb[0].mxu0
    %v409 = vadd.f32 0.0, %v408
    %v410 = vpop.f32.mrb[0].mxu0
    %411 = vmatprep.mubr.f32.mxu0 0.0
    %412 = vmatmul.mubr.f32.gmra.mrb[0].mxu0 %v189
    %v413 = vpop.f32.mrb[0].mxu0
    %v414 = vadd.f32 0.0, %v413
    %v415 = vpop.f32.mrb[0].mxu0
    %416 = vmatprep.mubr.f32.mxu0 0.0
    %417 = vmatmul.mubr.f32.gmra.mrb[0].mxu0 %v192
    %v418 = vpop.f32.mrb[0].mxu0
    %v419 = vadd.f32 0.0, %v418
    %v420 = vpop.f32.mrb[0].mxu0
    %421 = vmatprep.mubr.f32.mxu0 0.0
    %422 = vmatmul.mubr.f32.gmra.mrb[0].mxu0 %v195
    %v423 = vpop.f32.mrb[0].mxu0
    %v424 = vadd.f32 0.0, %v423
    %v425 = vpop.f32.mrb[0].mxu0
    %426 = vmatprep.mubr.f32.mxu0 0.0
    %427 = vmatmul.mubr.f32.gmra.mrb[0].mxu0 %v198
    %v428 = vpop.f32.mrb[0].mxu0
    %v429 = vadd.f32 0.0, %v428
    %v430 = vpop.f32.mrb[0].mxu0
    %431 = vmatprep.mubr.f32.mxu0 0.0
    %432 = vmatmul.mubr.f32.gmra.mrb[0].mxu0 %v201
    %v433 = vpop.f32.mrb[0].mxu0
    %v434 = vadd.f32 0.0, %v433
    %v435 = vpop.f32.mrb[0].mxu0
    %436 = vmatprep.mubr.f32.mxu0 0.0
    %437 = vmatmul.mubr.f32.gmra.mrb[0].mxu0 %v204
    %v438 = vpop.f32.mrb[0].mxu0
    %v439 = vadd.f32 0.0, %v438
    %v440 = vpop.f32.mrb[0].mxu0
    %441 = vmatprep.mubr.f32.mxu0 0.0
    %442 = vmatmul.mubr.f32.gmra.mrb[0].mxu0 %v207
    %v443 = vpop.f32.mrb[0].mxu0
    %v444 = vadd.f32 0.0, %v443
    %v445 = vpop.f32.mrb[0].mxu0
    %446 = vmatprep.mubr.f32.mxu0 0.0
    %447 = vmatmul.mubr.f32.gmra.mrb[0].mxu0 %v210
    %v448 = vpop.f32.mrb[0].mxu0
    %v449 = vadd.f32 0.0, %v448
    %v450 = vpop.f32.mrb[0].mxu0
    %451 = vmatprep.mubr.f32.mxu0 0.0
    %452 = vmatmul.mubr.f32.gmra.mrb[0].mxu0 %v213
    %v453 = vpop.f32.mrb[0].mxu0
    %v454 = vadd.f32 0.0, %v453
    %v455 = vpop.f32.mrb[0].mxu0
    %456 = vmatprep.mubr.f32.mxu0 0.0
    %457 = vmatmul.mubr.f32.gmra.mrb[0].mxu0 %v216
    %v458 = vpop.f32.mrb[0].mxu0
    %v459 = vadd.f32 0.0, %v458
    %v460 = vpop.f32.mrb[0].mxu0
    %461 = vmatprep.mubr.f32.mxu0 0.0
    %462 = vmatmul.mubr.f32.gmra.mrb[0].mxu0 %v219
    %v463 = vpop.f32.mrb[0].mxu0
    %v464 = vadd.f32 0.0, %v463
    %v465 = vpop.f32.mrb[0].mxu0
    %466 = vmatprep.mubr.f32.mxu0 0.0
    %467 = vmatmul.mubr.f32.gmra.mrb[0].mxu0 %v222
    %v468 = vpop.f32.mrb[0].mxu0
    %v469 = vadd.f32 0.0, %v468
    %v470 = vpop.f32.mrb[0].mxu0
    %471 = vmatprep.mubr.f32.mxu0 0.0
    %472 = vmatmul.mubr.f32.gmra.mrb[0].mxu0 %v225
    %v473 = vpop.f32.mrb[0].mxu0
    %v474 = vadd.f32 0.0, %v473
    %v475 = vpop.f32.mrb[0].mxu0
    %476 = vmatprep.mubr.f32.mxu0 0.0
    %477 = vmatmul.mubr.f32.gmra.mrb[0].mxu0 %v228
    %v478 = vpop.f32.mrb[0].mxu0
    %v479 = vadd.f32 0.0, %v478
    %v480 = vpop.f32.mrb[0].mxu0
    %481 = vmatprep.mubr.f32.mxu0 0.0
    %482 = vmatmul.mubr.f32.gmra.mrb[0].mxu0 %v231
    %v483 = vpop.f32.mrb[0].mxu0
    %v484 = vadd.f32 0.0, %v483
    %v485 = vpop.f32.mrb[0].mxu0
    %486 = vmatprep.mubr.f32.mxu0 0.0
    %487 = vmatmul.mubr.f32.gmra.mrb[0].mxu0 %v234
    %v488 = vpop.f32.mrb[0].mxu0
    %v489 = vadd.f32 0.0, %v488
    %v490 = vpop.f32.mrb[0].mxu0
    %491 = vmatprep.mubr.f32.mxu0 0.0
    %492 = vmatmul.mubr.f32.gmra.mrb[0].mxu0 %v237
    %v493 = vpop.f32.mrb[0].mxu0
    %v494 = vadd.f32 0.0, %v493
    %v495 = vpop.f32.mrb[0].mxu0
    %496 = vmatprep.mubr.f32.mxu0 0.0
    %497 = vmatmul.mubr.f32.gmra.mrb[0].mxu0 %v240
    %v498 = vpop.f32.mrb[0].mxu0
    %v499 = vadd.f32 0.0, %v498
    %v500 = vpop.f32.mrb[0].mxu0
    %501 = vmatprep.mubr.f32.mxu0 0.0
    %502 = vmatmul.mubr.f32.gmra.mrb[0].mxu0 %v243
    %v503 = vpop.f32.mrb[0].mxu0
    %v504 = vadd.f32 0.0, %v503
    %v505 = vpop.f32.mrb[0].mxu0
    %506 = vmatprep.mubr.f32.mxu0 0.0
    %507 = vmatmul.mubr.f32.gmra.mrb[0].mxu0 %v246
    %v508 = vpop.f32.mrb[0].mxu0
    %v509 = vadd.f32 0.0, %v508
    %v510 = vpop.f32.mrb[0].mxu0
    %511 = vmatprep.mubr.f32.mxu0 0.0
    %512 = vmatmul.mubr.f32.gmra.mrb[0].mxu0 %v249
    %v513 = vpop.f32.mrb[0].mxu0
    %v514 = vadd.f32 0.0, %v513
    %v515 = vpop.f32.mrb[0].mxu0
    %516 = vmatprep.mubr.f32.mxu0 0.0
    %517 = vmatmul.mubr.f32.gmra.mrb[0].mxu0 %v252
    %v518 = vpop.f32.mrb[0].mxu0
    %v519 = vadd.f32 0.0, %v518
    %v520 = vpop.f32.mrb[0].mxu0
    %521 = vmatprep.mubr.f32.mxu0 0.0
    %522 = vmatmul.mubr.f32.gmra.mrb[0].mxu0 %v255
    %v523 = vpop.f32.mrb[0].mxu0
    %v524 = vadd.f32 0.0, %v523
    %v525 = vpop.f32.mrb[0].mxu0
    %526 = vmatprep.mubr.f32.mxu0 0.0
    %527 = vmatmul.mubr.f32.gmra.mrb[0].mxu0 %v258
    %v528 = vpop.f32.mrb[0].mxu0
    %v529 = vadd.f32 0.0, %v528
    %v530 = vpop.f32.mrb[0].mxu0
    %531 = vmatprep.mubr.f32.mxu0 0.0
    %532 = vmatmul.mubr.f32.gmra.mrb[0].mxu0 %v261
    %v533 = vpop.f32.mrb[0].mxu0
    %v534 = vadd.f32 0.0, %v533
    %v535 = vpop.f32.mrb[0].mxu0
    %536 = vmatprep.mubr.f32.mxu0 0.0
    %537 = vmatmul.mubr.f32.gmra.mrb[0].mxu0 %v264
    %v538 = vpop.f32.mrb[0].mxu0
    %v539 = vadd.f32 0.0, %v538
    %v540 = vpop.f32.mrb[0].mxu0
    %541 = vmatprep.mubr.f32.mxu0 0.0
    %542 = vmatmul.mubr.f32.gmra.mrb[0].mxu0 %v267
    %v543 = vpop.f32.mrb[0].mxu0
    %v544 = vadd.f32 0.0, %v543
    %v545 = vpop.f32.mrb[0].mxu0
    %546 = vmatprep.mubr.f32.mxu0 0.0
    %547 = vmatmul.mubr.f32.gmra.mrb[0].mxu0 %v270
    %v548 = vpop.f32.mrb[0].mxu0
    %v549 = vadd.f32 0.0, %v548
    %v550 = vpop.f32.mrb[0].mxu0
    %551 = vmatprep.mubr.f32.mxu0 0.0
    %552 = vmatmul.mubr.f32.gmra.mrb[0].mxu0 %v273
    %v553 = vpop.f32.mrb[0].mxu0
    %v554 = vadd.f32 0.0, %v553
    %v555 = vpop.f32.mrb[0].mxu0
    %556 = vmatprep.mubr.f32.mxu0 0.0
    %557 = vmatmul.mubr.f32.gmra.mrb[0].mxu0 %v276
    %v558 = vpop.f32.mrb[0].mxu0
    %v559 = vadd.f32 0.0, %v558
    %v560 = vpop.f32.mrb[0].mxu0
    %561 = vmatprep.mubr.f32.mxu0 0.0
    %562 = vmatmul.mubr.f32.gmra.mrb[0].mxu0 %v279
    %v563 = vpop.f32.mrb[0].mxu0
    %v564 = vadd.f32 0.0, %v563
    %v565 = vpop.f32.mrb[0].mxu0
    %566 = vmatprep.mubr.f32.mxu0 0.0
    %567 = vmatmul.mubr.f32.gmra.mrb[0].mxu0 %v282
    %v568 = vpop.f32.mrb[0].mxu0
    %v569 = vadd.f32 0.0, %v568
    %v570 = vpop.f32.mrb[0].mxu0
    %571 = vmatprep.mubr.f32.mxu0 0.0
    %572 = vmatmul.mubr.f32.gmra.mrb[0].mxu0 %v285
    %v573 = vpop.f32.mrb[0].mxu0
    %v574 = vadd.f32 0.0, %v573
    %v575 = vpop.f32.mrb[0].mxu0
    %576 = vmatprep.mubr.f32.mxu0 0.0
    %577 = vmatmul.mubr.f32.gmra.mrb[0].mxu0 %v288
    %v578 = vpop.f32.mrb[0].mxu0
    %v579 = vadd.f32 0.0, %v578
    %v580 = vpop.f32.mrb[0].mxu0
    %581 = vmatprep.mubr.f32.mxu0 0.0
    %582 = vmatmul.mubr.f32.gmra.mrb[0].mxu0 %v291
    %v583 = vpop.f32.mrb[0].mxu0
    %v584 = vadd.f32 0.0, %v583
    %v585 = vpop.f32.mrb[0].mxu0
    %586 = vmatprep.mubr.f32.mxu0 0.0
    %587 = vmatmul.mubr.f32.gmra.mrb[0].mxu0 %v294
    %v588 = vpop.f32.mrb[0].mxu0
    %v589 = vadd.f32 0.0, %v588
    %v590 = vpop.f32.mrb[0].mxu0
    %591 = vmatprep.mubr.f32.mxu0 0.0
    %592 = vmatmul.mubr.f32.gmra.mrb[0].mxu0 %v297
    %v593 = vpop.f32.mrb[0].mxu0
    %v594 = vadd.f32 0.0, %v593
    %v595 = vpop.f32.mrb[0].mxu0
    %596 = vmatprep.mubr.f32.mxu0 0.0
    %597 = vmatmul.mubr.f32.gmra.mrb[0].mxu0 %v300
    %v598 = vpop.f32.mrb[0].mxu0
    %v599 = vadd.f32 0.0, %v598
    %v600 = vpop.f32.mrb[0].mxu0
    %601 = vmatprep.mubr.f32.mxu0 0.0
    %602 = vmatmul.mubr.f32.gmra.mrb[0].mxu0 %v303
    %v603 = vpop.f32.mrb[0].mxu0
    %v604 = vadd.f32 0.0, %v603
    %v605 = vpop.f32.mrb[0].mxu0
    %606 = vmatprep.mubr.f32.mxu0 0.0
    %607 = vmatmul.mubr.f32.gmra.mrb[0].mxu0 %v306
    %v608 = vpop.f32.mrb[0].mxu0
    %v609 = vadd.f32 0.0, %v608
    %v610 = vpop.f32.mrb[0].mxu0
    %611 = vmatprep.mubr.f32.mxu0 0.0
    %612 = vmatmul.mubr.f32.gmra.mrb[0].mxu0 %v309
    %v613 = vpop.f32.mrb[0].mxu0
    %v614 = vadd.f32 0.0, %v613
    %v615 = vpop.f32.mrb[0].mxu0
    %616 = vmatprep.mubr.f32.mxu0 0.0
    %617 = vmatmul.mubr.f32.gmra.mrb[0].mxu0 %v312
    %v618 = vpop.f32.mrb[0].mxu0
    %v619 = vadd.f32 0.0, %v618
    %v620 = vpop.f32.mrb[0].mxu0
    %621 = vmatprep.mubr.f32.mxu0 0.0
    %622 = vmatmul.mubr.f32.gmra.mrb[0].mxu0 %v315
    %v623 = vpop.f32.mrb[0].mxu0
    %v624 = vadd.f32 0.0, %v623
    %v625 = vpop.f32.mrb[0].mxu0
    %626 = vmatprep.mubr.f32.mxu0 0.0
    %627 = vmatmul.mubr.f32.gmra.mrb[0].mxu0 %v318
    %v628 = vpop.f32.mrb[0].mxu0
    %v629 = vadd.f32 0.0, %v628
    %v630 = vpop.f32.mrb[0].mxu0
    %631 = vmatprep.mubr.f32.mxu0 0.0
    %632 = vmatmul.mubr.f32.gmra.mrb[0].mxu0 %v321
    %v633 = vpop.f32.mrb[0].mxu0
    %v634 = vadd.f32 0.0, %v633
    %v635 = vpop.f32.mrb[0].mxu0
    %636 = vdwg.mxu0
    %v637 = vld [vmem:[#allocation4] sm:$0xff]
    %v638 = vld [vmem:[#allocation4 + $0x8] sm:$0xff]
    %v639 = vld [vmem:[#allocation4 + $0x10] sm:$0xff]
    %v640 = vld [vmem:[#allocation4 + $0x18] sm:$0xff]
    %v641 = vld [vmem:[#allocation4 + $0x20] sm:$0xff]
    %v642 = vld [vmem:[#allocation4 + $0x28] sm:$0xff]
    %v643 = vld [vmem:[#allocation4 + $0x30] sm:$0xff]
    %v644 = vld [vmem:[#allocation4 + $0x38] sm:$0xff]
    %v645 = vld [vmem:[#allocation4 + $0x40] sm:$0xff]
    %v646 = vld [vmem:[#allocation4 + $0x48] sm:$0xff]
    %v647 = vld [vmem:[#allocation4 + $0x50] sm:$0xff]
    %v648 = vld [vmem:[#allocation4 + $0x58] sm:$0xff]
    %v649 = vld [vmem:[#allocation4 + $0x60] sm:$0xff]
    %v650 = vld [vmem:[#allocation4 + $0x68] sm:$0xff]
    %v651 = vld [vmem:[#allocation4 + $0x70] sm:$0xff]
    %v652 = vld [vmem:[#allocation4 + $0x78] sm:$0xff]
    %v653 = vld [vmem:[#allocation8] sm:$0x1]
    %v655 = vlaneseq
    %v656 = vshrl.u32 %v655, 7
    %v657 = vsub.s32 0, %v656
    %v658 = vrot.slane %v653, %v657
    %vm660 = vcmask 64512
    %v662 = vsel %vm660, %v640, 0
    %v665 = vsel %vm660, %v644, 0
    %v668 = vsel %vm660, %v648, 0
    %v671 = vsel %vm660, %v652, 0
    %673 = vmatprep.subr.mxu0 0.0
    %674 = vmatpush1.msra.mxu0 %v394
    %675 = vmatprep.subr.mxu0 0.0
    %676 = vmatpush1.msra.mxu0 %v399
    %677 = vmatprep.subr.mxu0 0.0
    %678 = vmatpush1.msra.mxu0 %v404
    %679 = vmatprep.subr.mxu0 0.0
    %680 = vmatpush1.msra.mxu0 %v409
    %681 = vmatprep.subr.mxu0 0.0
    %682 = vmatpush1.msra.mxu0 %v414
    %683 = vmatprep.subr.mxu0 0.0
    %684 = vmatpush1.msra.mxu0 %v419
    %685 = vmatprep.subr.mxu0 0.0
    %686 = vmatpush1.msra.mxu0 %v424
    %687 = vmatprep.subr.mxu0 0.0
    %688 = vmatpush1.msra.mxu0 %v429
    %689 = vmatprep.subr.mxu0 0.0
    %690 = vmatpush1.msra.mxu0 %v434
    %691 = vmatprep.subr.mxu0 0.0
    %692 = vmatpush1.msra.mxu0 %v439
    %693 = vmatprep.subr.mxu0 0.0
    %694 = vmatpush1.msra.mxu0 %v444
    %695 = vmatprep.subr.mxu0 0.0
    %696 = vmatpush1.msra.mxu0 %v449
    %697 = vmatprep.subr.mxu0 0.0
    %698 = vmatpush1.msra.mxu0 %v454
    %699 = vmatprep.subr.mxu0 0.0
    %700 = vmatpush1.msra.mxu0 %v459
    %701 = vmatprep.subr.mxu0 0.0
    %702 = vmatpush1.msra.mxu0 %v464
    %703 = vmatprep.subr.mxu0 0.0
    %704 = vmatpush1.msra.mxu0 %v469
    %705 = vmatprep.subr.mxu0 0.0
    %706 = vmatpush1.msra.mxu0 %v474
    %707 = vmatprep.subr.mxu0 0.0
    %708 = vmatpush1.msra.mxu0 %v479
    %709 = vmatprep.subr.mxu0 0.0
    %710 = vmatpush1.msra.mxu0 %v484
    %711 = vmatprep.subr.mxu0 0.0
    %712 = vmatpush1.msra.mxu0 %v489
    %713 = vmatprep.subr.mxu0 0.0
    %714 = vmatpush1.msra.mxu0 %v494
    %715 = vmatprep.subr.mxu0 0.0
    %716 = vmatpush1.msra.mxu0 %v499
    %717 = vmatprep.subr.mxu0 0.0
    %718 = vmatpush1.msra.mxu0 %v504
    %719 = vmatprep.subr.mxu0 0.0
    %720 = vmatpush1.msra.mxu0 %v509
    %721 = vmatprep.subr.mxu0 0.0
    %722 = vmatpush1.msra.mxu0 %v514
    %723 = vmatprep.subr.mxu0 0.0
    %724 = vmatpush1.msra.mxu0 %v519
    %725 = vmatprep.subr.mxu0 0.0
    %726 = vmatpush1.msra.mxu0 %v524
    %727 = vmatprep.subr.mxu0 0.0
    %728 = vmatpush1.msra.mxu0 %v529
    %729 = vmatprep.subr.mxu0 0.0
    %730 = vmatpush1.msra.mxu0 %v534
    %731 = vmatprep.subr.mxu0 0.0
    %732 = vmatpush1.msra.mxu0 %v539
    %733 = vmatprep.subr.mxu0 0.0
    %734 = vmatpush1.msra.mxu0 %v544
    %735 = vmatprep.subr.mxu0 0.0
    %736 = vmatpush1.msra.mxu0 %v549
    %737 = vmatprep.mubr.f32.mxu0 %v638
    %738 = vmatmul.mubr.f32.gmra.mrb[0].mxu0 %v637
    %v739 = vpop.f32.mrb[0].mxu0
    %v740 = vadd.f32 %v658, %v739
    %v741 = vpop.f32.mrb[0].mxu0
    %742 = vmatprep.mubr.f32.mxu0 %v642
    %743 = vmatmul.mubr.f32.gmra.mrb[0].mxu0 %v641
    %v744 = vpop.f32.mrb[0].mxu0
    %v745 = vadd.f32 %v658, %v744
    %v746 = vpop.f32.mrb[0].mxu0
    %747 = vmatprep.mubr.f32.mxu0 %v646
    %748 = vmatmul.mubr.f32.gmra.mrb[0].mxu0 %v645
    %v749 = vpop.f32.mrb[0].mxu0
    %v750 = vadd.f32 %v658, %v749
    %v751 = vpop.f32.mrb[0].mxu0
    %752 = vmatprep.mubr.f32.mxu0 %v650
    %753 = vmatmul.mubr.f32.gmra.mrb[0].mxu0 %v649
    %v754 = vpop.f32.mrb[0].mxu0
    %v755 = vadd.f32 %v658, %v754
    %v756 = vpop.f32.mrb[0].mxu0
    %757 = vdwg.mxu0
    %758 = vmatprep.subr.mxu0 0.0
    %759 = vmatpush1.msra.mxu0 %v554
    %760 = vmatprep.subr.mxu0 0.0
    %761 = vmatpush1.msra.mxu0 %v559
    %762 = vmatprep.subr.mxu0 0.0
    %763 = vmatpush1.msra.mxu0 %v564
    %764 = vmatprep.subr.mxu0 0.0
    %765 = vmatpush1.msra.mxu0 %v569
    %766 = vmatprep.subr.mxu0 0.0
    %767 = vmatpush1.msra.mxu0 %v574
    %768 = vmatprep.subr.mxu0 0.0
    %769 = vmatpush1.msra.mxu0 %v579
    %770 = vmatprep.subr.mxu0 0.0
    %771 = vmatpush1.msra.mxu0 %v584
    %772 = vmatprep.subr.mxu0 0.0
    %773 = vmatpush1.msra.mxu0 %v589
    %774 = vmatprep.subr.mxu0 0.0
    %775 = vmatpush1.msra.mxu0 %v594
    %776 = vmatprep.subr.mxu0 0.0
    %777 = vmatpush1.msra.mxu0 %v599
    %778 = vmatprep.subr.mxu0 0.0
    %779 = vmatpush1.msra.mxu0 %v604
    %780 = vmatprep.subr.mxu0 0.0
    %781 = vmatpush1.msra.mxu0 %v609
    %782 = vmatprep.subr.mxu0 0.0
    %783 = vmatpush1.msra.mxu0 %v614
    %784 = vmatprep.subr.mxu0 0.0
    %785 = vmatpush1.msra.mxu0 %v619
    %786 = vmatprep.subr.mxu0 0.0
    %787 = vmatpush1.msra.mxu0 %v624
    %788 = vmatprep.subr.mxu0 0.0
    %789 = vmatpush1.msra.mxu0 %v629
    %790 = vmatprep.subr.mxu0 0.0
    %791 = vmatpush1.msra.mxu0 %v634
    %792 = vmatprep.subr.mxu0 0.0
    %793 = vmatpush1.msra.mxu0 0.0
    %794 = vmatprep.subr.mxu0 0.0
    %795 = vmatpush1.msra.mxu0 0.0
    %796 = vmatprep.subr.mxu0 0.0
    %797 = vmatpush1.msra.mxu0 0.0
    %798 = vmatprep.subr.mxu0 0.0
    %799 = vmatpush1.msra.mxu0 0.0
    %800 = vmatprep.subr.mxu0 0.0
    %801 = vmatpush1.msra.mxu0 0.0
    %802 = vmatprep.subr.mxu0 0.0
    %803 = vmatpush1.msra.mxu0 0.0
    %804 = vmatprep.subr.mxu0 0.0
    %805 = vmatpush1.msra.mxu0 0.0
    %806 = vmatprep.subr.mxu0 0.0
    %807 = vmatpush1.msra.mxu0 0.0
    %808 = vmatprep.subr.mxu0 0.0
    %809 = vmatpush1.msra.mxu0 0.0
    %810 = vmatprep.subr.mxu0 0.0
    %811 = vmatpush1.msra.mxu0 0.0
    %812 = vmatprep.subr.mxu0 0.0
    %813 = vmatpush1.msra.mxu0 0.0
    %814 = vmatprep.subr.mxu0 0.0
    %815 = vmatpush1.msra.mxu0 0.0
    %816 = vmatprep.subr.mxu0 0.0
    %817 = vmatpush1.msra.mxu0 0.0
    %818 = vmatprep.subr.mxu0 0.0
    %819 = vmatpush1.msra.mxu0 0.0
    %820 = vmatprep.subr.mxu0 0.0
    %821 = vmatpush1.msra.mxu0 0.0
    %822 = vmatprep.mubr.f32.mxu0 %v662
    %823 = vmatmul.mubr.f32.gmra.mrb[0].mxu0 %v639
    %v824 = vpop.f32.mrb[0].mxu0
    %v825 = vadd.f32 %v740, %v824
    %v826 = vpop.f32.mrb[0].mxu0
    %827 = vmatprep.mubr.f32.mxu0 %v665
    %828 = vmatmul.mubr.f32.gmra.mrb[0].mxu0 %v643
    %v829 = vpop.f32.mrb[0].mxu0
    %v830 = vadd.f32 %v745, %v829
    %v831 = vpop.f32.mrb[0].mxu0
    %832 = vmatprep.mubr.f32.mxu0 %v668
    %833 = vmatmul.mubr.f32.gmra.mrb[0].mxu0 %v647
    %v834 = vpop.f32.mrb[0].mxu0
    %v835 = vadd.f32 %v750, %v834
    %v836 = vpop.f32.mrb[0].mxu0
    %837 = vmatprep.mubr.f32.mxu0 %v671
    %838 = vmatmul.mubr.f32.gmra.mrb[0].mxu0 %v651
    %v839 = vpop.f32.mrb[0].mxu0
    %v840 = vadd.f32 %v755, %v839
    %v841 = vpop.f32.mrb[0].mxu0
    %842 = vdwg.mxu0
    %v843 = vmax.f32 %v825, 0.0
    %v844 = vmax.f32 %v830, 0.0
    %v845 = vmax.f32 %v835, 0.0
    %v846 = vmax.f32 %v840, 0.0
    %v851 = vcombine.low %v843, %v845
    %v852 = vcombine.high %v843, %v845
    %v854 = vunpack.c.l.s4 1966171168
    %v855 = vunpack.c.0.s8 %v854
    %v856 = vlaneseq
    %v857 = vshrl.u32 %v856, 7
    %v858 = vsub.s32 %v855, %v857
    %v859 = vrot.slane %v851, %v858
    %v861 = vunpack.c.l.s4 1966171168
    %v862 = vunpack.c.0.s8 %v861
    %v863 = vlaneseq
    %v864 = vshrl.u32 %v863, 7
    %v865 = vsub.s32 %v862, %v864
    %v866 = vrot.slane %v852, %v865
    %v867 = vcombine.high %v859, %v859
    %v868 = vcombine.high %v866, %v866
    %v870 = vunpack.c.l.s4 1966171168
    %v871 = vunpack.c.0.s8 %v870
    %v872 = vlaneseq
    %v873 = vshrl.u32 %v872, 7
    %v874 = vsub.s32 %v871, %v873
    %v875 = vrot.slane %v859, %v874
    %v877 = vunpack.c.l.s4 1966171168
    %v878 = vunpack.c.0.s8 %v877
    %v879 = vlaneseq
    %v880 = vshrl.u32 %v879, 7
    %v881 = vsub.s32 %v878, %v880
    %v882 = vrot.slane %v866, %v881
    %v884 = vunpack.c.l.s4 1966171168
    %v885 = vunpack.c.0.s8 %v884
    %v886 = vlaneseq
    %v887 = vshrl.u32 %v886, 7
    %v888 = vsub.s32 %v885, %v887
    %v889 = vrot.slane %v867, %v888
    %v891 = vunpack.c.l.s4 1966171168
    %v892 = vunpack.c.0.s8 %v891
    %v893 = vlaneseq
    %v894 = vshrl.u32 %v893, 7
    %v895 = vsub.s32 %v892, %v894
    %v896 = vrot.slane %v868, %v895
    %v897 = vcombine.high %v875, %v875
    %v898 = vcombine.high %v882, %v882
    %v899 = vcombine.high %v889, %v889
    %v900 = vcombine.high %v896, %v896
    %v901 = vcombine.low %v844, %v846
    %v902 = vcombine.high %v844, %v846
    %v904 = vunpack.c.l.s4 1966171168
    %v905 = vunpack.c.0.s8 %v904
    %v906 = vlaneseq
    %v907 = vshrl.u32 %v906, 7
    %v908 = vsub.s32 %v905, %v907
    %v909 = vrot.slane %v901, %v908
    %v911 = vunpack.c.l.s4 1966171168
    %v912 = vunpack.c.0.s8 %v911
    %v913 = vlaneseq
    %v914 = vshrl.u32 %v913, 7
    %v915 = vsub.s32 %v912, %v914
    %v916 = vrot.slane %v902, %v915
    %v917 = vcombine.high %v909, %v909
    %v918 = vcombine.high %v916, %v916
    %v920 = vunpack.c.l.s4 1966171168
    %v921 = vunpack.c.0.s8 %v920
    %v922 = vlaneseq
    %v923 = vshrl.u32 %v922, 7
    %v924 = vsub.s32 %v921, %v923
    %v925 = vrot.slane %v909, %v924
    %v927 = vunpack.c.l.s4 1966171168
    %v928 = vunpack.c.0.s8 %v927
    %v929 = vlaneseq
    %v930 = vshrl.u32 %v929, 7
    %v931 = vsub.s32 %v928, %v930
    %v932 = vrot.slane %v916, %v931
    %v934 = vunpack.c.l.s4 1966171168
    %v935 = vunpack.c.0.s8 %v934
    %v936 = vlaneseq
    %v937 = vshrl.u32 %v936, 7
    %v938 = vsub.s32 %v935, %v937
    %v939 = vrot.slane %v917, %v938
    %v941 = vunpack.c.l.s4 1966171168
    %v942 = vunpack.c.0.s8 %v941
    %v943 = vlaneseq
    %v944 = vshrl.u32 %v943, 7
    %v945 = vsub.s32 %v942, %v944
    %v946 = vrot.slane %v918, %v945
    %v947 = vcombine.high %v925, %v925
    %v948 = vcombine.high %v932, %v932
    %v949 = vcombine.high %v939, %v939
    %v950 = vcombine.high %v946, %v946
    %v967 = vpack.c.bf16 %v875, %v875
    %v968 = vpack.c.bf16 %v889, %v889
    %v969 = vpack.c.bf16 %v897, %v897
    %v970 = vpack.c.bf16 %v899, %v899
    %v971 = vpack.c.bf16 %v882, %v882
    %v972 = vpack.c.bf16 %v896, %v896
    %v973 = vpack.c.bf16 %v898, %v898
    %v974 = vpack.c.bf16 %v900, %v900
    %v975 = vpack.c.bf16 %v925, %v925
    %v976 = vpack.c.bf16 %v939, %v939
    %v977 = vpack.c.bf16 %v947, %v947
    %v978 = vpack.c.bf16 %v949, %v949
    %v979 = vpack.c.bf16 %v932, %v932
    %v980 = vpack.c.bf16 %v946, %v946
    %v981 = vpack.c.bf16 %v948, %v948
    %v982 = vpack.c.bf16 %v950, %v950
    %s983 = smul.u32 4, 256
    %s984 = smul.u32 %s983, 8
    %s985 = sshll.u32 %s984, 4
    %986 = dma.done [#allocation3], %s985
    %v987 = vld [vmem:[#allocation2] sm:$0xff]
    %v988 = vld [vmem:[#allocation2 + $0x8] sm:$0xff]
    %v989 = vld [vmem:[#allocation2 + $0x10] sm:$0xff]
    %v990 = vld [vmem:[#allocation2 + $0x18] sm:$0xff]
    %v991 = vld [vmem:[#allocation2 + $0x20] sm:$0xff]
    %v992 = vld [vmem:[#allocation2 + $0x28] sm:$0xff]
    %v993 = vld [vmem:[#allocation2 + $0x30] sm:$0xff]
    %v994 = vld [vmem:[#allocation2 + $0x38] sm:$0xff]
    %v995 = vld [vmem:[#allocation2 + $0x40] sm:$0xff]
    %v996 = vld [vmem:[#allocation2 + $0x48] sm:$0xff]
    %v997 = vld [vmem:[#allocation2 + $0x50] sm:$0xff]
    %v998 = vld [vmem:[#allocation2 + $0x58] sm:$0xff]
    %v999 = vld [vmem:[#allocation2 + $0x60] sm:$0xff]
    %v1000 = vld [vmem:[#allocation2 + $0x68] sm:$0xff]
    %v1001 = vld [vmem:[#allocation2 + $0x70] sm:$0xff]
    %v1002 = vld [vmem:[#allocation2 + $0x78] sm:$0xff]
    %v1003 = vld [vmem:[#allocation2 + $0x80] sm:$0xff]
    %v1004 = vld [vmem:[#allocation2 + $0x88] sm:$0xff]
    %v1005 = vld [vmem:[#allocation2 + $0x90] sm:$0xff]
    %v1006 = vld [vmem:[#allocation2 + $0x98] sm:$0xff]
    %v1007 = vld [vmem:[#allocation2 + $0xa0] sm:$0xff]
    %v1008 = vld [vmem:[#allocation2 + $0xa8] sm:$0xff]
    %v1009 = vld [vmem:[#allocation2 + $0xb0] sm:$0xff]
    %v1010 = vld [vmem:[#allocation2 + $0xb8] sm:$0xff]
    %v1011 = vld [vmem:[#allocation2 + $0xc0] sm:$0xff]
    %v1012 = vld [vmem:[#allocation2 + $0xc8] sm:$0xff]
    %v1013 = vld [vmem:[#allocation2 + $0xd0] sm:$0xff]
    %v1014 = vld [vmem:[#allocation2 + $0xd8] sm:$0xff]
    %v1015 = vld [vmem:[#allocation2 + $0xe0] sm:$0xff]
    %v1016 = vld [vmem:[#allocation2 + $0xe8] sm:$0xff]
    %v1017 = vld [vmem:[#allocation2 + $0xf0] sm:$0xff]
    %v1018 = vld [vmem:[#allocation2 + $0xf8] sm:$0xff]
    %v1019 = vld [vmem:[#allocation2 + $0x100] sm:$0xff]
    %v1020 = vld [vmem:[#allocation2 + $0x108] sm:$0xff]
    %v1021 = vld [vmem:[#allocation2 + $0x110] sm:$0xff]
    %v1022 = vld [vmem:[#allocation2 + $0x118] sm:$0xff]
    %v1023 = vld [vmem:[#allocation2 + $0x120] sm:$0xff]
    %v1024 = vld [vmem:[#allocation2 + $0x128] sm:$0xff]
    %v1025 = vld [vmem:[#allocation2 + $0x130] sm:$0xff]
    %v1026 = vld [vmem:[#allocation2 + $0x138] sm:$0xff]
    %v1027 = vld [vmem:[#allocation2 + $0x140] sm:$0xff]
    %v1028 = vld [vmem:[#allocation2 + $0x148] sm:$0xff]
    %v1029 = vld [vmem:[#allocation2 + $0x150] sm:$0xff]
    %v1030 = vld [vmem:[#allocation2 + $0x158] sm:$0xff]
    %v1031 = vld [vmem:[#allocation2 + $0x160] sm:$0xff]
    %v1032 = vld [vmem:[#allocation2 + $0x168] sm:$0xff]
    %v1033 = vld [vmem:[#allocation2 + $0x170] sm:$0xff]
    %v1034 = vld [vmem:[#allocation2 + $0x178] sm:$0xff]
    %v1035 = vld [vmem:[#allocation2 + $0x180] sm:$0xff]
    %v1036 = vld [vmem:[#allocation2 + $0x188] sm:$0xff]
    %v1037 = vld [vmem:[#allocation2 + $0x190] sm:$0xff]
    %v1038 = vld [vmem:[#allocation2 + $0x198] sm:$0xff]
    %v1039 = vld [vmem:[#allocation2 + $0x1a0] sm:$0xff]
    %v1040 = vld [vmem:[#allocation2 + $0x1a8] sm:$0xff]
    %v1041 = vld [vmem:[#allocation2 + $0x1b0] sm:$0xff]
    %v1042 = vld [vmem:[#allocation2 + $0x1b8] sm:$0xff]
    %v1043 = vld [vmem:[#allocation2 + $0x1c0] sm:$0xff]
    %v1044 = vld [vmem:[#allocation2 + $0x1c8] sm:$0xff]
    %v1045 = vld [vmem:[#allocation2 + $0x1d0] sm:$0xff]
    %v1046 = vld [vmem:[#allocation2 + $0x1d8] sm:$0xff]
    %v1047 = vld [vmem:[#allocation2 + $0x1e0] sm:$0xff]
    %v1048 = vld [vmem:[#allocation2 + $0x1e8] sm:$0xff]
    %v1049 = vld [vmem:[#allocation2 + $0x1f0] sm:$0xff]
    %v1050 = vld [vmem:[#allocation2 + $0x1f8] sm:$0xff]
    %v1051 = vld [vmem:[#allocation2 + $0x200] sm:$0xff]
    %v1052 = vld [vmem:[#allocation2 + $0x208] sm:$0xff]
    %v1053 = vld [vmem:[#allocation2 + $0x210] sm:$0xff]
    %v1054 = vld [vmem:[#allocation2 + $0x218] sm:$0xff]
    %v1055 = vld [vmem:[#allocation2 + $0x220] sm:$0xff]
    %v1056 = vld [vmem:[#allocation2 + $0x228] sm:$0xff]
    %v1057 = vld [vmem:[#allocation2 + $0x230] sm:$0xff]
    %v1058 = vld [vmem:[#allocation2 + $0x238] sm:$0xff]
    %v1059 = vld [vmem:[#allocation2 + $0x240] sm:$0xff]
    %v1060 = vld [vmem:[#allocation2 + $0x248] sm:$0xff]
    %v1061 = vld [vmem:[#allocation2 + $0x250] sm:$0xff]
    %v1062 = vld [vmem:[#allocation2 + $0x258] sm:$0xff]
    %v1063 = vld [vmem:[#allocation2 + $0x260] sm:$0xff]
    %v1064 = vld [vmem:[#allocation2 + $0x268] sm:$0xff]
    %v1065 = vld [vmem:[#allocation2 + $0x270] sm:$0xff]
    %v1066 = vld [vmem:[#allocation2 + $0x278] sm:$0xff]
    %v1067 = vld [vmem:[#allocation2 + $0x280] sm:$0xff]
    %v1068 = vld [vmem:[#allocation2 + $0x288] sm:$0xff]
    %v1069 = vld [vmem:[#allocation2 + $0x290] sm:$0xff]
    %v1070 = vld [vmem:[#allocation2 + $0x298] sm:$0xff]
    %v1071 = vld [vmem:[#allocation2 + $0x2a0] sm:$0xff]
    %v1072 = vld [vmem:[#allocation2 + $0x2a8] sm:$0xff]
    %v1073 = vld [vmem:[#allocation2 + $0x2b0] sm:$0xff]
    %v1074 = vld [vmem:[#allocation2 + $0x2b8] sm:$0xff]
    %v1075 = vld [vmem:[#allocation2 + $0x2c0] sm:$0xff]
    %v1076 = vld [vmem:[#allocation2 + $0x2c8] sm:$0xff]
    %v1077 = vld [vmem:[#allocation2 + $0x2d0] sm:$0xff]
    %v1078 = vld [vmem:[#allocation2 + $0x2d8] sm:$0xff]
    %v1079 = vld [vmem:[#allocation2 + $0x2e0] sm:$0xff]
    %v1080 = vld [vmem:[#allocation2 + $0x2e8] sm:$0xff]
    %v1081 = vld [vmem:[#allocation2 + $0x2f0] sm:$0xff]
    %v1082 = vld [vmem:[#allocation2 + $0x2f8] sm:$0xff]
    %v1083 = vld [vmem:[#allocation2 + $0x300] sm:$0xff]
    %v1084 = vld [vmem:[#allocation2 + $0x308] sm:$0xff]
    %v1085 = vld [vmem:[#allocation2 + $0x310] sm:$0xff]
    %v1086 = vld [vmem:[#allocation2 + $0x318] sm:$0xff]
    %v1087 = vld [vmem:[#allocation2 + $0x320] sm:$0xff]
    %v1088 = vld [vmem:[#allocation2 + $0x328] sm:$0xff]
    %v1089 = vld [vmem:[#allocation2 + $0x330] sm:$0xff]
    %v1090 = vld [vmem:[#allocation2 + $0x338] sm:$0xff]
    %v1091 = vld [vmem:[#allocation2 + $0x340] sm:$0xff]
    %v1092 = vld [vmem:[#allocation2 + $0x348] sm:$0xff]
    %v1093 = vld [vmem:[#allocation2 + $0x350] sm:$0xff]
    %v1094 = vld [vmem:[#allocation2 + $0x358] sm:$0xff]
    %v1095 = vld [vmem:[#allocation2 + $0x360] sm:$0xff]
    %v1096 = vld [vmem:[#allocation2 + $0x368] sm:$0xff]
    %v1097 = vld [vmem:[#allocation2 + $0x370] sm:$0xff]
    %v1098 = vld [vmem:[#allocation2 + $0x378] sm:$0xff]
    %v1099 = vld [vmem:[#allocation2 + $0x380] sm:$0xff]
    %v1100 = vld [vmem:[#allocation2 + $0x388] sm:$0xff]
    %v1101 = vld [vmem:[#allocation2 + $0x390] sm:$0xff]
    %v1102 = vld [vmem:[#allocation2 + $0x398] sm:$0xff]
    %v1103 = vld [vmem:[#allocation2 + $0x3a0] sm:$0xff]
    %v1104 = vld [vmem:[#allocation2 + $0x3a8] sm:$0xff]
    %v1105 = vld [vmem:[#allocation2 + $0x3b0] sm:$0xff]
    %v1106 = vld [vmem:[#allocation2 + $0x3b8] sm:$0xff]
    %v1107 = vld [vmem:[#allocation2 + $0x3c0] sm:$0xff]
    %v1108 = vld [vmem:[#allocation2 + $0x3c8] sm:$0xff]
    %v1109 = vld [vmem:[#allocation2 + $0x3d0] sm:$0xff]
    %v1110 = vld [vmem:[#allocation2 + $0x3d8] sm:$0xff]
    %v1111 = vld [vmem:[#allocation2 + $0x3e0] sm:$0xff]
    %v1112 = vld [vmem:[#allocation2 + $0x3e8] sm:$0xff]
    %v1113 = vld [vmem:[#allocation2 + $0x3f0] sm:$0xff]
    %v1114 = vld [vmem:[#allocation2 + $0x3f8] sm:$0xff]
    %v1115 = vld [vmem:[#allocation2 + $0x400] sm:$0xff]
    %v1116 = vld [vmem:[#allocation2 + $0x408] sm:$0xff]
    %v1117 = vld [vmem:[#allocation2 + $0x410] sm:$0xff]
    %v1118 = vld [vmem:[#allocation2 + $0x418] sm:$0xff]
    %v1119 = vld [vmem:[#allocation2 + $0x420] sm:$0xff]
    %v1120 = vld [vmem:[#allocation2 + $0x428] sm:$0xff]
    %v1121 = vld [vmem:[#allocation2 + $0x430] sm:$0xff]
    %v1122 = vld [vmem:[#allocation2 + $0x438] sm:$0xff]
    %v1123 = vld [vmem:[#allocation2 + $0x440] sm:$0xff]
    %v1124 = vld [vmem:[#allocation2 + $0x448] sm:$0xff]
    %v1125 = vld [vmem:[#allocation2 + $0x450] sm:$0xff]
    %v1126 = vld [vmem:[#allocation2 + $0x458] sm:$0xff]
    %v1127 = vld [vmem:[#allocation2 + $0x460] sm:$0xff]
    %v1128 = vld [vmem:[#allocation2 + $0x468] sm:$0xff]
    %v1129 = vld [vmem:[#allocation2 + $0x470] sm:$0xff]
    %v1130 = vld [vmem:[#allocation2 + $0x478] sm:$0xff]
    %v1131 = vld [vmem:[#allocation2 + $0x480] sm:$0xff]
    %v1132 = vld [vmem:[#allocation2 + $0x488] sm:$0xff]
    %v1133 = vld [vmem:[#allocation2 + $0x490] sm:$0xff]
    %v1134 = vld [vmem:[#allocation2 + $0x498] sm:$0xff]
    %v1135 = vld [vmem:[#allocation2 + $0x4a0] sm:$0xff]
    %v1136 = vld [vmem:[#allocation2 + $0x4a8] sm:$0xff]
    %v1137 = vld [vmem:[#allocation2 + $0x4b0] sm:$0xff]
    %v1138 = vld [vmem:[#allocation2 + $0x4b8] sm:$0xff]
    %v1139 = vld [vmem:[#allocation2 + $0x4c0] sm:$0xff]
    %v1140 = vld [vmem:[#allocation2 + $0x4c8] sm:$0xff]
    %v1141 = vld [vmem:[#allocation2 + $0x4d0] sm:$0xff]
    %v1142 = vld [vmem:[#allocation2 + $0x4d8] sm:$0xff]
    %v1143 = vld [vmem:[#allocation2 + $0x4e0] sm:$0xff]
    %v1144 = vld [vmem:[#allocation2 + $0x4e8] sm:$0xff]
    %v1145 = vld [vmem:[#allocation2 + $0x4f0] sm:$0xff]
    %v1146 = vld [vmem:[#allocation2 + $0x4f8] sm:$0xff]
    %v1147 = vld [vmem:[#allocation2 + $0x500] sm:$0xff]
    %v1148 = vld [vmem:[#allocation2 + $0x508] sm:$0xff]
    %v1149 = vld [vmem:[#allocation2 + $0x510] sm:$0xff]
    %v1150 = vld [vmem:[#allocation2 + $0x518] sm:$0xff]
    %v1151 = vld [vmem:[#allocation2 + $0x520] sm:$0xff]
    %v1152 = vld [vmem:[#allocation2 + $0x528] sm:$0xff]
    %v1153 = vld [vmem:[#allocation2 + $0x530] sm:$0xff]
    %v1154 = vld [vmem:[#allocation2 + $0x538] sm:$0xff]
    %v1155 = vld [vmem:[#allocation2 + $0x540] sm:$0xff]
    %v1156 = vld [vmem:[#allocation2 + $0x548] sm:$0xff]
    %v1157 = vld [vmem:[#allocation2 + $0x550] sm:$0xff]
    %v1158 = vld [vmem:[#allocation2 + $0x558] sm:$0xff]
    %v1159 = vld [vmem:[#allocation2 + $0x560] sm:$0xff]
    %v1160 = vld [vmem:[#allocation2 + $0x568] sm:$0xff]
    %v1161 = vld [vmem:[#allocation2 + $0x570] sm:$0xff]
    %v1162 = vld [vmem:[#allocation2 + $0x578] sm:$0xff]
    %v1163 = vld [vmem:[#allocation2 + $0x580] sm:$0xff]
    %v1164 = vld [vmem:[#allocation2 + $0x588] sm:$0xff]
    %v1165 = vld [vmem:[#allocation2 + $0x590] sm:$0xff]
    %v1166 = vld [vmem:[#allocation2 + $0x598] sm:$0xff]
    %v1167 = vld [vmem:[#allocation2 + $0x5a0] sm:$0xff]
    %v1168 = vld [vmem:[#allocation2 + $0x5a8] sm:$0xff]
    %v1169 = vld [vmem:[#allocation2 + $0x5b0] sm:$0xff]
    %v1170 = vld [vmem:[#allocation2 + $0x5b8] sm:$0xff]
    %v1171 = vld [vmem:[#allocation2 + $0x5c0] sm:$0xff]
    %v1172 = vld [vmem:[#allocation2 + $0x5c8] sm:$0xff]
    %v1173 = vld [vmem:[#allocation2 + $0x5d0] sm:$0xff]
    %v1174 = vld [vmem:[#allocation2 + $0x5d8] sm:$0xff]
    %v1175 = vld [vmem:[#allocation2 + $0x5e0] sm:$0xff]
    %v1176 = vld [vmem:[#allocation2 + $0x5e8] sm:$0xff]
    %v1177 = vld [vmem:[#allocation2 + $0x5f0] sm:$0xff]
    %v1178 = vld [vmem:[#allocation2 + $0x5f8] sm:$0xff]
    %v1179 = vld [vmem:[#allocation2 + $0x600] sm:$0xff]
    %v1180 = vld [vmem:[#allocation2 + $0x608] sm:$0xff]
    %v1181 = vld [vmem:[#allocation2 + $0x610] sm:$0xff]
    %v1182 = vld [vmem:[#allocation2 + $0x618] sm:$0xff]
    %v1183 = vld [vmem:[#allocation2 + $0x620] sm:$0xff]
    %v1184 = vld [vmem:[#allocation2 + $0x628] sm:$0xff]
    %v1185 = vld [vmem:[#allocation2 + $0x630] sm:$0xff]
    %v1186 = vld [vmem:[#allocation2 + $0x638] sm:$0xff]
    %v1187 = vld [vmem:[#allocation2 + $0x640] sm:$0xff]
    %v1188 = vld [vmem:[#allocation2 + $0x648] sm:$0xff]
    %v1189 = vld [vmem:[#allocation2 + $0x650] sm:$0xff]
    %v1190 = vld [vmem:[#allocation2 + $0x658] sm:$0xff]
    %v1191 = vld [vmem:[#allocation2 + $0x660] sm:$0xff]
    %v1192 = vld [vmem:[#allocation2 + $0x668] sm:$0xff]
    %v1193 = vld [vmem:[#allocation2 + $0x670] sm:$0xff]
    %v1194 = vld [vmem:[#allocation2 + $0x678] sm:$0xff]
    %v1195 = vld [vmem:[#allocation2 + $0x680] sm:$0xff]
    %v1196 = vld [vmem:[#allocation2 + $0x688] sm:$0xff]
    %v1197 = vld [vmem:[#allocation2 + $0x690] sm:$0xff]
    %v1198 = vld [vmem:[#allocation2 + $0x698] sm:$0xff]
    %v1199 = vld [vmem:[#allocation2 + $0x6a0] sm:$0xff]
    %v1200 = vld [vmem:[#allocation2 + $0x6a8] sm:$0xff]
    %v1201 = vld [vmem:[#allocation2 + $0x6b0] sm:$0xff]
    %v1202 = vld [vmem:[#allocation2 + $0x6b8] sm:$0xff]
    %v1203 = vld [vmem:[#allocation2 + $0x6c0] sm:$0xff]
    %v1204 = vld [vmem:[#allocation2 + $0x6c8] sm:$0xff]
    %v1205 = vld [vmem:[#allocation2 + $0x6d0] sm:$0xff]
    %v1206 = vld [vmem:[#allocation2 + $0x6d8] sm:$0xff]
    %v1207 = vld [vmem:[#allocation2 + $0x6e0] sm:$0xff]
    %v1208 = vld [vmem:[#allocation2 + $0x6e8] sm:$0xff]
    %v1209 = vld [vmem:[#allocation2 + $0x6f0] sm:$0xff]
    %v1210 = vld [vmem:[#allocation2 + $0x6f8] sm:$0xff]
    %v1211 = vld [vmem:[#allocation2 + $0x700] sm:$0xff]
    %v1212 = vld [vmem:[#allocation2 + $0x708] sm:$0xff]
    %v1213 = vld [vmem:[#allocation2 + $0x710] sm:$0xff]
    %v1214 = vld [vmem:[#allocation2 + $0x718] sm:$0xff]
    %v1215 = vld [vmem:[#allocation2 + $0x720] sm:$0xff]
    %v1216 = vld [vmem:[#allocation2 + $0x728] sm:$0xff]
    %v1217 = vld [vmem:[#allocation2 + $0x730] sm:$0xff]
    %v1218 = vld [vmem:[#allocation2 + $0x738] sm:$0xff]
    %v1219 = vld [vmem:[#allocation2 + $0x740] sm:$0xff]
    %v1220 = vld [vmem:[#allocation2 + $0x748] sm:$0xff]
    %v1221 = vld [vmem:[#allocation2 + $0x750] sm:$0xff]
    %v1222 = vld [vmem:[#allocation2 + $0x758] sm:$0xff]
    %v1223 = vld [vmem:[#allocation2 + $0x760] sm:$0xff]
    %v1224 = vld [vmem:[#allocation2 + $0x768] sm:$0xff]
    %v1225 = vld [vmem:[#allocation2 + $0x770] sm:$0xff]
    %v1226 = vld [vmem:[#allocation2 + $0x778] sm:$0xff]
    %v1227 = vld [vmem:[#allocation2 + $0x780] sm:$0xff]
    %v1228 = vld [vmem:[#allocation2 + $0x788] sm:$0xff]
    %v1229 = vld [vmem:[#allocation2 + $0x790] sm:$0xff]
    %v1230 = vld [vmem:[#allocation2 + $0x798] sm:$0xff]
    %v1231 = vld [vmem:[#allocation2 + $0x7a0] sm:$0xff]
    %v1232 = vld [vmem:[#allocation2 + $0x7a8] sm:$0xff]
    %v1233 = vld [vmem:[#allocation2 + $0x7b0] sm:$0xff]
    %v1234 = vld [vmem:[#allocation2 + $0x7b8] sm:$0xff]
    %v1235 = vld [vmem:[#allocation2 + $0x7c0] sm:$0xff]
    %v1236 = vld [vmem:[#allocation2 + $0x7c8] sm:$0xff]
    %v1237 = vld [vmem:[#allocation2 + $0x7d0] sm:$0xff]
    %v1238 = vld [vmem:[#allocation2 + $0x7d8] sm:$0xff]
    %v1239 = vld [vmem:[#allocation2 + $0x7e0] sm:$0xff]
    %v1240 = vld [vmem:[#allocation2 + $0x7e8] sm:$0xff]
    %v1241 = vld [vmem:[#allocation2 + $0x7f0] sm:$0xff]
    %v1242 = vld [vmem:[#allocation2 + $0x7f8] sm:$0xff]
    %v1243 = vld [vmem:[#allocation2 + $0x800] sm:$0xff]
    %v1244 = vld [vmem:[#allocation2 + $0x808] sm:$0xff]
    %v1245 = vld [vmem:[#allocation2 + $0x810] sm:$0xff]
    %v1246 = vld [vmem:[#allocation2 + $0x818] sm:$0xff]
    %v1247 = vld [vmem:[#allocation2 + $0x820] sm:$0xff]
    %v1248 = vld [vmem:[#allocation2 + $0x828] sm:$0xff]
    %v1249 = vld [vmem:[#allocation2 + $0x830] sm:$0xff]
    %v1250 = vld [vmem:[#allocation2 + $0x838] sm:$0xff]
    %v1251 = vld [vmem:[#allocation2 + $0x840] sm:$0xff]
    %v1252 = vld [vmem:[#allocation2 + $0x848] sm:$0xff]
    %v1253 = vld [vmem:[#allocation2 + $0x850] sm:$0xff]
    %v1254 = vld [vmem:[#allocation2 + $0x858] sm:$0xff]
    %v1255 = vld [vmem:[#allocation2 + $0x860] sm:$0xff]
    %v1256 = vld [vmem:[#allocation2 + $0x868] sm:$0xff]
    %v1257 = vld [vmem:[#allocation2 + $0x870] sm:$0xff]
    %v1258 = vld [vmem:[#allocation2 + $0x878] sm:$0xff]
    %v1259 = vld [vmem:[#allocation2 + $0x880] sm:$0xff]
    %v1260 = vld [vmem:[#allocation2 + $0x888] sm:$0xff]
    %v1261 = vld [vmem:[#allocation2 + $0x890] sm:$0xff]
    %v1262 = vld [vmem:[#allocation2 + $0x898] sm:$0xff]
    %v1263 = vld [vmem:[#allocation2 + $0x8a0] sm:$0xff]
    %v1264 = vld [vmem:[#allocation2 + $0x8a8] sm:$0xff]
    %v1265 = vld [vmem:[#allocation2 + $0x8b0] sm:$0xff]
    %v1266 = vld [vmem:[#allocation2 + $0x8b8] sm:$0xff]
    %v1267 = vld [vmem:[#allocation2 + $0x8c0] sm:$0xff]
    %v1268 = vld [vmem:[#allocation2 + $0x8c8] sm:$0xff]
    %v1269 = vld [vmem:[#allocation2 + $0x8d0] sm:$0xff]
    %v1270 = vld [vmem:[#allocation2 + $0x8d8] sm:$0xff]
    %v1271 = vld [vmem:[#allocation2 + $0x8e0] sm:$0xff]
    %v1272 = vld [vmem:[#allocation2 + $0x8e8] sm:$0xff]
    %v1273 = vld [vmem:[#allocation2 + $0x8f0] sm:$0xff]
    %v1274 = vld [vmem:[#allocation2 + $0x8f8] sm:$0xff]
    %v1275 = vld [vmem:[#allocation2 + $0x900] sm:$0xff]
    %v1276 = vld [vmem:[#allocation2 + $0x908] sm:$0xff]
    %v1277 = vld [vmem:[#allocation2 + $0x910] sm:$0xff]
    %v1278 = vld [vmem:[#allocation2 + $0x918] sm:$0xff]
    %v1279 = vld [vmem:[#allocation2 + $0x920] sm:$0xff]
    %v1280 = vld [vmem:[#allocation2 + $0x928] sm:$0xff]
    %v1281 = vld [vmem:[#allocation2 + $0x930] sm:$0xff]
    %v1282 = vld [vmem:[#allocation2 + $0x938] sm:$0xff]
    %v1283 = vld [vmem:[#allocation2 + $0x940] sm:$0xff]
    %v1284 = vld [vmem:[#allocation2 + $0x948] sm:$0xff]
    %v1285 = vld [vmem:[#allocation2 + $0x950] sm:$0xff]
    %v1286 = vld [vmem:[#allocation2 + $0x958] sm:$0xff]
    %v1287 = vld [vmem:[#allocation2 + $0x960] sm:$0xff]
    %v1288 = vld [vmem:[#allocation2 + $0x968] sm:$0xff]
    %v1289 = vld [vmem:[#allocation2 + $0x970] sm:$0xff]
    %v1290 = vld [vmem:[#allocation2 + $0x978] sm:$0xff]
    %v1291 = vld [vmem:[#allocation2 + $0x980] sm:$0xff]
    %v1292 = vld [vmem:[#allocation2 + $0x988] sm:$0xff]
    %v1293 = vld [vmem:[#allocation2 + $0x990] sm:$0xff]
    %v1294 = vld [vmem:[#allocation2 + $0x998] sm:$0xff]
    %v1295 = vld [vmem:[#allocation2 + $0x9a0] sm:$0xff]
    %v1296 = vld [vmem:[#allocation2 + $0x9a8] sm:$0xff]
    %v1297 = vld [vmem:[#allocation2 + $0x9b0] sm:$0xff]
    %v1298 = vld [vmem:[#allocation2 + $0x9b8] sm:$0xff]
    %v1299 = vld [vmem:[#allocation2 + $0x9c0] sm:$0xff]
    %v1300 = vld [vmem:[#allocation2 + $0x9c8] sm:$0xff]
    %v1301 = vld [vmem:[#allocation2 + $0x9d0] sm:$0xff]
    %v1302 = vld [vmem:[#allocation2 + $0x9d8] sm:$0xff]
    %v1303 = vld [vmem:[#allocation2 + $0x9e0] sm:$0xff]
    %v1304 = vld [vmem:[#allocation2 + $0x9e8] sm:$0xff]
    %v1305 = vld [vmem:[#allocation2 + $0x9f0] sm:$0xff]
    %v1306 = vld [vmem:[#allocation2 + $0x9f8] sm:$0xff]
    %v1307 = vld [vmem:[#allocation2 + $0xa00] sm:$0xff]
    %v1308 = vld [vmem:[#allocation2 + $0xa08] sm:$0xff]
    %v1309 = vld [vmem:[#allocation2 + $0xa10] sm:$0xff]
    %v1310 = vld [vmem:[#allocation2 + $0xa18] sm:$0xff]
    %v1311 = vld [vmem:[#allocation2 + $0xa20] sm:$0xff]
    %v1312 = vld [vmem:[#allocation2 + $0xa28] sm:$0xff]
    %v1313 = vld [vmem:[#allocation2 + $0xa30] sm:$0xff]
    %v1314 = vld [vmem:[#allocation2 + $0xa38] sm:$0xff]
    %v1315 = vld [vmem:[#allocation2 + $0xa40] sm:$0xff]
    %v1316 = vld [vmem:[#allocation2 + $0xa48] sm:$0xff]
    %v1317 = vld [vmem:[#allocation2 + $0xa50] sm:$0xff]
    %v1318 = vld [vmem:[#allocation2 + $0xa58] sm:$0xff]
    %v1319 = vld [vmem:[#allocation2 + $0xa60] sm:$0xff]
    %v1320 = vld [vmem:[#allocation2 + $0xa68] sm:$0xff]
    %v1321 = vld [vmem:[#allocation2 + $0xa70] sm:$0xff]
    %v1322 = vld [vmem:[#allocation2 + $0xa78] sm:$0xff]
    %v1323 = vld [vmem:[#allocation2 + $0xa80] sm:$0xff]
    %v1324 = vld [vmem:[#allocation2 + $0xa88] sm:$0xff]
    %v1325 = vld [vmem:[#allocation2 + $0xa90] sm:$0xff]
    %v1326 = vld [vmem:[#allocation2 + $0xa98] sm:$0xff]
    %v1327 = vld [vmem:[#allocation2 + $0xaa0] sm:$0xff]
    %v1328 = vld [vmem:[#allocation2 + $0xaa8] sm:$0xff]
    %v1329 = vld [vmem:[#allocation2 + $0xab0] sm:$0xff]
    %v1330 = vld [vmem:[#allocation2 + $0xab8] sm:$0xff]
    %v1331 = vld [vmem:[#allocation2 + $0xac0] sm:$0xff]
    %v1332 = vld [vmem:[#allocation2 + $0xac8] sm:$0xff]
    %v1333 = vld [vmem:[#allocation2 + $0xad0] sm:$0xff]
    %v1334 = vld [vmem:[#allocation2 + $0xad8] sm:$0xff]
    %v1335 = vld [vmem:[#allocation2 + $0xae0] sm:$0xff]
    %v1336 = vld [vmem:[#allocation2 + $0xae8] sm:$0xff]
    %v1337 = vld [vmem:[#allocation2 + $0xaf0] sm:$0xff]
    %v1338 = vld [vmem:[#allocation2 + $0xaf8] sm:$0xff]
    %v1339 = vld [vmem:[#allocation2 + $0xb00] sm:$0xff]
    %v1340 = vld [vmem:[#allocation2 + $0xb08] sm:$0xff]
    %v1341 = vld [vmem:[#allocation2 + $0xb10] sm:$0xff]
    %v1342 = vld [vmem:[#allocation2 + $0xb18] sm:$0xff]
    %v1343 = vld [vmem:[#allocation2 + $0xb20] sm:$0xff]
    %v1344 = vld [vmem:[#allocation2 + $0xb28] sm:$0xff]
    %v1345 = vld [vmem:[#allocation2 + $0xb30] sm:$0xff]
    %v1346 = vld [vmem:[#allocation2 + $0xb38] sm:$0xff]
    %v1347 = vld [vmem:[#allocation2 + $0xb40] sm:$0xff]
    %v1348 = vld [vmem:[#allocation2 + $0xb48] sm:$0xff]
    %v1349 = vld [vmem:[#allocation2 + $0xb50] sm:$0xff]
    %v1350 = vld [vmem:[#allocation2 + $0xb58] sm:$0xff]
    %v1351 = vld [vmem:[#allocation2 + $0xb60] sm:$0xff]
    %v1352 = vld [vmem:[#allocation2 + $0xb68] sm:$0xff]
    %v1353 = vld [vmem:[#allocation2 + $0xb70] sm:$0xff]
    %v1354 = vld [vmem:[#allocation2 + $0xb78] sm:$0xff]
    %v1355 = vld [vmem:[#allocation2 + $0xb80] sm:$0xff]
    %v1356 = vld [vmem:[#allocation2 + $0xb88] sm:$0xff]
    %v1357 = vld [vmem:[#allocation2 + $0xb90] sm:$0xff]
    %v1358 = vld [vmem:[#allocation2 + $0xb98] sm:$0xff]
    %v1359 = vld [vmem:[#allocation2 + $0xba0] sm:$0xff]
    %v1360 = vld [vmem:[#allocation2 + $0xba8] sm:$0xff]
    %v1361 = vld [vmem:[#allocation2 + $0xbb0] sm:$0xff]
    %v1362 = vld [vmem:[#allocation2 + $0xbb8] sm:$0xff]
    %v1363 = vld [vmem:[#allocation2 + $0xbc0] sm:$0xff]
    %v1364 = vld [vmem:[#allocation2 + $0xbc8] sm:$0xff]
    %v1365 = vld [vmem:[#allocation2 + $0xbd0] sm:$0xff]
    %v1366 = vld [vmem:[#allocation2 + $0xbd8] sm:$0xff]
    %v1367 = vld [vmem:[#allocation2 + $0xbe0] sm:$0xff]
    %v1368 = vld [vmem:[#allocation2 + $0xbe8] sm:$0xff]
    %v1369 = vld [vmem:[#allocation2 + $0xbf0] sm:$0xff]
    %v1370 = vld [vmem:[#allocation2 + $0xbf8] sm:$0xff]
    %v1371 = vld [vmem:[#allocation2 + $0xc00] sm:$0xff]
    %v1372 = vld [vmem:[#allocation2 + $0xc08] sm:$0xff]
    %v1373 = vld [vmem:[#allocation2 + $0xc10] sm:$0xff]
    %v1374 = vld [vmem:[#allocation2 + $0xc18] sm:$0xff]
    %v1375 = vld [vmem:[#allocation2 + $0xc20] sm:$0xff]
    %v1376 = vld [vmem:[#allocation2 + $0xc28] sm:$0xff]
    %v1377 = vld [vmem:[#allocation2 + $0xc30] sm:$0xff]
    %v1378 = vld [vmem:[#allocation2 + $0xc38] sm:$0xff]
    %v1379 = vld [vmem:[#allocation2 + $0xc40] sm:$0xff]
    %v1380 = vld [vmem:[#allocation2 + $0xc48] sm:$0xff]
    %v1381 = vld [vmem:[#allocation2 + $0xc50] sm:$0xff]
    %v1382 = vld [vmem:[#allocation2 + $0xc58] sm:$0xff]
    %v1383 = vld [vmem:[#allocation2 + $0xc60] sm:$0xff]
    %v1384 = vld [vmem:[#allocation2 + $0xc68] sm:$0xff]
    %v1385 = vld [vmem:[#allocation2 + $0xc70] sm:$0xff]
    %v1386 = vld [vmem:[#allocation2 + $0xc78] sm:$0xff]
    %v1387 = vld [vmem:[#allocation2 + $0xc80] sm:$0xff]
    %v1388 = vld [vmem:[#allocation2 + $0xc88] sm:$0xff]
    %v1389 = vld [vmem:[#allocation2 + $0xc90] sm:$0xff]
    %v1390 = vld [vmem:[#allocation2 + $0xc98] sm:$0xff]
    %v1391 = vld [vmem:[#allocation2 + $0xca0] sm:$0xff]
    %v1392 = vld [vmem:[#allocation2 + $0xca8] sm:$0xff]
    %v1393 = vld [vmem:[#allocation2 + $0xcb0] sm:$0xff]
    %v1394 = vld [vmem:[#allocation2 + $0xcb8] sm:$0xff]
    %v1395 = vld [vmem:[#allocation2 + $0xcc0] sm:$0xff]
    %v1396 = vld [vmem:[#allocation2 + $0xcc8] sm:$0xff]
    %v1397 = vld [vmem:[#allocation2 + $0xcd0] sm:$0xff]
    %v1398 = vld [vmem:[#allocation2 + $0xcd8] sm:$0xff]
    %v1399 = vld [vmem:[#allocation2 + $0xce0] sm:$0xff]
    %v1400 = vld [vmem:[#allocation2 + $0xce8] sm:$0xff]
    %v1401 = vld [vmem:[#allocation2 + $0xcf0] sm:$0xff]
    %v1402 = vld [vmem:[#allocation2 + $0xcf8] sm:$0xff]
    %v1403 = vld [vmem:[#allocation2 + $0xd00] sm:$0xff]
    %v1404 = vld [vmem:[#allocation2 + $0xd08] sm:$0xff]
    %v1405 = vld [vmem:[#allocation2 + $0xd10] sm:$0xff]
    %v1406 = vld [vmem:[#allocation2 + $0xd18] sm:$0xff]
    %v1407 = vld [vmem:[#allocation2 + $0xd20] sm:$0xff]
    %v1408 = vld [vmem:[#allocation2 + $0xd28] sm:$0xff]
    %v1409 = vld [vmem:[#allocation2 + $0xd30] sm:$0xff]
    %v1410 = vld [vmem:[#allocation2 + $0xd38] sm:$0xff]
    %v1411 = vld [vmem:[#allocation2 + $0xd40] sm:$0xff]
    %v1412 = vld [vmem:[#allocation2 + $0xd48] sm:$0xff]
    %v1413 = vld [vmem:[#allocation2 + $0xd50] sm:$0xff]
    %v1414 = vld [vmem:[#allocation2 + $0xd58] sm:$0xff]
    %v1415 = vld [vmem:[#allocation2 + $0xd60] sm:$0xff]
    %v1416 = vld [vmem:[#allocation2 + $0xd68] sm:$0xff]
    %v1417 = vld [vmem:[#allocation2 + $0xd70] sm:$0xff]
    %v1418 = vld [vmem:[#allocation2 + $0xd78] sm:$0xff]
    %v1419 = vld [vmem:[#allocation2 + $0xd80] sm:$0xff]
    %v1420 = vld [vmem:[#allocation2 + $0xd88] sm:$0xff]
    %v1421 = vld [vmem:[#allocation2 + $0xd90] sm:$0xff]
    %v1422 = vld [vmem:[#allocation2 + $0xd98] sm:$0xff]
    %v1423 = vld [vmem:[#allocation2 + $0xda0] sm:$0xff]
    %v1424 = vld [vmem:[#allocation2 + $0xda8] sm:$0xff]
    %v1425 = vld [vmem:[#allocation2 + $0xdb0] sm:$0xff]
    %v1426 = vld [vmem:[#allocation2 + $0xdb8] sm:$0xff]
    %v1427 = vld [vmem:[#allocation2 + $0xdc0] sm:$0xff]
    %v1428 = vld [vmem:[#allocation2 + $0xdc8] sm:$0xff]
    %v1429 = vld [vmem:[#allocation2 + $0xdd0] sm:$0xff]
    %v1430 = vld [vmem:[#allocation2 + $0xdd8] sm:$0xff]
    %v1431 = vld [vmem:[#allocation2 + $0xde0] sm:$0xff]
    %v1432 = vld [vmem:[#allocation2 + $0xde8] sm:$0xff]
    %v1433 = vld [vmem:[#allocation2 + $0xdf0] sm:$0xff]
    %v1434 = vld [vmem:[#allocation2 + $0xdf8] sm:$0xff]
    %v1435 = vld [vmem:[#allocation2 + $0xe00] sm:$0xff]
    %v1436 = vld [vmem:[#allocation2 + $0xe08] sm:$0xff]
    %v1437 = vld [vmem:[#allocation2 + $0xe10] sm:$0xff]
    %v1438 = vld [vmem:[#allocation2 + $0xe18] sm:$0xff]
    %v1439 = vld [vmem:[#allocation2 + $0xe20] sm:$0xff]
    %v1440 = vld [vmem:[#allocation2 + $0xe28] sm:$0xff]
    %v1441 = vld [vmem:[#allocation2 + $0xe30] sm:$0xff]
    %v1442 = vld [vmem:[#allocation2 + $0xe38] sm:$0xff]
    %v1443 = vld [vmem:[#allocation2 + $0xe40] sm:$0xff]
    %v1444 = vld [vmem:[#allocation2 + $0xe48] sm:$0xff]
    %v1445 = vld [vmem:[#allocation2 + $0xe50] sm:$0xff]
    %v1446 = vld [vmem:[#allocation2 + $0xe58] sm:$0xff]
    %v1447 = vld [vmem:[#allocation2 + $0xe60] sm:$0xff]
    %v1448 = vld [vmem:[#allocation2 + $0xe68] sm:$0xff]
    %v1449 = vld [vmem:[#allocation2 + $0xe70] sm:$0xff]
    %v1450 = vld [vmem:[#allocation2 + $0xe78] sm:$0xff]
    %v1451 = vld [vmem:[#allocation2 + $0xe80] sm:$0xff]
    %v1452 = vld [vmem:[#allocation2 + $0xe88] sm:$0xff]
    %v1453 = vld [vmem:[#allocation2 + $0xe90] sm:$0xff]
    %v1454 = vld [vmem:[#allocation2 + $0xe98] sm:$0xff]
    %v1455 = vld [vmem:[#allocation2 + $0xea0] sm:$0xff]
    %v1456 = vld [vmem:[#allocation2 + $0xea8] sm:$0xff]
    %v1457 = vld [vmem:[#allocation2 + $0xeb0] sm:$0xff]
    %v1458 = vld [vmem:[#allocation2 + $0xeb8] sm:$0xff]
    %v1459 = vld [vmem:[#allocation2 + $0xec0] sm:$0xff]
    %v1460 = vld [vmem:[#allocation2 + $0xec8] sm:$0xff]
    %v1461 = vld [vmem:[#allocation2 + $0xed0] sm:$0xff]
    %v1462 = vld [vmem:[#allocation2 + $0xed8] sm:$0xff]
    %v1463 = vld [vmem:[#allocation2 + $0xee0] sm:$0xff]
    %v1464 = vld [vmem:[#allocation2 + $0xee8] sm:$0xff]
    %v1465 = vld [vmem:[#allocation2 + $0xef0] sm:$0xff]
    %v1466 = vld [vmem:[#allocation2 + $0xef8] sm:$0xff]
    %v1467 = vld [vmem:[#allocation2 + $0xf00] sm:$0xff]
    %v1468 = vld [vmem:[#allocation2 + $0xf08] sm:$0xff]
    %v1469 = vld [vmem:[#allocation2 + $0xf10] sm:$0xff]
    %v1470 = vld [vmem:[#allocation2 + $0xf18] sm:$0xff]
    %v1471 = vld [vmem:[#allocation2 + $0xf20] sm:$0xff]
    %v1472 = vld [vmem:[#allocation2 + $0xf28] sm:$0xff]
    %v1473 = vld [vmem:[#allocation2 + $0xf30] sm:$0xff]
    %v1474 = vld [vmem:[#allocation2 + $0xf38] sm:$0xff]
    %v1475 = vld [vmem:[#allocation2 + $0xf40] sm:$0xff]
    %v1476 = vld [vmem:[#allocation2 + $0xf48] sm:$0xff]
    %v1477 = vld [vmem:[#allocation2 + $0xf50] sm:$0xff]
    %v1478 = vld [vmem:[#allocation2 + $0xf58] sm:$0xff]
    %v1479 = vld [vmem:[#allocation2 + $0xf60] sm:$0xff]
    %v1480 = vld [vmem:[#allocation2 + $0xf68] sm:$0xff]
    %v1481 = vld [vmem:[#allocation2 + $0xf70] sm:$0xff]
    %v1482 = vld [vmem:[#allocation2 + $0xf78] sm:$0xff]
    %v1483 = vld [vmem:[#allocation2 + $0xf80] sm:$0xff]
    %v1484 = vld [vmem:[#allocation2 + $0xf88] sm:$0xff]
    %v1485 = vld [vmem:[#allocation2 + $0xf90] sm:$0xff]
    %v1486 = vld [vmem:[#allocation2 + $0xf98] sm:$0xff]
    %v1487 = vld [vmem:[#allocation2 + $0xfa0] sm:$0xff]
    %v1488 = vld [vmem:[#allocation2 + $0xfa8] sm:$0xff]
    %v1489 = vld [vmem:[#allocation2 + $0xfb0] sm:$0xff]
    %v1490 = vld [vmem:[#allocation2 + $0xfb8] sm:$0xff]
    %v1491 = vld [vmem:[#allocation2 + $0xfc0] sm:$0xff]
    %v1492 = vld [vmem:[#allocation2 + $0xfc8] sm:$0xff]
    %v1493 = vld [vmem:[#allocation2 + $0xfd0] sm:$0xff]
    %v1494 = vld [vmem:[#allocation2 + $0xfd8] sm:$0xff]
    %v1495 = vld [vmem:[#allocation2 + $0xfe0] sm:$0xff]
    %v1496 = vld [vmem:[#allocation2 + $0xfe8] sm:$0xff]
    %v1497 = vld [vmem:[#allocation2 + $0xff0] sm:$0xff]
    %v1498 = vld [vmem:[#allocation2 + $0xff8] sm:$0xff]
    %v1499 = vld [vmem:[#allocation2 + $0x1000] sm:$0xff]
    %v1500 = vld [vmem:[#allocation2 + $0x1008] sm:$0xff]
    %v1501 = vld [vmem:[#allocation2 + $0x1010] sm:$0xff]
    %v1502 = vld [vmem:[#allocation2 + $0x1018] sm:$0xff]
    %v1503 = vld [vmem:[#allocation2 + $0x1020] sm:$0xff]
    %v1504 = vld [vmem:[#allocation2 + $0x1028] sm:$0xff]
    %v1505 = vld [vmem:[#allocation2 + $0x1030] sm:$0xff]
    %v1506 = vld [vmem:[#allocation2 + $0x1038] sm:$0xff]
    %v1507 = vld [vmem:[#allocation2 + $0x1040] sm:$0xff]
    %v1508 = vld [vmem:[#allocation2 + $0x1048] sm:$0xff]
    %v1509 = vld [vmem:[#allocation2 + $0x1050] sm:$0xff]
    %v1510 = vld [vmem:[#allocation2 + $0x1058] sm:$0xff]
    %v1511 = vld [vmem:[#allocation2 + $0x1060] sm:$0xff]
    %v1512 = vld [vmem:[#allocation2 + $0x1068] sm:$0xff]
    %v1513 = vld [vmem:[#allocation2 + $0x1070] sm:$0xff]
    %v1514 = vld [vmem:[#allocation2 + $0x1078] sm:$0xff]
    %v1515 = vld [vmem:[#allocation2 + $0x1080] sm:$0xff]
    %v1516 = vld [vmem:[#allocation2 + $0x1088] sm:$0xff]
    %v1517 = vld [vmem:[#allocation2 + $0x1090] sm:$0xff]
    %v1518 = vld [vmem:[#allocation2 + $0x1098] sm:$0xff]
    %v1519 = vld [vmem:[#allocation2 + $0x10a0] sm:$0xff]
    %v1520 = vld [vmem:[#allocation2 + $0x10a8] sm:$0xff]
    %v1521 = vld [vmem:[#allocation2 + $0x10b0] sm:$0xff]
    %v1522 = vld [vmem:[#allocation2 + $0x10b8] sm:$0xff]
    %v1523 = vld [vmem:[#allocation2 + $0x10c0] sm:$0xff]
    %v1524 = vld [vmem:[#allocation2 + $0x10c8] sm:$0xff]
    %v1525 = vld [vmem:[#allocation2 + $0x10d0] sm:$0xff]
    %v1526 = vld [vmem:[#allocation2 + $0x10d8] sm:$0xff]
    %v1527 = vld [vmem:[#allocation2 + $0x10e0] sm:$0xff]
    %v1528 = vld [vmem:[#allocation2 + $0x10e8] sm:$0xff]
    %v1529 = vld [vmem:[#allocation2 + $0x10f0] sm:$0xff]
    %v1530 = vld [vmem:[#allocation2 + $0x10f8] sm:$0xff]
    %v1531 = vld [vmem:[#allocation2 + $0x1100] sm:$0xff]
    %v1532 = vld [vmem:[#allocation2 + $0x1108] sm:$0xff]
    %v1533 = vld [vmem:[#allocation2 + $0x1110] sm:$0xff]
    %v1534 = vld [vmem:[#allocation2 + $0x1118] sm:$0xff]
    %v1535 = vld [vmem:[#allocation2 + $0x1120] sm:$0xff]
    %v1536 = vld [vmem:[#allocation2 + $0x1128] sm:$0xff]
    %v1537 = vld [vmem:[#allocation2 + $0x1130] sm:$0xff]
    %v1538 = vld [vmem:[#allocation2 + $0x1138] sm:$0xff]
    %v1539 = vld [vmem:[#allocation2 + $0x1140] sm:$0xff]
    %v1540 = vld [vmem:[#allocation2 + $0x1148] sm:$0xff]
    %v1541 = vld [vmem:[#allocation2 + $0x1150] sm:$0xff]
    %v1542 = vld [vmem:[#allocation2 + $0x1158] sm:$0xff]
    %v1543 = vld [vmem:[#allocation2 + $0x1160] sm:$0xff]
    %v1544 = vld [vmem:[#allocation2 + $0x1168] sm:$0xff]
    %v1545 = vld [vmem:[#allocation2 + $0x1170] sm:$0xff]
    %v1546 = vld [vmem:[#allocation2 + $0x1178] sm:$0xff]
    %v1547 = vld [vmem:[#allocation2 + $0x1180] sm:$0xff]
    %v1548 = vld [vmem:[#allocation2 + $0x1188] sm:$0xff]
    %v1549 = vld [vmem:[#allocation2 + $0x1190] sm:$0xff]
    %v1550 = vld [vmem:[#allocation2 + $0x1198] sm:$0xff]
    %v1551 = vld [vmem:[#allocation2 + $0x11a0] sm:$0xff]
    %v1552 = vld [vmem:[#allocation2 + $0x11a8] sm:$0xff]
    %v1553 = vld [vmem:[#allocation2 + $0x11b0] sm:$0xff]
    %v1554 = vld [vmem:[#allocation2 + $0x11b8] sm:$0xff]
    %v1555 = vld [vmem:[#allocation2 + $0x11c0] sm:$0xff]
    %v1556 = vld [vmem:[#allocation2 + $0x11c8] sm:$0xff]
    %v1557 = vld [vmem:[#allocation2 + $0x11d0] sm:$0xff]
    %v1558 = vld [vmem:[#allocation2 + $0x11d8] sm:$0xff]
    %v1559 = vld [vmem:[#allocation2 + $0x11e0] sm:$0xff]
    %v1560 = vld [vmem:[#allocation2 + $0x11e8] sm:$0xff]
    %v1561 = vld [vmem:[#allocation2 + $0x11f0] sm:$0xff]
    %v1562 = vld [vmem:[#allocation2 + $0x11f8] sm:$0xff]
    %v1563 = vld [vmem:[#allocation2 + $0x1200] sm:$0xff]
    %v1564 = vld [vmem:[#allocation2 + $0x1208] sm:$0xff]
    %v1565 = vld [vmem:[#allocation2 + $0x1210] sm:$0xff]
    %v1566 = vld [vmem:[#allocation2 + $0x1218] sm:$0xff]
    %v1567 = vld [vmem:[#allocation2 + $0x1220] sm:$0xff]
    %v1568 = vld [vmem:[#allocation2 + $0x1228] sm:$0xff]
    %v1569 = vld [vmem:[#allocation2 + $0x1230] sm:$0xff]
    %v1570 = vld [vmem:[#allocation2 + $0x1238] sm:$0xff]
    %v1571 = vld [vmem:[#allocation2 + $0x1240] sm:$0xff]
    %v1572 = vld [vmem:[#allocation2 + $0x1248] sm:$0xff]
    %v1573 = vld [vmem:[#allocation2 + $0x1250] sm:$0xff]
    %v1574 = vld [vmem:[#allocation2 + $0x1258] sm:$0xff]
    %v1575 = vld [vmem:[#allocation2 + $0x1260] sm:$0xff]
    %v1576 = vld [vmem:[#allocation2 + $0x1268] sm:$0xff]
    %v1577 = vld [vmem:[#allocation2 + $0x1270] sm:$0xff]
    %v1578 = vld [vmem:[#allocation2 + $0x1278] sm:$0xff]
    %v1579 = vld [vmem:[#allocation2 + $0x1280] sm:$0xff]
    %v1580 = vld [vmem:[#allocation2 + $0x1288] sm:$0xff]
    %v1581 = vld [vmem:[#allocation2 + $0x1290] sm:$0xff]
    %v1582 = vld [vmem:[#allocation2 + $0x1298] sm:$0xff]
    %v1583 = vld [vmem:[#allocation2 + $0x12a0] sm:$0xff]
    %v1584 = vld [vmem:[#allocation2 + $0x12a8] sm:$0xff]
    %v1585 = vld [vmem:[#allocation2 + $0x12b0] sm:$0xff]
    %v1586 = vld [vmem:[#allocation2 + $0x12b8] sm:$0xff]
    %v1587 = vld [vmem:[#allocation2 + $0x12c0] sm:$0xff]
    %v1588 = vld [vmem:[#allocation2 + $0x12c8] sm:$0xff]
    %v1589 = vld [vmem:[#allocation2 + $0x12d0] sm:$0xff]
    %v1590 = vld [vmem:[#allocation2 + $0x12d8] sm:$0xff]
    %v1591 = vld [vmem:[#allocation2 + $0x12e0] sm:$0xff]
    %v1592 = vld [vmem:[#allocation2 + $0x12e8] sm:$0xff]
    %v1593 = vld [vmem:[#allocation2 + $0x12f0] sm:$0xff]
    %v1594 = vld [vmem:[#allocation2 + $0x12f8] sm:$0xff]
    %v1595 = vld [vmem:[#allocation2 + $0x1300] sm:$0xff]
    %v1596 = vld [vmem:[#allocation2 + $0x1308] sm:$0xff]
    %v1597 = vld [vmem:[#allocation2 + $0x1310] sm:$0xff]
    %v1598 = vld [vmem:[#allocation2 + $0x1318] sm:$0xff]
    %v1599 = vld [vmem:[#allocation2 + $0x1320] sm:$0xff]
    %v1600 = vld [vmem:[#allocation2 + $0x1328] sm:$0xff]
    %v1601 = vld [vmem:[#allocation2 + $0x1330] sm:$0xff]
    %v1602 = vld [vmem:[#allocation2 + $0x1338] sm:$0xff]
    %v1603 = vld [vmem:[#allocation2 + $0x1340] sm:$0xff]
    %v1604 = vld [vmem:[#allocation2 + $0x1348] sm:$0xff]
    %v1605 = vld [vmem:[#allocation2 + $0x1350] sm:$0xff]
    %v1606 = vld [vmem:[#allocation2 + $0x1358] sm:$0xff]
    %v1607 = vld [vmem:[#allocation2 + $0x1360] sm:$0xff]
    %v1608 = vld [vmem:[#allocation2 + $0x1368] sm:$0xff]
    %v1609 = vld [vmem:[#allocation2 + $0x1370] sm:$0xff]
    %v1610 = vld [vmem:[#allocation2 + $0x1378] sm:$0xff]
    %v1611 = vld [vmem:[#allocation2 + $0x1380] sm:$0xff]
    %v1612 = vld [vmem:[#allocation2 + $0x1388] sm:$0xff]
    %v1613 = vld [vmem:[#allocation2 + $0x1390] sm:$0xff]
    %v1614 = vld [vmem:[#allocation2 + $0x1398] sm:$0xff]
    %v1615 = vld [vmem:[#allocation2 + $0x13a0] sm:$0xff]
    %v1616 = vld [vmem:[#allocation2 + $0x13a8] sm:$0xff]
    %v1617 = vld [vmem:[#allocation2 + $0x13b0] sm:$0xff]
    %v1618 = vld [vmem:[#allocation2 + $0x13b8] sm:$0xff]
    %v1619 = vld [vmem:[#allocation2 + $0x13c0] sm:$0xff]
    %v1620 = vld [vmem:[#allocation2 + $0x13c8] sm:$0xff]
    %v1621 = vld [vmem:[#allocation2 + $0x13d0] sm:$0xff]
    %v1622 = vld [vmem:[#allocation2 + $0x13d8] sm:$0xff]
    %v1623 = vld [vmem:[#allocation2 + $0x13e0] sm:$0xff]
    %v1624 = vld [vmem:[#allocation2 + $0x13e8] sm:$0xff]
    %v1625 = vld [vmem:[#allocation2 + $0x13f0] sm:$0xff]
    %v1626 = vld [vmem:[#allocation2 + $0x13f8] sm:$0xff]
    %v1627 = vld [vmem:[#allocation2 + $0x1400] sm:$0xff]
    %v1628 = vld [vmem:[#allocation2 + $0x1408] sm:$0xff]
    %v1629 = vld [vmem:[#allocation2 + $0x1410] sm:$0xff]
    %v1630 = vld [vmem:[#allocation2 + $0x1418] sm:$0xff]
    %v1631 = vld [vmem:[#allocation2 + $0x1420] sm:$0xff]
    %v1632 = vld [vmem:[#allocation2 + $0x1428] sm:$0xff]
    %v1633 = vld [vmem:[#allocation2 + $0x1430] sm:$0xff]
    %v1634 = vld [vmem:[#allocation2 + $0x1438] sm:$0xff]
    %v1635 = vld [vmem:[#allocation2 + $0x1440] sm:$0xff]
    %v1636 = vld [vmem:[#allocation2 + $0x1448] sm:$0xff]
    %v1637 = vld [vmem:[#allocation2 + $0x1450] sm:$0xff]
    %v1638 = vld [vmem:[#allocation2 + $0x1458] sm:$0xff]
    %v1639 = vld [vmem:[#allocation2 + $0x1460] sm:$0xff]
    %v1640 = vld [vmem:[#allocation2 + $0x1468] sm:$0xff]
    %v1641 = vld [vmem:[#allocation2 + $0x1470] sm:$0xff]
    %v1642 = vld [vmem:[#allocation2 + $0x1478] sm:$0xff]
    %v1643 = vld [vmem:[#allocation2 + $0x1480] sm:$0xff]
    %v1644 = vld [vmem:[#allocation2 + $0x1488] sm:$0xff]
    %v1645 = vld [vmem:[#allocation2 + $0x1490] sm:$0xff]
    %v1646 = vld [vmem:[#allocation2 + $0x1498] sm:$0xff]
    %v1647 = vld [vmem:[#allocation2 + $0x14a0] sm:$0xff]
    %v1648 = vld [vmem:[#allocation2 + $0x14a8] sm:$0xff]
    %v1649 = vld [vmem:[#allocation2 + $0x14b0] sm:$0xff]
    %v1650 = vld [vmem:[#allocation2 + $0x14b8] sm:$0xff]
    %v1651 = vld [vmem:[#allocation2 + $0x14c0] sm:$0xff]
    %v1652 = vld [vmem:[#allocation2 + $0x14c8] sm:$0xff]
    %v1653 = vld [vmem:[#allocation2 + $0x14d0] sm:$0xff]
    %v1654 = vld [vmem:[#allocation2 + $0x14d8] sm:$0xff]
    %v1655 = vld [vmem:[#allocation2 + $0x14e0] sm:$0xff]
    %v1656 = vld [vmem:[#allocation2 + $0x14e8] sm:$0xff]
    %v1657 = vld [vmem:[#allocation2 + $0x14f0] sm:$0xff]
    %v1658 = vld [vmem:[#allocation2 + $0x14f8] sm:$0xff]
    %v1659 = vld [vmem:[#allocation2 + $0x1500] sm:$0xff]
    %v1660 = vld [vmem:[#allocation2 + $0x1508] sm:$0xff]
    %v1661 = vld [vmem:[#allocation2 + $0x1510] sm:$0xff]
    %v1662 = vld [vmem:[#allocation2 + $0x1518] sm:$0xff]
    %v1663 = vld [vmem:[#allocation2 + $0x1520] sm:$0xff]
    %v1664 = vld [vmem:[#allocation2 + $0x1528] sm:$0xff]
    %v1665 = vld [vmem:[#allocation2 + $0x1530] sm:$0xff]
    %v1666 = vld [vmem:[#allocation2 + $0x1538] sm:$0xff]
    %v1667 = vld [vmem:[#allocation2 + $0x1540] sm:$0xff]
    %v1668 = vld [vmem:[#allocation2 + $0x1548] sm:$0xff]
    %v1669 = vld [vmem:[#allocation2 + $0x1550] sm:$0xff]
    %v1670 = vld [vmem:[#allocation2 + $0x1558] sm:$0xff]
    %v1671 = vld [vmem:[#allocation2 + $0x1560] sm:$0xff]
    %v1672 = vld [vmem:[#allocation2 + $0x1568] sm:$0xff]
    %v1673 = vld [vmem:[#allocation2 + $0x1570] sm:$0xff]
    %v1674 = vld [vmem:[#allocation2 + $0x1578] sm:$0xff]
    %v1675 = vld [vmem:[#allocation2 + $0x1580] sm:$0xff]
    %v1676 = vld [vmem:[#allocation2 + $0x1588] sm:$0xff]
    %v1677 = vld [vmem:[#allocation2 + $0x1590] sm:$0xff]
    %v1678 = vld [vmem:[#allocation2 + $0x1598] sm:$0xff]
    %v1679 = vld [vmem:[#allocation2 + $0x15a0] sm:$0xff]
    %v1680 = vld [vmem:[#allocation2 + $0x15a8] sm:$0xff]
    %v1681 = vld [vmem:[#allocation2 + $0x15b0] sm:$0xff]
    %v1682 = vld [vmem:[#allocation2 + $0x15b8] sm:$0xff]
    %v1683 = vld [vmem:[#allocation2 + $0x15c0] sm:$0xff]
    %v1684 = vld [vmem:[#allocation2 + $0x15c8] sm:$0xff]
    %v1685 = vld [vmem:[#allocation2 + $0x15d0] sm:$0xff]
    %v1686 = vld [vmem:[#allocation2 + $0x15d8] sm:$0xff]
    %v1687 = vld [vmem:[#allocation2 + $0x15e0] sm:$0xff]
    %v1688 = vld [vmem:[#allocation2 + $0x15e8] sm:$0xff]
    %v1689 = vld [vmem:[#allocation2 + $0x15f0] sm:$0xff]
    %v1690 = vld [vmem:[#allocation2 + $0x15f8] sm:$0xff]
    %v1691 = vld [vmem:[#allocation2 + $0x1600] sm:$0xff]
    %v1692 = vld [vmem:[#allocation2 + $0x1608] sm:$0xff]
    %v1693 = vld [vmem:[#allocation2 + $0x1610] sm:$0xff]
    %v1694 = vld [vmem:[#allocation2 + $0x1618] sm:$0xff]
    %v1695 = vld [vmem:[#allocation2 + $0x1620] sm:$0xff]
    %v1696 = vld [vmem:[#allocation2 + $0x1628] sm:$0xff]
    %v1697 = vld [vmem:[#allocation2 + $0x1630] sm:$0xff]
    %v1698 = vld [vmem:[#allocation2 + $0x1638] sm:$0xff]
    %v1699 = vld [vmem:[#allocation2 + $0x1640] sm:$0xff]
    %v1700 = vld [vmem:[#allocation2 + $0x1648] sm:$0xff]
    %v1701 = vld [vmem:[#allocation2 + $0x1650] sm:$0xff]
    %v1702 = vld [vmem:[#allocation2 + $0x1658] sm:$0xff]
    %v1703 = vld [vmem:[#allocation2 + $0x1660] sm:$0xff]
    %v1704 = vld [vmem:[#allocation2 + $0x1668] sm:$0xff]
    %v1705 = vld [vmem:[#allocation2 + $0x1670] sm:$0xff]
    %v1706 = vld [vmem:[#allocation2 + $0x1678] sm:$0xff]
    %v1707 = vld [vmem:[#allocation2 + $0x1680] sm:$0xff]
    %v1708 = vld [vmem:[#allocation2 + $0x1688] sm:$0xff]
    %v1709 = vld [vmem:[#allocation2 + $0x1690] sm:$0xff]
    %v1710 = vld [vmem:[#allocation2 + $0x1698] sm:$0xff]
    %v1711 = vld [vmem:[#allocation2 + $0x16a0] sm:$0xff]
    %v1712 = vld [vmem:[#allocation2 + $0x16a8] sm:$0xff]
    %v1713 = vld [vmem:[#allocation2 + $0x16b0] sm:$0xff]
    %v1714 = vld [vmem:[#allocation2 + $0x16b8] sm:$0xff]
    %v1715 = vld [vmem:[#allocation2 + $0x16c0] sm:$0xff]
    %v1716 = vld [vmem:[#allocation2 + $0x16c8] sm:$0xff]
    %v1717 = vld [vmem:[#allocation2 + $0x16d0] sm:$0xff]
    %v1718 = vld [vmem:[#allocation2 + $0x16d8] sm:$0xff]
    %v1719 = vld [vmem:[#allocation2 + $0x16e0] sm:$0xff]
    %v1720 = vld [vmem:[#allocation2 + $0x16e8] sm:$0xff]
    %v1721 = vld [vmem:[#allocation2 + $0x16f0] sm:$0xff]
    %v1722 = vld [vmem:[#allocation2 + $0x16f8] sm:$0xff]
    %v1723 = vld [vmem:[#allocation2 + $0x1700] sm:$0xff]
    %v1724 = vld [vmem:[#allocation2 + $0x1708] sm:$0xff]
    %v1725 = vld [vmem:[#allocation2 + $0x1710] sm:$0xff]
    %v1726 = vld [vmem:[#allocation2 + $0x1718] sm:$0xff]
    %v1727 = vld [vmem:[#allocation2 + $0x1720] sm:$0xff]
    %v1728 = vld [vmem:[#allocation2 + $0x1728] sm:$0xff]
    %v1729 = vld [vmem:[#allocation2 + $0x1730] sm:$0xff]
    %v1730 = vld [vmem:[#allocation2 + $0x1738] sm:$0xff]
    %v1731 = vld [vmem:[#allocation2 + $0x1740] sm:$0xff]
    %v1732 = vld [vmem:[#allocation2 + $0x1748] sm:$0xff]
    %v1733 = vld [vmem:[#allocation2 + $0x1750] sm:$0xff]
    %v1734 = vld [vmem:[#allocation2 + $0x1758] sm:$0xff]
    %v1735 = vld [vmem:[#allocation2 + $0x1760] sm:$0xff]
    %v1736 = vld [vmem:[#allocation2 + $0x1768] sm:$0xff]
    %v1737 = vld [vmem:[#allocation2 + $0x1770] sm:$0xff]
    %v1738 = vld [vmem:[#allocation2 + $0x1778] sm:$0xff]
    %v1739 = vld [vmem:[#allocation2 + $0x1780] sm:$0xff]
    %v1740 = vld [vmem:[#allocation2 + $0x1788] sm:$0xff]
    %v1741 = vld [vmem:[#allocation2 + $0x1790] sm:$0xff]
    %v1742 = vld [vmem:[#allocation2 + $0x1798] sm:$0xff]
    %v1743 = vld [vmem:[#allocation2 + $0x17a0] sm:$0xff]
    %v1744 = vld [vmem:[#allocation2 + $0x17a8] sm:$0xff]
    %v1745 = vld [vmem:[#allocation2 + $0x17b0] sm:$0xff]
    %v1746 = vld [vmem:[#allocation2 + $0x17b8] sm:$0xff]
    %v1747 = vld [vmem:[#allocation2 + $0x17c0] sm:$0xff]
    %v1748 = vld [vmem:[#allocation2 + $0x17c8] sm:$0xff]
    %v1749 = vld [vmem:[#allocation2 + $0x17d0] sm:$0xff]
    %v1750 = vld [vmem:[#allocation2 + $0x17d8] sm:$0xff]
    %v1751 = vld [vmem:[#allocation2 + $0x17e0] sm:$0xff]
    %v1752 = vld [vmem:[#allocation2 + $0x17e8] sm:$0xff]
    %v1753 = vld [vmem:[#allocation2 + $0x17f0] sm:$0xff]
    %v1754 = vld [vmem:[#allocation2 + $0x17f8] sm:$0xff]
    %v1755 = vld [vmem:[#allocation2 + $0x1800] sm:$0xff]
    %v1756 = vld [vmem:[#allocation2 + $0x1808] sm:$0xff]
    %v1757 = vld [vmem:[#allocation2 + $0x1810] sm:$0xff]
    %v1758 = vld [vmem:[#allocation2 + $0x1818] sm:$0xff]
    %v1759 = vld [vmem:[#allocation2 + $0x1820] sm:$0xff]
    %v1760 = vld [vmem:[#allocation2 + $0x1828] sm:$0xff]
    %v1761 = vld [vmem:[#allocation2 + $0x1830] sm:$0xff]
    %v1762 = vld [vmem:[#allocation2 + $0x1838] sm:$0xff]
    %v1763 = vld [vmem:[#allocation2 + $0x1840] sm:$0xff]
    %v1764 = vld [vmem:[#allocation2 + $0x1848] sm:$0xff]
    %v1765 = vld [vmem:[#allocation2 + $0x1850] sm:$0xff]
    %v1766 = vld [vmem:[#allocation2 + $0x1858] sm:$0xff]
    %v1767 = vld [vmem:[#allocation2 + $0x1860] sm:$0xff]
    %v1768 = vld [vmem:[#allocation2 + $0x1868] sm:$0xff]
    %v1769 = vld [vmem:[#allocation2 + $0x1870] sm:$0xff]
    %v1770 = vld [vmem:[#allocation2 + $0x1878] sm:$0xff]
    %v1771 = vld [vmem:[#allocation2 + $0x1880] sm:$0xff]
    %v1772 = vld [vmem:[#allocation2 + $0x1888] sm:$0xff]
    %v1773 = vld [vmem:[#allocation2 + $0x1890] sm:$0xff]
    %v1774 = vld [vmem:[#allocation2 + $0x1898] sm:$0xff]
    %v1775 = vld [vmem:[#allocation2 + $0x18a0] sm:$0xff]
    %v1776 = vld [vmem:[#allocation2 + $0x18a8] sm:$0xff]
    %v1777 = vld [vmem:[#allocation2 + $0x18b0] sm:$0xff]
    %v1778 = vld [vmem:[#allocation2 + $0x18b8] sm:$0xff]
    %v1779 = vld [vmem:[#allocation2 + $0x18c0] sm:$0xff]
    %v1780 = vld [vmem:[#allocation2 + $0x18c8] sm:$0xff]
    %v1781 = vld [vmem:[#allocation2 + $0x18d0] sm:$0xff]
    %v1782 = vld [vmem:[#allocation2 + $0x18d8] sm:$0xff]
    %v1783 = vld [vmem:[#allocation2 + $0x18e0] sm:$0xff]
    %v1784 = vld [vmem:[#allocation2 + $0x18e8] sm:$0xff]
    %v1785 = vld [vmem:[#allocation2 + $0x18f0] sm:$0xff]
    %v1786 = vld [vmem:[#allocation2 + $0x18f8] sm:$0xff]
    %v1787 = vld [vmem:[#allocation2 + $0x1900] sm:$0xff]
    %v1788 = vld [vmem:[#allocation2 + $0x1908] sm:$0xff]
    %v1789 = vld [vmem:[#allocation2 + $0x1910] sm:$0xff]
    %v1790 = vld [vmem:[#allocation2 + $0x1918] sm:$0xff]
    %v1791 = vld [vmem:[#allocation2 + $0x1920] sm:$0xff]
    %v1792 = vld [vmem:[#allocation2 + $0x1928] sm:$0xff]
    %v1793 = vld [vmem:[#allocation2 + $0x1930] sm:$0xff]
    %v1794 = vld [vmem:[#allocation2 + $0x1938] sm:$0xff]
    %v1795 = vld [vmem:[#allocation2 + $0x1940] sm:$0xff]
    %v1796 = vld [vmem:[#allocation2 + $0x1948] sm:$0xff]
    %v1797 = vld [vmem:[#allocation2 + $0x1950] sm:$0xff]
    %v1798 = vld [vmem:[#allocation2 + $0x1958] sm:$0xff]
    %v1799 = vld [vmem:[#allocation2 + $0x1960] sm:$0xff]
    %v1800 = vld [vmem:[#allocation2 + $0x1968] sm:$0xff]
    %v1801 = vld [vmem:[#allocation2 + $0x1970] sm:$0xff]
    %v1802 = vld [vmem:[#allocation2 + $0x1978] sm:$0xff]
    %v1803 = vld [vmem:[#allocation2 + $0x1980] sm:$0xff]
    %v1804 = vld [vmem:[#allocation2 + $0x1988] sm:$0xff]
    %v1805 = vld [vmem:[#allocation2 + $0x1990] sm:$0xff]
    %v1806 = vld [vmem:[#allocation2 + $0x1998] sm:$0xff]
    %v1807 = vld [vmem:[#allocation2 + $0x19a0] sm:$0xff]
    %v1808 = vld [vmem:[#allocation2 + $0x19a8] sm:$0xff]
    %v1809 = vld [vmem:[#allocation2 + $0x19b0] sm:$0xff]
    %v1810 = vld [vmem:[#allocation2 + $0x19b8] sm:$0xff]
    %v1811 = vld [vmem:[#allocation2 + $0x19c0] sm:$0xff]
    %v1812 = vld [vmem:[#allocation2 + $0x19c8] sm:$0xff]
    %v1813 = vld [vmem:[#allocation2 + $0x19d0] sm:$0xff]
    %v1814 = vld [vmem:[#allocation2 + $0x19d8] sm:$0xff]
    %v1815 = vld [vmem:[#allocation2 + $0x19e0] sm:$0xff]
    %v1816 = vld [vmem:[#allocation2 + $0x19e8] sm:$0xff]
    %v1817 = vld [vmem:[#allocation2 + $0x19f0] sm:$0xff]
    %v1818 = vld [vmem:[#allocation2 + $0x19f8] sm:$0xff]
    %v1819 = vld [vmem:[#allocation2 + $0x1a00] sm:$0xff]
    %v1820 = vld [vmem:[#allocation2 + $0x1a08] sm:$0xff]
    %v1821 = vld [vmem:[#allocation2 + $0x1a10] sm:$0xff]
    %v1822 = vld [vmem:[#allocation2 + $0x1a18] sm:$0xff]
    %v1823 = vld [vmem:[#allocation2 + $0x1a20] sm:$0xff]
    %v1824 = vld [vmem:[#allocation2 + $0x1a28] sm:$0xff]
    %v1825 = vld [vmem:[#allocation2 + $0x1a30] sm:$0xff]
    %v1826 = vld [vmem:[#allocation2 + $0x1a38] sm:$0xff]
    %v1827 = vld [vmem:[#allocation2 + $0x1a40] sm:$0xff]
    %v1828 = vld [vmem:[#allocation2 + $0x1a48] sm:$0xff]
    %v1829 = vld [vmem:[#allocation2 + $0x1a50] sm:$0xff]
    %v1830 = vld [vmem:[#allocation2 + $0x1a58] sm:$0xff]
    %v1831 = vld [vmem:[#allocation2 + $0x1a60] sm:$0xff]
    %v1832 = vld [vmem:[#allocation2 + $0x1a68] sm:$0xff]
    %v1833 = vld [vmem:[#allocation2 + $0x1a70] sm:$0xff]
    %v1834 = vld [vmem:[#allocation2 + $0x1a78] sm:$0xff]
    %v1835 = vld [vmem:[#allocation2 + $0x1a80] sm:$0xff]
    %v1836 = vld [vmem:[#allocation2 + $0x1a88] sm:$0xff]
    %v1837 = vld [vmem:[#allocation2 + $0x1a90] sm:$0xff]
    %v1838 = vld [vmem:[#allocation2 + $0x1a98] sm:$0xff]
    %v1839 = vld [vmem:[#allocation2 + $0x1aa0] sm:$0xff]
    %v1840 = vld [vmem:[#allocation2 + $0x1aa8] sm:$0xff]
    %v1841 = vld [vmem:[#allocation2 + $0x1ab0] sm:$0xff]
    %v1842 = vld [vmem:[#allocation2 + $0x1ab8] sm:$0xff]
    %v1843 = vld [vmem:[#allocation2 + $0x1ac0] sm:$0xff]
    %v1844 = vld [vmem:[#allocation2 + $0x1ac8] sm:$0xff]
    %v1845 = vld [vmem:[#allocation2 + $0x1ad0] sm:$0xff]
    %v1846 = vld [vmem:[#allocation2 + $0x1ad8] sm:$0xff]
    %v1847 = vld [vmem:[#allocation2 + $0x1ae0] sm:$0xff]
    %v1848 = vld [vmem:[#allocation2 + $0x1ae8] sm:$0xff]
    %v1849 = vld [vmem:[#allocation2 + $0x1af0] sm:$0xff]
    %v1850 = vld [vmem:[#allocation2 + $0x1af8] sm:$0xff]
    %v1851 = vld [vmem:[#allocation2 + $0x1b00] sm:$0xff]
    %v1852 = vld [vmem:[#allocation2 + $0x1b08] sm:$0xff]
    %v1853 = vld [vmem:[#allocation2 + $0x1b10] sm:$0xff]
    %v1854 = vld [vmem:[#allocation2 + $0x1b18] sm:$0xff]
    %v1855 = vld [vmem:[#allocation2 + $0x1b20] sm:$0xff]
    %v1856 = vld [vmem:[#allocation2 + $0x1b28] sm:$0xff]
    %v1857 = vld [vmem:[#allocation2 + $0x1b30] sm:$0xff]
    %v1858 = vld [vmem:[#allocation2 + $0x1b38] sm:$0xff]
    %v1859 = vld [vmem:[#allocation2 + $0x1b40] sm:$0xff]
    %v1860 = vld [vmem:[#allocation2 + $0x1b48] sm:$0xff]
    %v1861 = vld [vmem:[#allocation2 + $0x1b50] sm:$0xff]
    %v1862 = vld [vmem:[#allocation2 + $0x1b58] sm:$0xff]
    %v1863 = vld [vmem:[#allocation2 + $0x1b60] sm:$0xff]
    %v1864 = vld [vmem:[#allocation2 + $0x1b68] sm:$0xff]
    %v1865 = vld [vmem:[#allocation2 + $0x1b70] sm:$0xff]
    %v1866 = vld [vmem:[#allocation2 + $0x1b78] sm:$0xff]
    %v1867 = vld [vmem:[#allocation2 + $0x1b80] sm:$0xff]
    %v1868 = vld [vmem:[#allocation2 + $0x1b88] sm:$0xff]
    %v1869 = vld [vmem:[#allocation2 + $0x1b90] sm:$0xff]
    %v1870 = vld [vmem:[#allocation2 + $0x1b98] sm:$0xff]
    %v1871 = vld [vmem:[#allocation2 + $0x1ba0] sm:$0xff]
    %v1872 = vld [vmem:[#allocation2 + $0x1ba8] sm:$0xff]
    %v1873 = vld [vmem:[#allocation2 + $0x1bb0] sm:$0xff]
    %v1874 = vld [vmem:[#allocation2 + $0x1bb8] sm:$0xff]
    %v1875 = vld [vmem:[#allocation2 + $0x1bc0] sm:$0xff]
    %v1876 = vld [vmem:[#allocation2 + $0x1bc8] sm:$0xff]
    %v1877 = vld [vmem:[#allocation2 + $0x1bd0] sm:$0xff]
    %v1878 = vld [vmem:[#allocation2 + $0x1bd8] sm:$0xff]
    %v1879 = vld [vmem:[#allocation2 + $0x1be0] sm:$0xff]
    %v1880 = vld [vmem:[#allocation2 + $0x1be8] sm:$0xff]
    %v1881 = vld [vmem:[#allocation2 + $0x1bf0] sm:$0xff]
    %v1882 = vld [vmem:[#allocation2 + $0x1bf8] sm:$0xff]
    %v1883 = vld [vmem:[#allocation2 + $0x1c00] sm:$0xff]
    %v1884 = vld [vmem:[#allocation2 + $0x1c08] sm:$0xff]
    %v1885 = vld [vmem:[#allocation2 + $0x1c10] sm:$0xff]
    %v1886 = vld [vmem:[#allocation2 + $0x1c18] sm:$0xff]
    %v1887 = vld [vmem:[#allocation2 + $0x1c20] sm:$0xff]
    %v1888 = vld [vmem:[#allocation2 + $0x1c28] sm:$0xff]
    %v1889 = vld [vmem:[#allocation2 + $0x1c30] sm:$0xff]
    %v1890 = vld [vmem:[#allocation2 + $0x1c38] sm:$0xff]
    %v1891 = vld [vmem:[#allocation2 + $0x1c40] sm:$0xff]
    %v1892 = vld [vmem:[#allocation2 + $0x1c48] sm:$0xff]
    %v1893 = vld [vmem:[#allocation2 + $0x1c50] sm:$0xff]
    %v1894 = vld [vmem:[#allocation2 + $0x1c58] sm:$0xff]
    %v1895 = vld [vmem:[#allocation2 + $0x1c60] sm:$0xff]
    %v1896 = vld [vmem:[#allocation2 + $0x1c68] sm:$0xff]
    %v1897 = vld [vmem:[#allocation2 + $0x1c70] sm:$0xff]
    %v1898 = vld [vmem:[#allocation2 + $0x1c78] sm:$0xff]
    %v1899 = vld [vmem:[#allocation2 + $0x1c80] sm:$0xff]
    %v1900 = vld [vmem:[#allocation2 + $0x1c88] sm:$0xff]
    %v1901 = vld [vmem:[#allocation2 + $0x1c90] sm:$0xff]
    %v1902 = vld [vmem:[#allocation2 + $0x1c98] sm:$0xff]
    %v1903 = vld [vmem:[#allocation2 + $0x1ca0] sm:$0xff]
    %v1904 = vld [vmem:[#allocation2 + $0x1ca8] sm:$0xff]
    %v1905 = vld [vmem:[#allocation2 + $0x1cb0] sm:$0xff]
    %v1906 = vld [vmem:[#allocation2 + $0x1cb8] sm:$0xff]
    %v1907 = vld [vmem:[#allocation2 + $0x1cc0] sm:$0xff]
    %v1908 = vld [vmem:[#allocation2 + $0x1cc8] sm:$0xff]
    %v1909 = vld [vmem:[#allocation2 + $0x1cd0] sm:$0xff]
    %v1910 = vld [vmem:[#allocation2 + $0x1cd8] sm:$0xff]
    %v1911 = vld [vmem:[#allocation2 + $0x1ce0] sm:$0xff]
    %v1912 = vld [vmem:[#allocation2 + $0x1ce8] sm:$0xff]
    %v1913 = vld [vmem:[#allocation2 + $0x1cf0] sm:$0xff]
    %v1914 = vld [vmem:[#allocation2 + $0x1cf8] sm:$0xff]
    %v1915 = vld [vmem:[#allocation2 + $0x1d00] sm:$0xff]
    %v1916 = vld [vmem:[#allocation2 + $0x1d08] sm:$0xff]
    %v1917 = vld [vmem:[#allocation2 + $0x1d10] sm:$0xff]
    %v1918 = vld [vmem:[#allocation2 + $0x1d18] sm:$0xff]
    %v1919 = vld [vmem:[#allocation2 + $0x1d20] sm:$0xff]
    %v1920 = vld [vmem:[#allocation2 + $0x1d28] sm:$0xff]
    %v1921 = vld [vmem:[#allocation2 + $0x1d30] sm:$0xff]
    %v1922 = vld [vmem:[#allocation2 + $0x1d38] sm:$0xff]
    %v1923 = vld [vmem:[#allocation2 + $0x1d40] sm:$0xff]
    %v1924 = vld [vmem:[#allocation2 + $0x1d48] sm:$0xff]
    %v1925 = vld [vmem:[#allocation2 + $0x1d50] sm:$0xff]
    %v1926 = vld [vmem:[#allocation2 + $0x1d58] sm:$0xff]
    %v1927 = vld [vmem:[#allocation2 + $0x1d60] sm:$0xff]
    %v1928 = vld [vmem:[#allocation2 + $0x1d68] sm:$0xff]
    %v1929 = vld [vmem:[#allocation2 + $0x1d70] sm:$0xff]
    %v1930 = vld [vmem:[#allocation2 + $0x1d78] sm:$0xff]
    %v1931 = vld [vmem:[#allocation2 + $0x1d80] sm:$0xff]
    %v1932 = vld [vmem:[#allocation2 + $0x1d88] sm:$0xff]
    %v1933 = vld [vmem:[#allocation2 + $0x1d90] sm:$0xff]
    %v1934 = vld [vmem:[#allocation2 + $0x1d98] sm:$0xff]
    %v1935 = vld [vmem:[#allocation2 + $0x1da0] sm:$0xff]
    %v1936 = vld [vmem:[#allocation2 + $0x1da8] sm:$0xff]
    %v1937 = vld [vmem:[#allocation2 + $0x1db0] sm:$0xff]
    %v1938 = vld [vmem:[#allocation2 + $0x1db8] sm:$0xff]
    %v1939 = vld [vmem:[#allocation2 + $0x1dc0] sm:$0xff]
    %v1940 = vld [vmem:[#allocation2 + $0x1dc8] sm:$0xff]
    %v1941 = vld [vmem:[#allocation2 + $0x1dd0] sm:$0xff]
    %v1942 = vld [vmem:[#allocation2 + $0x1dd8] sm:$0xff]
    %v1943 = vld [vmem:[#allocation2 + $0x1de0] sm:$0xff]
    %v1944 = vld [vmem:[#allocation2 + $0x1de8] sm:$0xff]
    %v1945 = vld [vmem:[#allocation2 + $0x1df0] sm:$0xff]
    %v1946 = vld [vmem:[#allocation2 + $0x1df8] sm:$0xff]
    %v1947 = vld [vmem:[#allocation2 + $0x1e00] sm:$0xff]
    %v1948 = vld [vmem:[#allocation2 + $0x1e08] sm:$0xff]
    %v1949 = vld [vmem:[#allocation2 + $0x1e10] sm:$0xff]
    %v1950 = vld [vmem:[#allocation2 + $0x1e18] sm:$0xff]
    %v1951 = vld [vmem:[#allocation2 + $0x1e20] sm:$0xff]
    %v1952 = vld [vmem:[#allocation2 + $0x1e28] sm:$0xff]
    %v1953 = vld [vmem:[#allocation2 + $0x1e30] sm:$0xff]
    %v1954 = vld [vmem:[#allocation2 + $0x1e38] sm:$0xff]
    %v1955 = vld [vmem:[#allocation2 + $0x1e40] sm:$0xff]
    %v1956 = vld [vmem:[#allocation2 + $0x1e48] sm:$0xff]
    %v1957 = vld [vmem:[#allocation2 + $0x1e50] sm:$0xff]
    %v1958 = vld [vmem:[#allocation2 + $0x1e58] sm:$0xff]
    %v1959 = vld [vmem:[#allocation2 + $0x1e60] sm:$0xff]
    %v1960 = vld [vmem:[#allocation2 + $0x1e68] sm:$0xff]
    %v1961 = vld [vmem:[#allocation2 + $0x1e70] sm:$0xff]
    %v1962 = vld [vmem:[#allocation2 + $0x1e78] sm:$0xff]
    %v1963 = vld [vmem:[#allocation2 + $0x1e80] sm:$0xff]
    %v1964 = vld [vmem:[#allocation2 + $0x1e88] sm:$0xff]
    %v1965 = vld [vmem:[#allocation2 + $0x1e90] sm:$0xff]
    %v1966 = vld [vmem:[#allocation2 + $0x1e98] sm:$0xff]
    %v1967 = vld [vmem:[#allocation2 + $0x1ea0] sm:$0xff]
    %v1968 = vld [vmem:[#allocation2 + $0x1ea8] sm:$0xff]
    %v1969 = vld [vmem:[#allocation2 + $0x1eb0] sm:$0xff]
    %v1970 = vld [vmem:[#allocation2 + $0x1eb8] sm:$0xff]
    %v1971 = vld [vmem:[#allocation2 + $0x1ec0] sm:$0xff]
    %v1972 = vld [vmem:[#allocation2 + $0x1ec8] sm:$0xff]
    %v1973 = vld [vmem:[#allocation2 + $0x1ed0] sm:$0xff]
    %v1974 = vld [vmem:[#allocation2 + $0x1ed8] sm:$0xff]
    %v1975 = vld [vmem:[#allocation2 + $0x1ee0] sm:$0xff]
    %v1976 = vld [vmem:[#allocation2 + $0x1ee8] sm:$0xff]
    %v1977 = vld [vmem:[#allocation2 + $0x1ef0] sm:$0xff]
    %v1978 = vld [vmem:[#allocation2 + $0x1ef8] sm:$0xff]
    %v1979 = vld [vmem:[#allocation2 + $0x1f00] sm:$0xff]
    %v1980 = vld [vmem:[#allocation2 + $0x1f08] sm:$0xff]
    %v1981 = vld [vmem:[#allocation2 + $0x1f10] sm:$0xff]
    %v1982 = vld [vmem:[#allocation2 + $0x1f18] sm:$0xff]
    %v1983 = vld [vmem:[#allocation2 + $0x1f20] sm:$0xff]
    %v1984 = vld [vmem:[#allocation2 + $0x1f28] sm:$0xff]
    %v1985 = vld [vmem:[#allocation2 + $0x1f30] sm:$0xff]
    %v1986 = vld [vmem:[#allocation2 + $0x1f38] sm:$0xff]
    %v1987 = vld [vmem:[#allocation2 + $0x1f40] sm:$0xff]
    %v1988 = vld [vmem:[#allocation2 + $0x1f48] sm:$0xff]
    %v1989 = vld [vmem:[#allocation2 + $0x1f50] sm:$0xff]
    %v1990 = vld [vmem:[#allocation2 + $0x1f58] sm:$0xff]
    %v1991 = vld [vmem:[#allocation2 + $0x1f60] sm:$0xff]
    %v1992 = vld [vmem:[#allocation2 + $0x1f68] sm:$0xff]
    %v1993 = vld [vmem:[#allocation2 + $0x1f70] sm:$0xff]
    %v1994 = vld [vmem:[#allocation2 + $0x1f78] sm:$0xff]
    %v1995 = vld [vmem:[#allocation2 + $0x1f80] sm:$0xff]
    %v1996 = vld [vmem:[#allocation2 + $0x1f88] sm:$0xff]
    %v1997 = vld [vmem:[#allocation2 + $0x1f90] sm:$0xff]
    %v1998 = vld [vmem:[#allocation2 + $0x1f98] sm:$0xff]
    %v1999 = vld [vmem:[#allocation2 + $0x1fa0] sm:$0xff]
    %v2000 = vld [vmem:[#allocation2 + $0x1fa8] sm:$0xff]
    %v2001 = vld [vmem:[#allocation2 + $0x1fb0] sm:$0xff]
    %v2002 = vld [vmem:[#allocation2 + $0x1fb8] sm:$0xff]
    %v2003 = vld [vmem:[#allocation2 + $0x1fc0] sm:$0xff]
    %v2004 = vld [vmem:[#allocation2 + $0x1fc8] sm:$0xff]
    %v2005 = vld [vmem:[#allocation2 + $0x1fd0] sm:$0xff]
    %v2006 = vld [vmem:[#allocation2 + $0x1fd8] sm:$0xff]
    %v2007 = vld [vmem:[#allocation2 + $0x1fe0] sm:$0xff]
    %v2008 = vld [vmem:[#allocation2 + $0x1fe8] sm:$0xff]
    %v2009 = vld [vmem:[#allocation2 + $0x1ff0] sm:$0xff]
    %v2010 = vld [vmem:[#allocation2 + $0x1ff8] sm:$0xff]
    %v2011 = vld [vmem:[#allocation9] sm:$0xff]
    %v2013 = vlaneseq
    %v2014 = vshrl.u32 %v2013, 7
    %v2015 = vsub.s32 0, %v2014
    %v2016 = vrot.slane %v2011, %v2015
    %v2017 = vlaneseq
    %v2018 = vshrl.u32 %v2017, 7
    %v2019 = vsub.s32 1, %v2018
    %v2020 = vrot.slane %v2011, %v2019
    %v2021 = vlaneseq
    %v2022 = vshrl.u32 %v2021, 7
    %v2023 = vsub.s32 2, %v2022
    %v2024 = vrot.slane %v2011, %v2023
    %v2025 = vlaneseq
    %v2026 = vshrl.u32 %v2025, 7
    %v2027 = vsub.s32 3, %v2026
    %v2028 = vrot.slane %v2011, %v2027
    %v2029 = vlaneseq
    %v2030 = vshrl.u32 %v2029, 7
    %v2031 = vsub.s32 4, %v2030
    %v2032 = vrot.slane %v2011, %v2031
    %v2033 = vlaneseq
    %v2034 = vshrl.u32 %v2033, 7
    %v2035 = vsub.s32 5, %v2034
    %v2036 = vrot.slane %v2011, %v2035
    %v2037 = vlaneseq
    %v2038 = vshrl.u32 %v2037, 7
    %v2039 = vsub.s32 6, %v2038
    %v2040 = vrot.slane %v2011, %v2039
    %v2041 = vlaneseq
    %v2042 = vshrl.u32 %v2041, 7
    %v2043 = vsub.s32 7, %v2042
    %v2044 = vrot.slane %v2011, %v2043
    %2053 = vmatprep.subr.bf16.mxu0 %v988
    %2054 = vmatpush1.bf16.msra.mxu0 %v987
    %2055 = vmatprep.subr.bf16.mxu0 %v996
    %2056 = vmatpush1.bf16.msra.mxu0 %v995
    %2057 = vmatprep.subr.bf16.mxu0 %v1004
    %2058 = vmatpush1.bf16.msra.mxu0 %v1003
    %2059 = vmatprep.subr.bf16.mxu0 %v1012
    %2060 = vmatpush1.bf16.msra.mxu0 %v1011
    %2061 = vmatprep.subr.bf16.mxu0 %v1020
    %2062 = vmatpush1.bf16.msra.mxu0 %v1019
    %2063 = vmatprep.subr.bf16.mxu0 %v1028
    %2064 = vmatpush1.bf16.msra.mxu0 %v1027
    %2065 = vmatprep.subr.bf16.mxu0 %v1036
    %2066 = vmatpush1.bf16.msra.mxu0 %v1035
    %2067 = vmatprep.subr.bf16.mxu0 %v1044
    %2068 = vmatpush1.bf16.msra.mxu0 %v1043
    %2069 = vmatprep.subr.bf16.mxu0 %v1052
    %2070 = vmatpush1.bf16.msra.mxu0 %v1051
    %2071 = vmatprep.subr.bf16.mxu0 %v1060
    %2072 = vmatpush1.bf16.msra.mxu0 %v1059
    %2073 = vmatprep.subr.bf16.mxu0 %v1068
    %2074 = vmatpush1.bf16.msra.mxu0 %v1067
    %2075 = vmatprep.subr.bf16.mxu0 %v1076
    %2076 = vmatpush1.bf16.msra.mxu0 %v1075
    %2077 = vmatprep.subr.bf16.mxu0 %v1084
    %2078 = vmatpush1.bf16.msra.mxu0 %v1083
    %2079 = vmatprep.subr.bf16.mxu0 %v1092
    %2080 = vmatpush1.bf16.msra.mxu0 %v1091
    %2081 = vmatprep.subr.bf16.mxu0 %v1100
    %2082 = vmatpush1.bf16.msra.mxu0 %v1099
    %2083 = vmatprep.subr.bf16.mxu0 %v1108
    %2084 = vmatpush1.bf16.msra.mxu0 %v1107
    %2085 = vmatprep.mubr.bf16.mxu0 %v968
    %2086 = vmatmul.mubr.bf16.gmra.mrb[0].mxu0 %v967
    %v2087 = vpop.f32.mrb[0].mxu0
    %v2088 = vadd.f32 %v2016, %v2087
    %v2089 = vpop.f32.mrb[0].mxu0
    %v2090 = vadd.f32 %v2020, %v2089
    %v2091 = vpop.f32.mrb[0].mxu0
    %v2092 = vpop.f32.mrb[0].mxu0
    %2093 = vdwg.mxu0
    %2094 = vmatprep.subr.bf16.mxu0 %v1116
    %2095 = vmatpush1.bf16.msra.mxu0 %v1115
    %2096 = vmatprep.subr.bf16.mxu0 %v1124
    %2097 = vmatpush1.bf16.msra.mxu0 %v1123
    %2098 = vmatprep.subr.bf16.mxu0 %v1132
    %2099 = vmatpush1.bf16.msra.mxu0 %v1131
    %2100 = vmatprep.subr.bf16.mxu0 %v1140
    %2101 = vmatpush1.bf16.msra.mxu0 %v1139
    %2102 = vmatprep.subr.bf16.mxu0 %v1148
    %2103 = vmatpush1.bf16.msra.mxu0 %v1147
    %2104 = vmatprep.subr.bf16.mxu0 %v1156
    %2105 = vmatpush1.bf16.msra.mxu0 %v1155
    %2106 = vmatprep.subr.bf16.mxu0 %v1164
    %2107 = vmatpush1.bf16.msra.mxu0 %v1163
    %2108 = vmatprep.subr.bf16.mxu0 %v1172
    %2109 = vmatpush1.bf16.msra.mxu0 %v1171
    %2110 = vmatprep.subr.bf16.mxu0 %v1180
    %2111 = vmatpush1.bf16.msra.mxu0 %v1179
    %2112 = vmatprep.subr.bf16.mxu0 %v1188
    %2113 = vmatpush1.bf16.msra.mxu0 %v1187
    %2114 = vmatprep.subr.bf16.mxu0 %v1196
    %2115 = vmatpush1.bf16.msra.mxu0 %v1195
    %2116 = vmatprep.subr.bf16.mxu0 %v1204
    %2117 = vmatpush1.bf16.msra.mxu0 %v1203
    %2118 = vmatprep.subr.bf16.mxu0 %v1212
    %2119 = vmatpush1.bf16.msra.mxu0 %v1211
    %2120 = vmatprep.subr.bf16.mxu0 %v1220
    %2121 = vmatpush1.bf16.msra.mxu0 %v1219
    %2122 = vmatprep.subr.bf16.mxu0 %v1228
    %2123 = vmatpush1.bf16.msra.mxu0 %v1227
    %2124 = vmatprep.subr.bf16.mxu0 %v1236
    %2125 = vmatpush1.bf16.msra.mxu0 %v1235
    %2126 = vmatprep.mubr.bf16.mxu0 %v970
    %2127 = vmatmul.mubr.bf16.gmra.mrb[0].mxu0 %v969
    %v2128 = vpop.f32.mrb[0].mxu0
    %v2129 = vadd.f32 %v2088, %v2128
    %v2130 = vpop.f32.mrb[0].mxu0
    %v2131 = vadd.f32 %v2090, %v2130
    %v2132 = vpop.f32.mrb[0].mxu0
    %v2133 = vpop.f32.mrb[0].mxu0
    %2134 = vdwg.mxu0
    %2135 = vmatprep.subr.bf16.mxu0 %v1244
    %2136 = vmatpush1.bf16.msra.mxu0 %v1243
    %2137 = vmatprep.subr.bf16.mxu0 %v1252
    %2138 = vmatpush1.bf16.msra.mxu0 %v1251
    %2139 = vmatprep.subr.bf16.mxu0 %v1260
    %2140 = vmatpush1.bf16.msra.mxu0 %v1259
    %2141 = vmatprep.subr.bf16.mxu0 %v1268
    %2142 = vmatpush1.bf16.msra.mxu0 %v1267
    %2143 = vmatprep.subr.bf16.mxu0 %v1276
    %2144 = vmatpush1.bf16.msra.mxu0 %v1275
    %2145 = vmatprep.subr.bf16.mxu0 %v1284
    %2146 = vmatpush1.bf16.msra.mxu0 %v1283
    %2147 = vmatprep.subr.bf16.mxu0 %v1292
    %2148 = vmatpush1.bf16.msra.mxu0 %v1291
    %2149 = vmatprep.subr.bf16.mxu0 %v1300
    %2150 = vmatpush1.bf16.msra.mxu0 %v1299
    %2151 = vmatprep.subr.bf16.mxu0 %v1308
    %2152 = vmatpush1.bf16.msra.mxu0 %v1307
    %2153 = vmatprep.subr.bf16.mxu0 %v1316
    %2154 = vmatpush1.bf16.msra.mxu0 %v1315
    %2155 = vmatprep.subr.bf16.mxu0 %v1324
    %2156 = vmatpush1.bf16.msra.mxu0 %v1323
    %2157 = vmatprep.subr.bf16.mxu0 %v1332
    %2158 = vmatpush1.bf16.msra.mxu0 %v1331
    %2159 = vmatprep.subr.bf16.mxu0 %v1340
    %2160 = vmatpush1.bf16.msra.mxu0 %v1339
    %2161 = vmatprep.subr.bf16.mxu0 %v1348
    %2162 = vmatpush1.bf16.msra.mxu0 %v1347
    %2163 = vmatprep.subr.bf16.mxu0 %v1356
    %2164 = vmatpush1.bf16.msra.mxu0 %v1355
    %2165 = vmatprep.subr.bf16.mxu0 %v1364
    %2166 = vmatpush1.bf16.msra.mxu0 %v1363
    %2167 = vmatprep.mubr.bf16.mxu0 %v972
    %2168 = vmatmul.mubr.bf16.gmra.mrb[0].mxu0 %v971
    %v2169 = vpop.f32.mrb[0].mxu0
    %v2170 = vadd.f32 %v2129, %v2169
    %v2171 = vpop.f32.mrb[0].mxu0
    %v2172 = vadd.f32 %v2131, %v2171
    %v2173 = vpop.f32.mrb[0].mxu0
    %v2174 = vpop.f32.mrb[0].mxu0
    %2175 = vdwg.mxu0
    %2176 = vmatprep.subr.bf16.mxu0 %v1372
    %2177 = vmatpush1.bf16.msra.mxu0 %v1371
    %2178 = vmatprep.subr.bf16.mxu0 %v1380
    %2179 = vmatpush1.bf16.msra.mxu0 %v1379
    %2180 = vmatprep.subr.bf16.mxu0 %v1388
    %2181 = vmatpush1.bf16.msra.mxu0 %v1387
    %2182 = vmatprep.subr.bf16.mxu0 %v1396
    %2183 = vmatpush1.bf16.msra.mxu0 %v1395
    %2184 = vmatprep.subr.bf16.mxu0 %v1404
    %2185 = vmatpush1.bf16.msra.mxu0 %v1403
    %2186 = vmatprep.subr.bf16.mxu0 %v1412
    %2187 = vmatpush1.bf16.msra.mxu0 %v1411
    %2188 = vmatprep.subr.bf16.mxu0 %v1420
    %2189 = vmatpush1.bf16.msra.mxu0 %v1419
    %2190 = vmatprep.subr.bf16.mxu0 %v1428
    %2191 = vmatpush1.bf16.msra.mxu0 %v1427
    %2192 = vmatprep.subr.bf16.mxu0 %v1436
    %2193 = vmatpush1.bf16.msra.mxu0 %v1435
    %2194 = vmatprep.subr.bf16.mxu0 %v1444
    %2195 = vmatpush1.bf16.msra.mxu0 %v1443
    %2196 = vmatprep.subr.bf16.mxu0 %v1452
    %2197 = vmatpush1.bf16.msra.mxu0 %v1451
    %2198 = vmatprep.subr.bf16.mxu0 %v1460
    %2199 = vmatpush1.bf16.msra.mxu0 %v1459
    %2200 = vmatprep.subr.bf16.mxu0 %v1468
    %2201 = vmatpush1.bf16.msra.mxu0 %v1467
    %2202 = vmatprep.subr.bf16.mxu0 %v1476
    %2203 = vmatpush1.bf16.msra.mxu0 %v1475
    %2204 = vmatprep.subr.bf16.mxu0 %v1484
    %2205 = vmatpush1.bf16.msra.mxu0 %v1483
    %2206 = vmatprep.subr.bf16.mxu0 %v1492
    %2207 = vmatpush1.bf16.msra.mxu0 %v1491
    %2208 = vmatprep.mubr.bf16.mxu0 %v974
    %2209 = vmatmul.mubr.bf16.gmra.mrb[0].mxu0 %v973
    %v2210 = vpop.f32.mrb[0].mxu0
    %v2211 = vadd.f32 %v2170, %v2210
    %v2212 = vpop.f32.mrb[0].mxu0
    %v2213 = vadd.f32 %v2172, %v2212
    %v2214 = vpop.f32.mrb[0].mxu0
    %v2215 = vpop.f32.mrb[0].mxu0
    %2216 = vdwg.mxu0
    %2217 = vmatprep.subr.bf16.mxu0 %v1500
    %2218 = vmatpush1.bf16.msra.mxu0 %v1499
    %2219 = vmatprep.subr.bf16.mxu0 %v1508
    %2220 = vmatpush1.bf16.msra.mxu0 %v1507
    %2221 = vmatprep.subr.bf16.mxu0 %v1516
    %2222 = vmatpush1.bf16.msra.mxu0 %v1515
    %2223 = vmatprep.subr.bf16.mxu0 %v1524
    %2224 = vmatpush1.bf16.msra.mxu0 %v1523
    %2225 = vmatprep.subr.bf16.mxu0 %v1532
    %2226 = vmatpush1.bf16.msra.mxu0 %v1531
    %2227 = vmatprep.subr.bf16.mxu0 %v1540
    %2228 = vmatpush1.bf16.msra.mxu0 %v1539
    %2229 = vmatprep.subr.bf16.mxu0 %v1548
    %2230 = vmatpush1.bf16.msra.mxu0 %v1547
    %2231 = vmatprep.subr.bf16.mxu0 %v1556
    %2232 = vmatpush1.bf16.msra.mxu0 %v1555
    %2233 = vmatprep.subr.bf16.mxu0 %v1564
    %2234 = vmatpush1.bf16.msra.mxu0 %v1563
    %2235 = vmatprep.subr.bf16.mxu0 %v1572
    %2236 = vmatpush1.bf16.msra.mxu0 %v1571
    %2237 = vmatprep.subr.bf16.mxu0 %v1580
    %2238 = vmatpush1.bf16.msra.mxu0 %v1579
    %2239 = vmatprep.subr.bf16.mxu0 %v1588
    %2240 = vmatpush1.bf16.msra.mxu0 %v1587
    %2241 = vmatprep.subr.bf16.mxu0 %v1596
    %2242 = vmatpush1.bf16.msra.mxu0 %v1595
    %2243 = vmatprep.subr.bf16.mxu0 %v1604
    %2244 = vmatpush1.bf16.msra.mxu0 %v1603
    %2245 = vmatprep.subr.bf16.mxu0 %v1612
    %2246 = vmatpush1.bf16.msra.mxu0 %v1611
    %2247 = vmatprep.subr.bf16.mxu0 %v1620
    %2248 = vmatpush1.bf16.msra.mxu0 %v1619
    %2249 = vmatprep.mubr.bf16.mxu0 %v976
    %2250 = vmatmul.mubr.bf16.gmra.mrb[0].mxu0 %v975
    %v2251 = vpop.f32.mrb[0].mxu0
    %v2252 = vadd.f32 %v2211, %v2251
    %v2253 = vpop.f32.mrb[0].mxu0
    %v2254 = vadd.f32 %v2213, %v2253
    %v2255 = vpop.f32.mrb[0].mxu0
    %v2256 = vpop.f32.mrb[0].mxu0
    %2257 = vdwg.mxu0
    %2258 = vmatprep.subr.bf16.mxu0 %v1628
    %2259 = vmatpush1.bf16.msra.mxu0 %v1627
    %2260 = vmatprep.subr.bf16.mxu0 %v1636
    %2261 = vmatpush1.bf16.msra.mxu0 %v1635
    %2262 = vmatprep.subr.bf16.mxu0 %v1644
    %2263 = vmatpush1.bf16.msra.mxu0 %v1643
    %2264 = vmatprep.subr.bf16.mxu0 %v1652
    %2265 = vmatpush1.bf16.msra.mxu0 %v1651
    %2266 = vmatprep.subr.bf16.mxu0 %v1660
    %2267 = vmatpush1.bf16.msra.mxu0 %v1659
    %2268 = vmatprep.subr.bf16.mxu0 %v1668
    %2269 = vmatpush1.bf16.msra.mxu0 %v1667
    %2270 = vmatprep.subr.bf16.mxu0 %v1676
    %2271 = vmatpush1.bf16.msra.mxu0 %v1675
    %2272 = vmatprep.subr.bf16.mxu0 %v1684
    %2273 = vmatpush1.bf16.msra.mxu0 %v1683
    %2274 = vmatprep.subr.bf16.mxu0 %v1692
    %2275 = vmatpush1.bf16.msra.mxu0 %v1691
    %2276 = vmatprep.subr.bf16.mxu0 %v1700
    %2277 = vmatpush1.bf16.msra.mxu0 %v1699
    %2278 = vmatprep.subr.bf16.mxu0 %v1708
    %2279 = vmatpush1.bf16.msra.mxu0 %v1707
    %2280 = vmatprep.subr.bf16.mxu0 %v1716
    %2281 = vmatpush1.bf16.msra.mxu0 %v1715
    %2282 = vmatprep.subr.bf16.mxu0 %v1724
    %2283 = vmatpush1.bf16.msra.mxu0 %v1723
    %2284 = vmatprep.subr.bf16.mxu0 %v1732
    %2285 = vmatpush1.bf16.msra.mxu0 %v1731
    %2286 = vmatprep.subr.bf16.mxu0 %v1740
    %2287 = vmatpush1.bf16.msra.mxu0 %v1739
    %2288 = vmatprep.subr.bf16.mxu0 %v1748
    %2289 = vmatpush1.bf16.msra.mxu0 %v1747
    %2290 = vmatprep.mubr.bf16.mxu0 %v978
    %2291 = vmatmul.mubr.bf16.gmra.mrb[0].mxu0 %v977
    %v2292 = vpop.f32.mrb[0].mxu0
    %v2293 = vadd.f32 %v2252, %v2292
    %v2294 = vpop.f32.mrb[0].mxu0
    %v2295 = vadd.f32 %v2254, %v2294
    %v2296 = vpop.f32.mrb[0].mxu0
    %v2297 = vpop.f32.mrb[0].mxu0
    %2298 = vdwg.mxu0
    %2299 = vmatprep.subr.bf16.mxu0 %v1756
    %2300 = vmatpush1.bf16.msra.mxu0 %v1755
    %2301 = vmatprep.subr.bf16.mxu0 %v1764
    %2302 = vmatpush1.bf16.msra.mxu0 %v1763
    %2303 = vmatprep.subr.bf16.mxu0 %v1772
    %2304 = vmatpush1.bf16.msra.mxu0 %v1771
    %2305 = vmatprep.subr.bf16.mxu0 %v1780
    %2306 = vmatpush1.bf16.msra.mxu0 %v1779
    %2307 = vmatprep.subr.bf16.mxu0 %v1788
    %2308 = vmatpush1.bf16.msra.mxu0 %v1787
    %2309 = vmatprep.subr.bf16.mxu0 %v1796
    %2310 = vmatpush1.bf16.msra.mxu0 %v1795
    %2311 = vmatprep.subr.bf16.mxu0 %v1804
    %2312 = vmatpush1.bf16.msra.mxu0 %v1803
    %2313 = vmatprep.subr.bf16.mxu0 %v1812
    %2314 = vmatpush1.bf16.msra.mxu0 %v1811
    %2315 = vmatprep.subr.bf16.mxu0 %v1820
    %2316 = vmatpush1.bf16.msra.mxu0 %v1819
    %2317 = vmatprep.subr.bf16.mxu0 %v1828
    %2318 = vmatpush1.bf16.msra.mxu0 %v1827
    %2319 = vmatprep.subr.bf16.mxu0 %v1836
    %2320 = vmatpush1.bf16.msra.mxu0 %v1835
    %2321 = vmatprep.subr.bf16.mxu0 %v1844
    %2322 = vmatpush1.bf16.msra.mxu0 %v1843
    %2323 = vmatprep.subr.bf16.mxu0 %v1852
    %2324 = vmatpush1.bf16.msra.mxu0 %v1851
    %2325 = vmatprep.subr.bf16.mxu0 %v1860
    %2326 = vmatpush1.bf16.msra.mxu0 %v1859
    %2327 = vmatprep.subr.bf16.mxu0 %v1868
    %2328 = vmatpush1.bf16.msra.mxu0 %v1867
    %2329 = vmatprep.subr.bf16.mxu0 %v1876
    %2330 = vmatpush1.bf16.msra.mxu0 %v1875
    %2331 = vmatprep.mubr.bf16.mxu0 %v980
    %2332 = vmatmul.mubr.bf16.gmra.mrb[0].mxu0 %v979
    %v2333 = vpop.f32.mrb[0].mxu0
    %v2334 = vadd.f32 %v2293, %v2333
    %v2335 = vpop.f32.mrb[0].mxu0
    %v2336 = vadd.f32 %v2295, %v2335
    %v2337 = vpop.f32.mrb[0].mxu0
    %v2338 = vpop.f32.mrb[0].mxu0
    %2339 = vdwg.mxu0
    %2340 = vmatprep.subr.bf16.mxu0 %v1884
    %2341 = vmatpush1.bf16.msra.mxu0 %v1883
    %2342 = vmatprep.subr.bf16.mxu0 %v1892
    %2343 = vmatpush1.bf16.msra.mxu0 %v1891
    %2344 = vmatprep.subr.bf16.mxu0 %v1900
    %2345 = vmatpush1.bf16.msra.mxu0 %v1899
    %2346 = vmatprep.subr.bf16.mxu0 %v1908
    %2347 = vmatpush1.bf16.msra.mxu0 %v1907
    %2348 = vmatprep.subr.bf16.mxu0 %v1916
    %2349 = vmatpush1.bf16.msra.mxu0 %v1915
    %2350 = vmatprep.subr.bf16.mxu0 %v1924
    %2351 = vmatpush1.bf16.msra.mxu0 %v1923
    %2352 = vmatprep.subr.bf16.mxu0 %v1932
    %2353 = vmatpush1.bf16.msra.mxu0 %v1931
    %2354 = vmatprep.subr.bf16.mxu0 %v1940
    %2355 = vmatpush1.bf16.msra.mxu0 %v1939
    %2356 = vmatprep.subr.bf16.mxu0 %v1948
    %2357 = vmatpush1.bf16.msra.mxu0 %v1947
    %2358 = vmatprep.subr.bf16.mxu0 %v1956
    %2359 = vmatpush1.bf16.msra.mxu0 %v1955
    %2360 = vmatprep.subr.bf16.mxu0 %v1964
    %2361 = vmatpush1.bf16.msra.mxu0 %v1963
    %2362 = vmatprep.subr.bf16.mxu0 %v1972
    %2363 = vmatpush1.bf16.msra.mxu0 %v1971
    %2364 = vmatprep.subr.bf16.mxu0 %v1980
    %2365 = vmatpush1.bf16.msra.mxu0 %v1979
    %2366 = vmatprep.subr.bf16.mxu0 %v1988
    %2367 = vmatpush1.bf16.msra.mxu0 %v1987
    %2368 = vmatprep.subr.bf16.mxu0 %v1996
    %2369 = vmatpush1.bf16.msra.mxu0 %v1995
    %2370 = vmatprep.subr.bf16.mxu0 %v2004
    %2371 = vmatpush1.bf16.msra.mxu0 %v2003
    %2372 = vmatprep.mubr.bf16.mxu0 %v982
    %2373 = vmatmul.mubr.bf16.gmra.mrb[0].mxu0 %v981
    %v2374 = vpop.f32.mrb[0].mxu0
    %v2375 = vadd.f32 %v2334, %v2374
    %v2376 = vpop.f32.mrb[0].mxu0
    %v2377 = vadd.f32 %v2336, %v2376
    %v2378 = vpop.f32.mrb[0].mxu0
    %v2379 = vpop.f32.mrb[0].mxu0
    %2380 = vdwg.mxu0
    %2381 = vmatprep.subr.bf16.mxu0 %v990
    %2382 = vmatpush1.bf16.msra.mxu0 %v989
    %2383 = vmatprep.subr.bf16.mxu0 %v998
    %2384 = vmatpush1.bf16.msra.mxu0 %v997
    %2385 = vmatprep.subr.bf16.mxu0 %v1006
    %2386 = vmatpush1.bf16.msra.mxu0 %v1005
    %2387 = vmatprep.subr.bf16.mxu0 %v1014
    %2388 = vmatpush1.bf16.msra.mxu0 %v1013
    %2389 = vmatprep.subr.bf16.mxu0 %v1022
    %2390 = vmatpush1.bf16.msra.mxu0 %v1021
    %2391 = vmatprep.subr.bf16.mxu0 %v1030
    %2392 = vmatpush1.bf16.msra.mxu0 %v1029
    %2393 = vmatprep.subr.bf16.mxu0 %v1038
    %2394 = vmatpush1.bf16.msra.mxu0 %v1037
    %2395 = vmatprep.subr.bf16.mxu0 %v1046
    %2396 = vmatpush1.bf16.msra.mxu0 %v1045
    %2397 = vmatprep.subr.bf16.mxu0 %v1054
    %2398 = vmatpush1.bf16.msra.mxu0 %v1053
    %2399 = vmatprep.subr.bf16.mxu0 %v1062
    %2400 = vmatpush1.bf16.msra.mxu0 %v1061
    %2401 = vmatprep.subr.bf16.mxu0 %v1070
    %2402 = vmatpush1.bf16.msra.mxu0 %v1069
    %2403 = vmatprep.subr.bf16.mxu0 %v1078
    %2404 = vmatpush1.bf16.msra.mxu0 %v1077
    %2405 = vmatprep.subr.bf16.mxu0 %v1086
    %2406 = vmatpush1.bf16.msra.mxu0 %v1085
    %2407 = vmatprep.subr.bf16.mxu0 %v1094
    %2408 = vmatpush1.bf16.msra.mxu0 %v1093
    %2409 = vmatprep.subr.bf16.mxu0 %v1102
    %2410 = vmatpush1.bf16.msra.mxu0 %v1101
    %2411 = vmatprep.subr.bf16.mxu0 %v1110
    %2412 = vmatpush1.bf16.msra.mxu0 %v1109
    %2413 = vmatprep.mubr.bf16.mxu0 %v968
    %2414 = vmatmul.mubr.bf16.gmra.mrb[0].mxu0 %v967
    %v2415 = vpop.f32.mrb[0].mxu0
    %v2416 = vadd.f32 %v2024, %v2415
    %v2417 = vpop.f32.mrb[0].mxu0
    %v2418 = vadd.f32 %v2028, %v2417
    %v2419 = vpop.f32.mrb[0].mxu0
    %v2420 = vpop.f32.mrb[0].mxu0
    %2421 = vdwg.mxu0
    %2422 = vmatprep.subr.bf16.mxu0 %v1118
    %2423 = vmatpush1.bf16.msra.mxu0 %v1117
    %2424 = vmatprep.subr.bf16.mxu0 %v1126
    %2425 = vmatpush1.bf16.msra.mxu0 %v1125
    %2426 = vmatprep.subr.bf16.mxu0 %v1134
    %2427 = vmatpush1.bf16.msra.mxu0 %v1133
    %2428 = vmatprep.subr.bf16.mxu0 %v1142
    %2429 = vmatpush1.bf16.msra.mxu0 %v1141
    %2430 = vmatprep.subr.bf16.mxu0 %v1150
    %2431 = vmatpush1.bf16.msra.mxu0 %v1149
    %2432 = vmatprep.subr.bf16.mxu0 %v1158
    %2433 = vmatpush1.bf16.msra.mxu0 %v1157
    %2434 = vmatprep.subr.bf16.mxu0 %v1166
    %2435 = vmatpush1.bf16.msra.mxu0 %v1165
    %2436 = vmatprep.subr.bf16.mxu0 %v1174
    %2437 = vmatpush1.bf16.msra.mxu0 %v1173
    %2438 = vmatprep.subr.bf16.mxu0 %v1182
    %2439 = vmatpush1.bf16.msra.mxu0 %v1181
    %2440 = vmatprep.subr.bf16.mxu0 %v1190
    %2441 = vmatpush1.bf16.msra.mxu0 %v1189
    %2442 = vmatprep.subr.bf16.mxu0 %v1198
    %2443 = vmatpush1.bf16.msra.mxu0 %v1197
    %2444 = vmatprep.subr.bf16.mxu0 %v1206
    %2445 = vmatpush1.bf16.msra.mxu0 %v1205
    %2446 = vmatprep.subr.bf16.mxu0 %v1214
    %2447 = vmatpush1.bf16.msra.mxu0 %v1213
    %2448 = vmatprep.subr.bf16.mxu0 %v1222
    %2449 = vmatpush1.bf16.msra.mxu0 %v1221
    %2450 = vmatprep.subr.bf16.mxu0 %v1230
    %2451 = vmatpush1.bf16.msra.mxu0 %v1229
    %2452 = vmatprep.subr.bf16.mxu0 %v1238
    %2453 = vmatpush1.bf16.msra.mxu0 %v1237
    %2454 = vmatprep.mubr.bf16.mxu0 %v970
    %2455 = vmatmul.mubr.bf16.gmra.mrb[0].mxu0 %v969
    %v2456 = vpop.f32.mrb[0].mxu0
    %v2457 = vadd.f32 %v2416, %v2456
    %v2458 = vpop.f32.mrb[0].mxu0
    %v2459 = vadd.f32 %v2418, %v2458
    %v2460 = vpop.f32.mrb[0].mxu0
    %v2461 = vpop.f32.mrb[0].mxu0
    %2462 = vdwg.mxu0
    %2463 = vmatprep.subr.bf16.mxu0 %v1246
    %2464 = vmatpush1.bf16.msra.mxu0 %v1245
    %2465 = vmatprep.subr.bf16.mxu0 %v1254
    %2466 = vmatpush1.bf16.msra.mxu0 %v1253
    %2467 = vmatprep.subr.bf16.mxu0 %v1262
    %2468 = vmatpush1.bf16.msra.mxu0 %v1261
    %2469 = vmatprep.subr.bf16.mxu0 %v1270
    %2470 = vmatpush1.bf16.msra.mxu0 %v1269
    %2471 = vmatprep.subr.bf16.mxu0 %v1278
    %2472 = vmatpush1.bf16.msra.mxu0 %v1277
    %2473 = vmatprep.subr.bf16.mxu0 %v1286
    %2474 = vmatpush1.bf16.msra.mxu0 %v1285
    %2475 = vmatprep.subr.bf16.mxu0 %v1294
    %2476 = vmatpush1.bf16.msra.mxu0 %v1293
    %2477 = vmatprep.subr.bf16.mxu0 %v1302
    %2478 = vmatpush1.bf16.msra.mxu0 %v1301
    %2479 = vmatprep.subr.bf16.mxu0 %v1310
    %2480 = vmatpush1.bf16.msra.mxu0 %v1309
    %2481 = vmatprep.subr.bf16.mxu0 %v1318
    %2482 = vmatpush1.bf16.msra.mxu0 %v1317
    %2483 = vmatprep.subr.bf16.mxu0 %v1326
    %2484 = vmatpush1.bf16.msra.mxu0 %v1325
    %2485 = vmatprep.subr.bf16.mxu0 %v1334
    %2486 = vmatpush1.bf16.msra.mxu0 %v1333
    %2487 = vmatprep.subr.bf16.mxu0 %v1342
    %2488 = vmatpush1.bf16.msra.mxu0 %v1341
    %2489 = vmatprep.subr.bf16.mxu0 %v1350
    %2490 = vmatpush1.bf16.msra.mxu0 %v1349
    %2491 = vmatprep.subr.bf16.mxu0 %v1358
    %2492 = vmatpush1.bf16.msra.mxu0 %v1357
    %2493 = vmatprep.subr.bf16.mxu0 %v1366
    %2494 = vmatpush1.bf16.msra.mxu0 %v1365
    %2495 = vmatprep.mubr.bf16.mxu0 %v972
    %2496 = vmatmul.mubr.bf16.gmra.mrb[0].mxu0 %v971
    %v2497 = vpop.f32.mrb[0].mxu0
    %v2498 = vadd.f32 %v2457, %v2497
    %v2499 = vpop.f32.mrb[0].mxu0
    %v2500 = vadd.f32 %v2459, %v2499
    %v2501 = vpop.f32.mrb[0].mxu0
    %v2502 = vpop.f32.mrb[0].mxu0
    %2503 = vdwg.mxu0
    %2504 = vmatprep.subr.bf16.mxu0 %v1374
    %2505 = vmatpush1.bf16.msra.mxu0 %v1373
    %2506 = vmatprep.subr.bf16.mxu0 %v1382
    %2507 = vmatpush1.bf16.msra.mxu0 %v1381
    %2508 = vmatprep.subr.bf16.mxu0 %v1390
    %2509 = vmatpush1.bf16.msra.mxu0 %v1389
    %2510 = vmatprep.subr.bf16.mxu0 %v1398
    %2511 = vmatpush1.bf16.msra.mxu0 %v1397
    %2512 = vmatprep.subr.bf16.mxu0 %v1406
    %2513 = vmatpush1.bf16.msra.mxu0 %v1405
    %2514 = vmatprep.subr.bf16.mxu0 %v1414
    %2515 = vmatpush1.bf16.msra.mxu0 %v1413
    %2516 = vmatprep.subr.bf16.mxu0 %v1422
    %2517 = vmatpush1.bf16.msra.mxu0 %v1421
    %2518 = vmatprep.subr.bf16.mxu0 %v1430
    %2519 = vmatpush1.bf16.msra.mxu0 %v1429
    %2520 = vmatprep.subr.bf16.mxu0 %v1438
    %2521 = vmatpush1.bf16.msra.mxu0 %v1437
    %2522 = vmatprep.subr.bf16.mxu0 %v1446
    %2523 = vmatpush1.bf16.msra.mxu0 %v1445
    %2524 = vmatprep.subr.bf16.mxu0 %v1454
    %2525 = vmatpush1.bf16.msra.mxu0 %v1453
    %2526 = vmatprep.subr.bf16.mxu0 %v1462
    %2527 = vmatpush1.bf16.msra.mxu0 %v1461
    %2528 = vmatprep.subr.bf16.mxu0 %v1470
    %2529 = vmatpush1.bf16.msra.mxu0 %v1469
    %2530 = vmatprep.subr.bf16.mxu0 %v1478
    %2531 = vmatpush1.bf16.msra.mxu0 %v1477
    %2532 = vmatprep.subr.bf16.mxu0 %v1486
    %2533 = vmatpush1.bf16.msra.mxu0 %v1485
    %2534 = vmatprep.subr.bf16.mxu0 %v1494
    %2535 = vmatpush1.bf16.msra.mxu0 %v1493
    %2536 = vmatprep.mubr.bf16.mxu0 %v974
    %2537 = vmatmul.mubr.bf16.gmra.mrb[0].mxu0 %v973
    %v2538 = vpop.f32.mrb[0].mxu0
    %v2539 = vadd.f32 %v2498, %v2538
    %v2540 = vpop.f32.mrb[0].mxu0
    %v2541 = vadd.f32 %v2500, %v2540
    %v2542 = vpop.f32.mrb[0].mxu0
    %v2543 = vpop.f32.mrb[0].mxu0
    %2544 = vdwg.mxu0
    %2545 = vmatprep.subr.bf16.mxu0 %v1502
    %2546 = vmatpush1.bf16.msra.mxu0 %v1501
    %2547 = vmatprep.subr.bf16.mxu0 %v1510
    %2548 = vmatpush1.bf16.msra.mxu0 %v1509
    %2549 = vmatprep.subr.bf16.mxu0 %v1518
    %2550 = vmatpush1.bf16.msra.mxu0 %v1517
    %2551 = vmatprep.subr.bf16.mxu0 %v1526
    %2552 = vmatpush1.bf16.msra.mxu0 %v1525
    %2553 = vmatprep.subr.bf16.mxu0 %v1534
    %2554 = vmatpush1.bf16.msra.mxu0 %v1533
    %2555 = vmatprep.subr.bf16.mxu0 %v1542
    %2556 = vmatpush1.bf16.msra.mxu0 %v1541
    %2557 = vmatprep.subr.bf16.mxu0 %v1550
    %2558 = vmatpush1.bf16.msra.mxu0 %v1549
    %2559 = vmatprep.subr.bf16.mxu0 %v1558
    %2560 = vmatpush1.bf16.msra.mxu0 %v1557
    %2561 = vmatprep.subr.bf16.mxu0 %v1566
    %2562 = vmatpush1.bf16.msra.mxu0 %v1565
    %2563 = vmatprep.subr.bf16.mxu0 %v1574
    %2564 = vmatpush1.bf16.msra.mxu0 %v1573
    %2565 = vmatprep.subr.bf16.mxu0 %v1582
    %2566 = vmatpush1.bf16.msra.mxu0 %v1581
    %2567 = vmatprep.subr.bf16.mxu0 %v1590
    %2568 = vmatpush1.bf16.msra.mxu0 %v1589
    %2569 = vmatprep.subr.bf16.mxu0 %v1598
    %2570 = vmatpush1.bf16.msra.mxu0 %v1597
    %2571 = vmatprep.subr.bf16.mxu0 %v1606
    %2572 = vmatpush1.bf16.msra.mxu0 %v1605
    %2573 = vmatprep.subr.bf16.mxu0 %v1614
    %2574 = vmatpush1.bf16.msra.mxu0 %v1613
    %2575 = vmatprep.subr.bf16.mxu0 %v1622
    %2576 = vmatpush1.bf16.msra.mxu0 %v1621
    %2577 = vmatprep.mubr.bf16.mxu0 %v976
    %2578 = vmatmul.mubr.bf16.gmra.mrb[0].mxu0 %v975
    %v2579 = vpop.f32.mrb[0].mxu0
    %v2580 = vadd.f32 %v2539, %v2579
    %v2581 = vpop.f32.mrb[0].mxu0
    %v2582 = vadd.f32 %v2541, %v2581
    %v2583 = vpop.f32.mrb[0].mxu0
    %v2584 = vpop.f32.mrb[0].mxu0
    %2585 = vdwg.mxu0
    %2586 = vmatprep.subr.bf16.mxu0 %v1630
    %2587 = vmatpush1.bf16.msra.mxu0 %v1629
    %2588 = vmatprep.subr.bf16.mxu0 %v1638
    %2589 = vmatpush1.bf16.msra.mxu0 %v1637
    %2590 = vmatprep.subr.bf16.mxu0 %v1646
    %2591 = vmatpush1.bf16.msra.mxu0 %v1645
    %2592 = vmatprep.subr.bf16.mxu0 %v1654
    %2593 = vmatpush1.bf16.msra.mxu0 %v1653
    %2594 = vmatprep.subr.bf16.mxu0 %v1662
    %2595 = vmatpush1.bf16.msra.mxu0 %v1661
    %2596 = vmatprep.subr.bf16.mxu0 %v1670
    %2597 = vmatpush1.bf16.msra.mxu0 %v1669
    %2598 = vmatprep.subr.bf16.mxu0 %v1678
    %2599 = vmatpush1.bf16.msra.mxu0 %v1677
    %2600 = vmatprep.subr.bf16.mxu0 %v1686
    %2601 = vmatpush1.bf16.msra.mxu0 %v1685
    %2602 = vmatprep.subr.bf16.mxu0 %v1694
    %2603 = vmatpush1.bf16.msra.mxu0 %v1693
    %2604 = vmatprep.subr.bf16.mxu0 %v1702
    %2605 = vmatpush1.bf16.msra.mxu0 %v1701
    %2606 = vmatprep.subr.bf16.mxu0 %v1710
    %2607 = vmatpush1.bf16.msra.mxu0 %v1709
    %2608 = vmatprep.subr.bf16.mxu0 %v1718
    %2609 = vmatpush1.bf16.msra.mxu0 %v1717
    %2610 = vmatprep.subr.bf16.mxu0 %v1726
    %2611 = vmatpush1.bf16.msra.mxu0 %v1725
    %2612 = vmatprep.subr.bf16.mxu0 %v1734
    %2613 = vmatpush1.bf16.msra.mxu0 %v1733
    %2614 = vmatprep.subr.bf16.mxu0 %v1742
    %2615 = vmatpush1.bf16.msra.mxu0 %v1741
    %2616 = vmatprep.subr.bf16.mxu0 %v1750
    %2617 = vmatpush1.bf16.msra.mxu0 %v1749
    %2618 = vmatprep.mubr.bf16.mxu0 %v978
    %2619 = vmatmul.mubr.bf16.gmra.mrb[0].mxu0 %v977
    %v2620 = vpop.f32.mrb[0].mxu0
    %v2621 = vadd.f32 %v2580, %v2620
    %v2622 = vpop.f32.mrb[0].mxu0
    %v2623 = vadd.f32 %v2582, %v2622
    %v2624 = vpop.f32.mrb[0].mxu0
    %v2625 = vpop.f32.mrb[0].mxu0
    %2626 = vdwg.mxu0
    %2627 = vmatprep.subr.bf16.mxu0 %v1758
    %2628 = vmatpush1.bf16.msra.mxu0 %v1757
    %2629 = vmatprep.subr.bf16.mxu0 %v1766
    %2630 = vmatpush1.bf16.msra.mxu0 %v1765
    %2631 = vmatprep.subr.bf16.mxu0 %v1774
    %2632 = vmatpush1.bf16.msra.mxu0 %v1773
    %2633 = vmatprep.subr.bf16.mxu0 %v1782
    %2634 = vmatpush1.bf16.msra.mxu0 %v1781
    %2635 = vmatprep.subr.bf16.mxu0 %v1790
    %2636 = vmatpush1.bf16.msra.mxu0 %v1789
    %2637 = vmatprep.subr.bf16.mxu0 %v1798
    %2638 = vmatpush1.bf16.msra.mxu0 %v1797
    %2639 = vmatprep.subr.bf16.mxu0 %v1806
    %2640 = vmatpush1.bf16.msra.mxu0 %v1805
    %2641 = vmatprep.subr.bf16.mxu0 %v1814
    %2642 = vmatpush1.bf16.msra.mxu0 %v1813
    %2643 = vmatprep.subr.bf16.mxu0 %v1822
    %2644 = vmatpush1.bf16.msra.mxu0 %v1821
    %2645 = vmatprep.subr.bf16.mxu0 %v1830
    %2646 = vmatpush1.bf16.msra.mxu0 %v1829
    %2647 = vmatprep.subr.bf16.mxu0 %v1838
    %2648 = vmatpush1.bf16.msra.mxu0 %v1837
    %2649 = vmatprep.subr.bf16.mxu0 %v1846
    %2650 = vmatpush1.bf16.msra.mxu0 %v1845
    %2651 = vmatprep.subr.bf16.mxu0 %v1854
    %2652 = vmatpush1.bf16.msra.mxu0 %v1853
    %2653 = vmatprep.subr.bf16.mxu0 %v1862
    %2654 = vmatpush1.bf16.msra.mxu0 %v1861
    %2655 = vmatprep.subr.bf16.mxu0 %v1870
    %2656 = vmatpush1.bf16.msra.mxu0 %v1869
    %2657 = vmatprep.subr.bf16.mxu0 %v1878
    %2658 = vmatpush1.bf16.msra.mxu0 %v1877
    %2659 = vmatprep.mubr.bf16.mxu0 %v980
    %2660 = vmatmul.mubr.bf16.gmra.mrb[0].mxu0 %v979
    %v2661 = vpop.f32.mrb[0].mxu0
    %v2662 = vadd.f32 %v2621, %v2661
    %v2663 = vpop.f32.mrb[0].mxu0
    %v2664 = vadd.f32 %v2623, %v2663
    %v2665 = vpop.f32.mrb[0].mxu0
    %v2666 = vpop.f32.mrb[0].mxu0
    %2667 = vdwg.mxu0
    %2668 = vmatprep.subr.bf16.mxu0 %v1886
    %2669 = vmatpush1.bf16.msra.mxu0 %v1885
    %2670 = vmatprep.subr.bf16.mxu0 %v1894
    %2671 = vmatpush1.bf16.msra.mxu0 %v1893
    %2672 = vmatprep.subr.bf16.mxu0 %v1902
    %2673 = vmatpush1.bf16.msra.mxu0 %v1901
    %2674 = vmatprep.subr.bf16.mxu0 %v1910
    %2675 = vmatpush1.bf16.msra.mxu0 %v1909
    %2676 = vmatprep.subr.bf16.mxu0 %v1918
    %2677 = vmatpush1.bf16.msra.mxu0 %v1917
    %2678 = vmatprep.subr.bf16.mxu0 %v1926
    %2679 = vmatpush1.bf16.msra.mxu0 %v1925
    %2680 = vmatprep.subr.bf16.mxu0 %v1934
    %2681 = vmatpush1.bf16.msra.mxu0 %v1933
    %2682 = vmatprep.subr.bf16.mxu0 %v1942
    %2683 = vmatpush1.bf16.msra.mxu0 %v1941
    %2684 = vmatprep.subr.bf16.mxu0 %v1950
    %2685 = vmatpush1.bf16.msra.mxu0 %v1949
    %2686 = vmatprep.subr.bf16.mxu0 %v1958
    %2687 = vmatpush1.bf16.msra.mxu0 %v1957
    %2688 = vmatprep.subr.bf16.mxu0 %v1966
    %2689 = vmatpush1.bf16.msra.mxu0 %v1965
    %2690 = vmatprep.subr.bf16.mxu0 %v1974
    %2691 = vmatpush1.bf16.msra.mxu0 %v1973
    %2692 = vmatprep.subr.bf16.mxu0 %v1982
    %2693 = vmatpush1.bf16.msra.mxu0 %v1981
    %2694 = vmatprep.subr.bf16.mxu0 %v1990
    %2695 = vmatpush1.bf16.msra.mxu0 %v1989
    %2696 = vmatprep.subr.bf16.mxu0 %v1998
    %2697 = vmatpush1.bf16.msra.mxu0 %v1997
    %2698 = vmatprep.subr.bf16.mxu0 %v2006
    %2699 = vmatpush1.bf16.msra.mxu0 %v2005
    %2700 = vmatprep.mubr.bf16.mxu0 %v982
    %2701 = vmatmul.mubr.bf16.gmra.mrb[0].mxu0 %v981
    %v2702 = vpop.f32.mrb[0].mxu0
    %v2703 = vadd.f32 %v2662, %v2702
    %v2704 = vpop.f32.mrb[0].mxu0
    %v2705 = vadd.f32 %v2664, %v2704
    %v2706 = vpop.f32.mrb[0].mxu0
    %v2707 = vpop.f32.mrb[0].mxu0
    %2708 = vdwg.mxu0
    %2709 = vmatprep.subr.bf16.mxu0 %v992
    %2710 = vmatpush1.bf16.msra.mxu0 %v991
    %2711 = vmatprep.subr.bf16.mxu0 %v1000
    %2712 = vmatpush1.bf16.msra.mxu0 %v999
    %2713 = vmatprep.subr.bf16.mxu0 %v1008
    %2714 = vmatpush1.bf16.msra.mxu0 %v1007
    %2715 = vmatprep.subr.bf16.mxu0 %v1016
    %2716 = vmatpush1.bf16.msra.mxu0 %v1015
    %2717 = vmatprep.subr.bf16.mxu0 %v1024
    %2718 = vmatpush1.bf16.msra.mxu0 %v1023
    %2719 = vmatprep.subr.bf16.mxu0 %v1032
    %2720 = vmatpush1.bf16.msra.mxu0 %v1031
    %2721 = vmatprep.subr.bf16.mxu0 %v1040
    %2722 = vmatpush1.bf16.msra.mxu0 %v1039
    %2723 = vmatprep.subr.bf16.mxu0 %v1048
    %2724 = vmatpush1.bf16.msra.mxu0 %v1047
    %2725 = vmatprep.subr.bf16.mxu0 %v1056
    %2726 = vmatpush1.bf16.msra.mxu0 %v1055
    %2727 = vmatprep.subr.bf16.mxu0 %v1064
    %2728 = vmatpush1.bf16.msra.mxu0 %v1063
    %2729 = vmatprep.subr.bf16.mxu0 %v1072
    %2730 = vmatpush1.bf16.msra.mxu0 %v1071
    %2731 = vmatprep.subr.bf16.mxu0 %v1080
    %2732 = vmatpush1.bf16.msra.mxu0 %v1079
    %2733 = vmatprep.subr.bf16.mxu0 %v1088
    %2734 = vmatpush1.bf16.msra.mxu0 %v1087
    %2735 = vmatprep.subr.bf16.mxu0 %v1096
    %2736 = vmatpush1.bf16.msra.mxu0 %v1095
    %2737 = vmatprep.subr.bf16.mxu0 %v1104
    %2738 = vmatpush1.bf16.msra.mxu0 %v1103
    %2739 = vmatprep.subr.bf16.mxu0 %v1112
    %2740 = vmatpush1.bf16.msra.mxu0 %v1111
    %2741 = vmatprep.mubr.bf16.mxu0 %v968
    %2742 = vmatmul.mubr.bf16.gmra.mrb[0].mxu0 %v967
    %v2743 = vpop.f32.mrb[0].mxu0
    %v2744 = vadd.f32 %v2032, %v2743
    %v2745 = vpop.f32.mrb[0].mxu0
    %v2746 = vadd.f32 %v2036, %v2745
    %v2747 = vpop.f32.mrb[0].mxu0
    %v2748 = vpop.f32.mrb[0].mxu0
    %2749 = vdwg.mxu0
    %2750 = vmatprep.subr.bf16.mxu0 %v1120
    %2751 = vmatpush1.bf16.msra.mxu0 %v1119
    %2752 = vmatprep.subr.bf16.mxu0 %v1128
    %2753 = vmatpush1.bf16.msra.mxu0 %v1127
    %2754 = vmatprep.subr.bf16.mxu0 %v1136
    %2755 = vmatpush1.bf16.msra.mxu0 %v1135
    %2756 = vmatprep.subr.bf16.mxu0 %v1144
    %2757 = vmatpush1.bf16.msra.mxu0 %v1143
    %2758 = vmatprep.subr.bf16.mxu0 %v1152
    %2759 = vmatpush1.bf16.msra.mxu0 %v1151
    %2760 = vmatprep.subr.bf16.mxu0 %v1160
    %2761 = vmatpush1.bf16.msra.mxu0 %v1159
    %2762 = vmatprep.subr.bf16.mxu0 %v1168
    %2763 = vmatpush1.bf16.msra.mxu0 %v1167
    %2764 = vmatprep.subr.bf16.mxu0 %v1176
    %2765 = vmatpush1.bf16.msra.mxu0 %v1175
    %2766 = vmatprep.subr.bf16.mxu0 %v1184
    %2767 = vmatpush1.bf16.msra.mxu0 %v1183
    %2768 = vmatprep.subr.bf16.mxu0 %v1192
    %2769 = vmatpush1.bf16.msra.mxu0 %v1191
    %2770 = vmatprep.subr.bf16.mxu0 %v1200
    %2771 = vmatpush1.bf16.msra.mxu0 %v1199
    %2772 = vmatprep.subr.bf16.mxu0 %v1208
    %2773 = vmatpush1.bf16.msra.mxu0 %v1207
    %2774 = vmatprep.subr.bf16.mxu0 %v1216
    %2775 = vmatpush1.bf16.msra.mxu0 %v1215
    %2776 = vmatprep.subr.bf16.mxu0 %v1224
    %2777 = vmatpush1.bf16.msra.mxu0 %v1223
    %2778 = vmatprep.subr.bf16.mxu0 %v1232
    %2779 = vmatpush1.bf16.msra.mxu0 %v1231
    %2780 = vmatprep.subr.bf16.mxu0 %v1240
    %2781 = vmatpush1.bf16.msra.mxu0 %v1239
    %2782 = vmatprep.mubr.bf16.mxu0 %v970
    %2783 = vmatmul.mubr.bf16.gmra.mrb[0].mxu0 %v969
    %v2784 = vpop.f32.mrb[0].mxu0
    %v2785 = vadd.f32 %v2744, %v2784
    %v2786 = vpop.f32.mrb[0].mxu0
    %v2787 = vadd.f32 %v2746, %v2786
    %v2788 = vpop.f32.mrb[0].mxu0
    %v2789 = vpop.f32.mrb[0].mxu0
    %2790 = vdwg.mxu0
    %2791 = vmatprep.subr.bf16.mxu0 %v1248
    %2792 = vmatpush1.bf16.msra.mxu0 %v1247
    %2793 = vmatprep.subr.bf16.mxu0 %v1256
    %2794 = vmatpush1.bf16.msra.mxu0 %v1255
    %2795 = vmatprep.subr.bf16.mxu0 %v1264
    %2796 = vmatpush1.bf16.msra.mxu0 %v1263
    %2797 = vmatprep.subr.bf16.mxu0 %v1272
    %2798 = vmatpush1.bf16.msra.mxu0 %v1271
    %2799 = vmatprep.subr.bf16.mxu0 %v1280
    %2800 = vmatpush1.bf16.msra.mxu0 %v1279
    %2801 = vmatprep.subr.bf16.mxu0 %v1288
    %2802 = vmatpush1.bf16.msra.mxu0 %v1287
    %2803 = vmatprep.subr.bf16.mxu0 %v1296
    %2804 = vmatpush1.bf16.msra.mxu0 %v1295
    %2805 = vmatprep.subr.bf16.mxu0 %v1304
    %2806 = vmatpush1.bf16.msra.mxu0 %v1303
    %2807 = vmatprep.subr.bf16.mxu0 %v1312
    %2808 = vmatpush1.bf16.msra.mxu0 %v1311
    %2809 = vmatprep.subr.bf16.mxu0 %v1320
    %2810 = vmatpush1.bf16.msra.mxu0 %v1319
    %2811 = vmatprep.subr.bf16.mxu0 %v1328
    %2812 = vmatpush1.bf16.msra.mxu0 %v1327
    %2813 = vmatprep.subr.bf16.mxu0 %v1336
    %2814 = vmatpush1.bf16.msra.mxu0 %v1335
    %2815 = vmatprep.subr.bf16.mxu0 %v1344
    %2816 = vmatpush1.bf16.msra.mxu0 %v1343
    %2817 = vmatprep.subr.bf16.mxu0 %v1352
    %2818 = vmatpush1.bf16.msra.mxu0 %v1351
    %2819 = vmatprep.subr.bf16.mxu0 %v1360
    %2820 = vmatpush1.bf16.msra.mxu0 %v1359
    %2821 = vmatprep.subr.bf16.mxu0 %v1368
    %2822 = vmatpush1.bf16.msra.mxu0 %v1367
    %2823 = vmatprep.mubr.bf16.mxu0 %v972
    %2824 = vmatmul.mubr.bf16.gmra.mrb[0].mxu0 %v971
    %v2825 = vpop.f32.mrb[0].mxu0
    %v2826 = vadd.f32 %v2785, %v2825
    %v2827 = vpop.f32.mrb[0].mxu0
    %v2828 = vadd.f32 %v2787, %v2827
    %v2829 = vpop.f32.mrb[0].mxu0
    %v2830 = vpop.f32.mrb[0].mxu0
    %2831 = vdwg.mxu0
    %2832 = vmatprep.subr.bf16.mxu0 %v1376
    %2833 = vmatpush1.bf16.msra.mxu0 %v1375
    %2834 = vmatprep.subr.bf16.mxu0 %v1384
    %2835 = vmatpush1.bf16.msra.mxu0 %v1383
    %2836 = vmatprep.subr.bf16.mxu0 %v1392
    %2837 = vmatpush1.bf16.msra.mxu0 %v1391
    %2838 = vmatprep.subr.bf16.mxu0 %v1400
    %2839 = vmatpush1.bf16.msra.mxu0 %v1399
    %2840 = vmatprep.subr.bf16.mxu0 %v1408
    %2841 = vmatpush1.bf16.msra.mxu0 %v1407
    %2842 = vmatprep.subr.bf16.mxu0 %v1416
    %2843 = vmatpush1.bf16.msra.mxu0 %v1415
    %2844 = vmatprep.subr.bf16.mxu0 %v1424
    %2845 = vmatpush1.bf16.msra.mxu0 %v1423
    %2846 = vmatprep.subr.bf16.mxu0 %v1432
    %2847 = vmatpush1.bf16.msra.mxu0 %v1431
    %2848 = vmatprep.subr.bf16.mxu0 %v1440
    %2849 = vmatpush1.bf16.msra.mxu0 %v1439
    %2850 = vmatprep.subr.bf16.mxu0 %v1448
    %2851 = vmatpush1.bf16.msra.mxu0 %v1447
    %2852 = vmatprep.subr.bf16.mxu0 %v1456
    %2853 = vmatpush1.bf16.msra.mxu0 %v1455
    %2854 = vmatprep.subr.bf16.mxu0 %v1464
    %2855 = vmatpush1.bf16.msra.mxu0 %v1463
    %2856 = vmatprep.subr.bf16.mxu0 %v1472
    %2857 = vmatpush1.bf16.msra.mxu0 %v1471
    %2858 = vmatprep.subr.bf16.mxu0 %v1480
    %2859 = vmatpush1.bf16.msra.mxu0 %v1479
    %2860 = vmatprep.subr.bf16.mxu0 %v1488
    %2861 = vmatpush1.bf16.msra.mxu0 %v1487
    %2862 = vmatprep.subr.bf16.mxu0 %v1496
    %2863 = vmatpush1.bf16.msra.mxu0 %v1495
    %2864 = vmatprep.mubr.bf16.mxu0 %v974
    %2865 = vmatmul.mubr.bf16.gmra.mrb[0].mxu0 %v973
    %v2866 = vpop.f32.mrb[0].mxu0
    %v2867 = vadd.f32 %v2826, %v2866
    %v2868 = vpop.f32.mrb[0].mxu0
    %v2869 = vadd.f32 %v2828, %v2868
    %v2870 = vpop.f32.mrb[0].mxu0
    %v2871 = vpop.f32.mrb[0].mxu0
    %2872 = vdwg.mxu0
    %2873 = vmatprep.subr.bf16.mxu0 %v1504
    %2874 = vmatpush1.bf16.msra.mxu0 %v1503
    %2875 = vmatprep.subr.bf16.mxu0 %v1512
    %2876 = vmatpush1.bf16.msra.mxu0 %v1511
    %2877 = vmatprep.subr.bf16.mxu0 %v1520
    %2878 = vmatpush1.bf16.msra.mxu0 %v1519
    %2879 = vmatprep.subr.bf16.mxu0 %v1528
    %2880 = vmatpush1.bf16.msra.mxu0 %v1527
    %2881 = vmatprep.subr.bf16.mxu0 %v1536
    %2882 = vmatpush1.bf16.msra.mxu0 %v1535
    %2883 = vmatprep.subr.bf16.mxu0 %v1544
    %2884 = vmatpush1.bf16.msra.mxu0 %v1543
    %2885 = vmatprep.subr.bf16.mxu0 %v1552
    %2886 = vmatpush1.bf16.msra.mxu0 %v1551
    %2887 = vmatprep.subr.bf16.mxu0 %v1560
    %2888 = vmatpush1.bf16.msra.mxu0 %v1559
    %2889 = vmatprep.subr.bf16.mxu0 %v1568
    %2890 = vmatpush1.bf16.msra.mxu0 %v1567
    %2891 = vmatprep.subr.bf16.mxu0 %v1576
    %2892 = vmatpush1.bf16.msra.mxu0 %v1575
    %2893 = vmatprep.subr.bf16.mxu0 %v1584
    %2894 = vmatpush1.bf16.msra.mxu0 %v1583
    %2895 = vmatprep.subr.bf16.mxu0 %v1592
    %2896 = vmatpush1.bf16.msra.mxu0 %v1591
    %2897 = vmatprep.subr.bf16.mxu0 %v1600
    %2898 = vmatpush1.bf16.msra.mxu0 %v1599
    %2899 = vmatprep.subr.bf16.mxu0 %v1608
    %2900 = vmatpush1.bf16.msra.mxu0 %v1607
    %2901 = vmatprep.subr.bf16.mxu0 %v1616
    %2902 = vmatpush1.bf16.msra.mxu0 %v1615
    %2903 = vmatprep.subr.bf16.mxu0 %v1624
    %2904 = vmatpush1.bf16.msra.mxu0 %v1623
    %2905 = vmatprep.mubr.bf16.mxu0 %v976
    %2906 = vmatmul.mubr.bf16.gmra.mrb[0].mxu0 %v975
    %v2907 = vpop.f32.mrb[0].mxu0
    %v2908 = vadd.f32 %v2867, %v2907
    %v2909 = vpop.f32.mrb[0].mxu0
    %v2910 = vadd.f32 %v2869, %v2909
    %v2911 = vpop.f32.mrb[0].mxu0
    %v2912 = vpop.f32.mrb[0].mxu0
    %2913 = vdwg.mxu0
    %2914 = vmatprep.subr.bf16.mxu0 %v1632
    %2915 = vmatpush1.bf16.msra.mxu0 %v1631
    %2916 = vmatprep.subr.bf16.mxu0 %v1640
    %2917 = vmatpush1.bf16.msra.mxu0 %v1639
    %2918 = vmatprep.subr.bf16.mxu0 %v1648
    %2919 = vmatpush1.bf16.msra.mxu0 %v1647
    %2920 = vmatprep.subr.bf16.mxu0 %v1656
    %2921 = vmatpush1.bf16.msra.mxu0 %v1655
    %2922 = vmatprep.subr.bf16.mxu0 %v1664
    %2923 = vmatpush1.bf16.msra.mxu0 %v1663
    %2924 = vmatprep.subr.bf16.mxu0 %v1672
    %2925 = vmatpush1.bf16.msra.mxu0 %v1671
    %2926 = vmatprep.subr.bf16.mxu0 %v1680
    %2927 = vmatpush1.bf16.msra.mxu0 %v1679
    %2928 = vmatprep.subr.bf16.mxu0 %v1688
    %2929 = vmatpush1.bf16.msra.mxu0 %v1687
    %2930 = vmatprep.subr.bf16.mxu0 %v1696
    %2931 = vmatpush1.bf16.msra.mxu0 %v1695
    %2932 = vmatprep.subr.bf16.mxu0 %v1704
    %2933 = vmatpush1.bf16.msra.mxu0 %v1703
    %2934 = vmatprep.subr.bf16.mxu0 %v1712
    %2935 = vmatpush1.bf16.msra.mxu0 %v1711
    %2936 = vmatprep.subr.bf16.mxu0 %v1720
    %2937 = vmatpush1.bf16.msra.mxu0 %v1719
    %2938 = vmatprep.subr.bf16.mxu0 %v1728
    %2939 = vmatpush1.bf16.msra.mxu0 %v1727
    %2940 = vmatprep.subr.bf16.mxu0 %v1736
    %2941 = vmatpush1.bf16.msra.mxu0 %v1735
    %2942 = vmatprep.subr.bf16.mxu0 %v1744
    %2943 = vmatpush1.bf16.msra.mxu0 %v1743
    %2944 = vmatprep.subr.bf16.mxu0 %v1752
    %2945 = vmatpush1.bf16.msra.mxu0 %v1751
    %2946 = vmatprep.mubr.bf16.mxu0 %v978
    %2947 = vmatmul.mubr.bf16.gmra.mrb[0].mxu0 %v977
    %v2948 = vpop.f32.mrb[0].mxu0
    %v2949 = vadd.f32 %v2908, %v2948
    %v2950 = vpop.f32.mrb[0].mxu0
    %v2951 = vadd.f32 %v2910, %v2950
    %v2952 = vpop.f32.mrb[0].mxu0
    %v2953 = vpop.f32.mrb[0].mxu0
    %2954 = vdwg.mxu0
    %2955 = vmatprep.subr.bf16.mxu0 %v1760
    %2956 = vmatpush1.bf16.msra.mxu0 %v1759
    %2957 = vmatprep.subr.bf16.mxu0 %v1768
    %2958 = vmatpush1.bf16.msra.mxu0 %v1767
    %2959 = vmatprep.subr.bf16.mxu0 %v1776
    %2960 = vmatpush1.bf16.msra.mxu0 %v1775
    %2961 = vmatprep.subr.bf16.mxu0 %v1784
    %2962 = vmatpush1.bf16.msra.mxu0 %v1783
    %2963 = vmatprep.subr.bf16.mxu0 %v1792
    %2964 = vmatpush1.bf16.msra.mxu0 %v1791
    %2965 = vmatprep.subr.bf16.mxu0 %v1800
    %2966 = vmatpush1.bf16.msra.mxu0 %v1799
    %2967 = vmatprep.subr.bf16.mxu0 %v1808
    %2968 = vmatpush1.bf16.msra.mxu0 %v1807
    %2969 = vmatprep.subr.bf16.mxu0 %v1816
    %2970 = vmatpush1.bf16.msra.mxu0 %v1815
    %2971 = vmatprep.subr.bf16.mxu0 %v1824
    %2972 = vmatpush1.bf16.msra.mxu0 %v1823
    %2973 = vmatprep.subr.bf16.mxu0 %v1832
    %2974 = vmatpush1.bf16.msra.mxu0 %v1831
    %2975 = vmatprep.subr.bf16.mxu0 %v1840
    %2976 = vmatpush1.bf16.msra.mxu0 %v1839
    %2977 = vmatprep.subr.bf16.mxu0 %v1848
    %2978 = vmatpush1.bf16.msra.mxu0 %v1847
    %2979 = vmatprep.subr.bf16.mxu0 %v1856
    %2980 = vmatpush1.bf16.msra.mxu0 %v1855
    %2981 = vmatprep.subr.bf16.mxu0 %v1864
    %2982 = vmatpush1.bf16.msra.mxu0 %v1863
    %2983 = vmatprep.subr.bf16.mxu0 %v1872
    %2984 = vmatpush1.bf16.msra.mxu0 %v1871
    %2985 = vmatprep.subr.bf16.mxu0 %v1880
    %2986 = vmatpush1.bf16.msra.mxu0 %v1879
    %2987 = vmatprep.mubr.bf16.mxu0 %v980
    %2988 = vmatmul.mubr.bf16.gmra.mrb[0].mxu0 %v979
    %v2989 = vpop.f32.mrb[0].mxu0
    %v2990 = vadd.f32 %v2949, %v2989
    %v2991 = vpop.f32.mrb[0].mxu0
    %v2992 = vadd.f32 %v2951, %v2991
    %v2993 = vpop.f32.mrb[0].mxu0
    %v2994 = vpop.f32.mrb[0].mxu0
    %2995 = vdwg.mxu0
    %2996 = vmatprep.subr.bf16.mxu0 %v1888
    %2997 = vmatpush1.bf16.msra.mxu0 %v1887
    %2998 = vmatprep.subr.bf16.mxu0 %v1896
    %2999 = vmatpush1.bf16.msra.mxu0 %v1895
    %3000 = vmatprep.subr.bf16.mxu0 %v1904
    %3001 = vmatpush1.bf16.msra.mxu0 %v1903
    %3002 = vmatprep.subr.bf16.mxu0 %v1912
    %3003 = vmatpush1.bf16.msra.mxu0 %v1911
    %3004 = vmatprep.subr.bf16.mxu0 %v1920
    %3005 = vmatpush1.bf16.msra.mxu0 %v1919
    %3006 = vmatprep.subr.bf16.mxu0 %v1928
    %3007 = vmatpush1.bf16.msra.mxu0 %v1927
    %3008 = vmatprep.subr.bf16.mxu0 %v1936
    %3009 = vmatpush1.bf16.msra.mxu0 %v1935
    %3010 = vmatprep.subr.bf16.mxu0 %v1944
    %3011 = vmatpush1.bf16.msra.mxu0 %v1943
    %3012 = vmatprep.subr.bf16.mxu0 %v1952
    %3013 = vmatpush1.bf16.msra.mxu0 %v1951
    %3014 = vmatprep.subr.bf16.mxu0 %v1960
    %3015 = vmatpush1.bf16.msra.mxu0 %v1959
    %3016 = vmatprep.subr.bf16.mxu0 %v1968
    %3017 = vmatpush1.bf16.msra.mxu0 %v1967
    %3018 = vmatprep.subr.bf16.mxu0 %v1976
    %3019 = vmatpush1.bf16.msra.mxu0 %v1975
    %3020 = vmatprep.subr.bf16.mxu0 %v1984
    %3021 = vmatpush1.bf16.msra.mxu0 %v1983
    %3022 = vmatprep.subr.bf16.mxu0 %v1992
    %3023 = vmatpush1.bf16.msra.mxu0 %v1991
    %3024 = vmatprep.subr.bf16.mxu0 %v2000
    %3025 = vmatpush1.bf16.msra.mxu0 %v1999
    %3026 = vmatprep.subr.bf16.mxu0 %v2008
    %3027 = vmatpush1.bf16.msra.mxu0 %v2007
    %3028 = vmatprep.mubr.bf16.mxu0 %v982
    %3029 = vmatmul.mubr.bf16.gmra.mrb[0].mxu0 %v981
    %v3030 = vpop.f32.mrb[0].mxu0
    %v3031 = vadd.f32 %v2990, %v3030
    %v3032 = vpop.f32.mrb[0].mxu0
    %v3033 = vadd.f32 %v2992, %v3032
    %v3034 = vpop.f32.mrb[0].mxu0
    %v3035 = vpop.f32.mrb[0].mxu0
    %3036 = vdwg.mxu0
    %3037 = vmatprep.subr.bf16.mxu0 %v994
    %3038 = vmatpush1.bf16.msra.mxu0 %v993
    %3039 = vmatprep.subr.bf16.mxu0 %v1002
    %3040 = vmatpush1.bf16.msra.mxu0 %v1001
    %3041 = vmatprep.subr.bf16.mxu0 %v1010
    %3042 = vmatpush1.bf16.msra.mxu0 %v1009
    %3043 = vmatprep.subr.bf16.mxu0 %v1018
    %3044 = vmatpush1.bf16.msra.mxu0 %v1017
    %3045 = vmatprep.subr.bf16.mxu0 %v1026
    %3046 = vmatpush1.bf16.msra.mxu0 %v1025
    %3047 = vmatprep.subr.bf16.mxu0 %v1034
    %3048 = vmatpush1.bf16.msra.mxu0 %v1033
    %3049 = vmatprep.subr.bf16.mxu0 %v1042
    %3050 = vmatpush1.bf16.msra.mxu0 %v1041
    %3051 = vmatprep.subr.bf16.mxu0 %v1050
    %3052 = vmatpush1.bf16.msra.mxu0 %v1049
    %3053 = vmatprep.subr.bf16.mxu0 %v1058
    %3054 = vmatpush1.bf16.msra.mxu0 %v1057
    %3055 = vmatprep.subr.bf16.mxu0 %v1066
    %3056 = vmatpush1.bf16.msra.mxu0 %v1065
    %3057 = vmatprep.subr.bf16.mxu0 %v1074
    %3058 = vmatpush1.bf16.msra.mxu0 %v1073
    %3059 = vmatprep.subr.bf16.mxu0 %v1082
    %3060 = vmatpush1.bf16.msra.mxu0 %v1081
    %3061 = vmatprep.subr.bf16.mxu0 %v1090
    %3062 = vmatpush1.bf16.msra.mxu0 %v1089
    %3063 = vmatprep.subr.bf16.mxu0 %v1098
    %3064 = vmatpush1.bf16.msra.mxu0 %v1097
    %3065 = vmatprep.subr.bf16.mxu0 %v1106
    %3066 = vmatpush1.bf16.msra.mxu0 %v1105
    %3067 = vmatprep.subr.bf16.mxu0 %v1114
    %3068 = vmatpush1.bf16.msra.mxu0 %v1113
    %3069 = vmatprep.mubr.bf16.mxu0 %v968
    %3070 = vmatmul.mubr.bf16.gmra.mrb[0].mxu0 %v967
    %v3071 = vpop.f32.mrb[0].mxu0
    %v3072 = vadd.f32 %v2040, %v3071
    %v3073 = vpop.f32.mrb[0].mxu0
    %v3074 = vadd.f32 %v2044, %v3073
    %v3075 = vpop.f32.mrb[0].mxu0
    %v3076 = vpop.f32.mrb[0].mxu0
    %3077 = vdwg.mxu0
    %3078 = vmatprep.subr.bf16.mxu0 %v1122
    %3079 = vmatpush1.bf16.msra.mxu0 %v1121
    %3080 = vmatprep.subr.bf16.mxu0 %v1130
    %3081 = vmatpush1.bf16.msra.mxu0 %v1129
    %3082 = vmatprep.subr.bf16.mxu0 %v1138
    %3083 = vmatpush1.bf16.msra.mxu0 %v1137
    %3084 = vmatprep.subr.bf16.mxu0 %v1146
    %3085 = vmatpush1.bf16.msra.mxu0 %v1145
    %3086 = vmatprep.subr.bf16.mxu0 %v1154
    %3087 = vmatpush1.bf16.msra.mxu0 %v1153
    %3088 = vmatprep.subr.bf16.mxu0 %v1162
    %3089 = vmatpush1.bf16.msra.mxu0 %v1161
    %3090 = vmatprep.subr.bf16.mxu0 %v1170
    %3091 = vmatpush1.bf16.msra.mxu0 %v1169
    %3092 = vmatprep.subr.bf16.mxu0 %v1178
    %3093 = vmatpush1.bf16.msra.mxu0 %v1177
    %3094 = vmatprep.subr.bf16.mxu0 %v1186
    %3095 = vmatpush1.bf16.msra.mxu0 %v1185
    %3096 = vmatprep.subr.bf16.mxu0 %v1194
    %3097 = vmatpush1.bf16.msra.mxu0 %v1193
    %3098 = vmatprep.subr.bf16.mxu0 %v1202
    %3099 = vmatpush1.bf16.msra.mxu0 %v1201
    %3100 = vmatprep.subr.bf16.mxu0 %v1210
    %3101 = vmatpush1.bf16.msra.mxu0 %v1209
    %3102 = vmatprep.subr.bf16.mxu0 %v1218
    %3103 = vmatpush1.bf16.msra.mxu0 %v1217
    %3104 = vmatprep.subr.bf16.mxu0 %v1226
    %3105 = vmatpush1.bf16.msra.mxu0 %v1225
    %3106 = vmatprep.subr.bf16.mxu0 %v1234
    %3107 = vmatpush1.bf16.msra.mxu0 %v1233
    %3108 = vmatprep.subr.bf16.mxu0 %v1242
    %3109 = vmatpush1.bf16.msra.mxu0 %v1241
    %3110 = vmatprep.mubr.bf16.mxu0 %v970
    %3111 = vmatmul.mubr.bf16.gmra.mrb[0].mxu0 %v969
    %v3112 = vpop.f32.mrb[0].mxu0
    %v3113 = vadd.f32 %v3072, %v3112
    %v3114 = vpop.f32.mrb[0].mxu0
    %v3115 = vadd.f32 %v3074, %v3114
    %v3116 = vpop.f32.mrb[0].mxu0
    %v3117 = vpop.f32.mrb[0].mxu0
    %3118 = vdwg.mxu0
    %3119 = vmatprep.subr.bf16.mxu0 %v1250
    %3120 = vmatpush1.bf16.msra.mxu0 %v1249
    %3121 = vmatprep.subr.bf16.mxu0 %v1258
    %3122 = vmatpush1.bf16.msra.mxu0 %v1257
    %3123 = vmatprep.subr.bf16.mxu0 %v1266
    %3124 = vmatpush1.bf16.msra.mxu0 %v1265
    %3125 = vmatprep.subr.bf16.mxu0 %v1274
    %3126 = vmatpush1.bf16.msra.mxu0 %v1273
    %3127 = vmatprep.subr.bf16.mxu0 %v1282
    %3128 = vmatpush1.bf16.msra.mxu0 %v1281
    %3129 = vmatprep.subr.bf16.mxu0 %v1290
    %3130 = vmatpush1.bf16.msra.mxu0 %v1289
    %3131 = vmatprep.subr.bf16.mxu0 %v1298
    %3132 = vmatpush1.bf16.msra.mxu0 %v1297
    %3133 = vmatprep.subr.bf16.mxu0 %v1306
    %3134 = vmatpush1.bf16.msra.mxu0 %v1305
    %3135 = vmatprep.subr.bf16.mxu0 %v1314
    %3136 = vmatpush1.bf16.msra.mxu0 %v1313
    %3137 = vmatprep.subr.bf16.mxu0 %v1322
    %3138 = vmatpush1.bf16.msra.mxu0 %v1321
    %3139 = vmatprep.subr.bf16.mxu0 %v1330
    %3140 = vmatpush1.bf16.msra.mxu0 %v1329
    %3141 = vmatprep.subr.bf16.mxu0 %v1338
    %3142 = vmatpush1.bf16.msra.mxu0 %v1337
    %3143 = vmatprep.subr.bf16.mxu0 %v1346
    %3144 = vmatpush1.bf16.msra.mxu0 %v1345
    %3145 = vmatprep.subr.bf16.mxu0 %v1354
    %3146 = vmatpush1.bf16.msra.mxu0 %v1353
    %3147 = vmatprep.subr.bf16.mxu0 %v1362
    %3148 = vmatpush1.bf16.msra.mxu0 %v1361
    %3149 = vmatprep.subr.bf16.mxu0 %v1370
    %3150 = vmatpush1.bf16.msra.mxu0 %v1369
    %3151 = vmatprep.mubr.bf16.mxu0 %v972
    %3152 = vmatmul.mubr.bf16.gmra.mrb[0].mxu0 %v971
    %v3153 = vpop.f32.mrb[0].mxu0
    %v3154 = vadd.f32 %v3113, %v3153
    %v3155 = vpop.f32.mrb[0].mxu0
    %v3156 = vadd.f32 %v3115, %v3155
    %v3157 = vpop.f32.mrb[0].mxu0
    %v3158 = vpop.f32.mrb[0].mxu0
    %3159 = vdwg.mxu0
    %3160 = vmatprep.subr.bf16.mxu0 %v1378
    %3161 = vmatpush1.bf16.msra.mxu0 %v1377
    %3162 = vmatprep.subr.bf16.mxu0 %v1386
    %3163 = vmatpush1.bf16.msra.mxu0 %v1385
    %3164 = vmatprep.subr.bf16.mxu0 %v1394
    %3165 = vmatpush1.bf16.msra.mxu0 %v1393
    %3166 = vmatprep.subr.bf16.mxu0 %v1402
    %3167 = vmatpush1.bf16.msra.mxu0 %v1401
    %3168 = vmatprep.subr.bf16.mxu0 %v1410
    %3169 = vmatpush1.bf16.msra.mxu0 %v1409
    %3170 = vmatprep.subr.bf16.mxu0 %v1418
    %3171 = vmatpush1.bf16.msra.mxu0 %v1417
    %3172 = vmatprep.subr.bf16.mxu0 %v1426
    %3173 = vmatpush1.bf16.msra.mxu0 %v1425
    %3174 = vmatprep.subr.bf16.mxu0 %v1434
    %3175 = vmatpush1.bf16.msra.mxu0 %v1433
    %3176 = vmatprep.subr.bf16.mxu0 %v1442
    %3177 = vmatpush1.bf16.msra.mxu0 %v1441
    %3178 = vmatprep.subr.bf16.mxu0 %v1450
    %3179 = vmatpush1.bf16.msra.mxu0 %v1449
    %3180 = vmatprep.subr.bf16.mxu0 %v1458
    %3181 = vmatpush1.bf16.msra.mxu0 %v1457
    %3182 = vmatprep.subr.bf16.mxu0 %v1466
    %3183 = vmatpush1.bf16.msra.mxu0 %v1465
    %3184 = vmatprep.subr.bf16.mxu0 %v1474
    %3185 = vmatpush1.bf16.msra.mxu0 %v1473
    %3186 = vmatprep.subr.bf16.mxu0 %v1482
    %3187 = vmatpush1.bf16.msra.mxu0 %v1481
    %3188 = vmatprep.subr.bf16.mxu0 %v1490
    %3189 = vmatpush1.bf16.msra.mxu0 %v1489
    %3190 = vmatprep.subr.bf16.mxu0 %v1498
    %3191 = vmatpush1.bf16.msra.mxu0 %v1497
    %3192 = vmatprep.mubr.bf16.mxu0 %v974
    %3193 = vmatmul.mubr.bf16.gmra.mrb[0].mxu0 %v973
    %v3194 = vpop.f32.mrb[0].mxu0
    %v3195 = vadd.f32 %v3154, %v3194
    %v3196 = vpop.f32.mrb[0].mxu0
    %v3197 = vadd.f32 %v3156, %v3196
    %v3198 = vpop.f32.mrb[0].mxu0
    %v3199 = vpop.f32.mrb[0].mxu0
    %3200 = vdwg.mxu0
    %3201 = vmatprep.subr.bf16.mxu0 %v1506
    %3202 = vmatpush1.bf16.msra.mxu0 %v1505
    %3203 = vmatprep.subr.bf16.mxu0 %v1514
    %3204 = vmatpush1.bf16.msra.mxu0 %v1513
    %3205 = vmatprep.subr.bf16.mxu0 %v1522
    %3206 = vmatpush1.bf16.msra.mxu0 %v1521
    %3207 = vmatprep.subr.bf16.mxu0 %v1530
    %3208 = vmatpush1.bf16.msra.mxu0 %v1529
    %3209 = vmatprep.subr.bf16.mxu0 %v1538
    %3210 = vmatpush1.bf16.msra.mxu0 %v1537
    %3211 = vmatprep.subr.bf16.mxu0 %v1546
    %3212 = vmatpush1.bf16.msra.mxu0 %v1545
    %3213 = vmatprep.subr.bf16.mxu0 %v1554
    %3214 = vmatpush1.bf16.msra.mxu0 %v1553
    %3215 = vmatprep.subr.bf16.mxu0 %v1562
    %3216 = vmatpush1.bf16.msra.mxu0 %v1561
    %3217 = vmatprep.subr.bf16.mxu0 %v1570
    %3218 = vmatpush1.bf16.msra.mxu0 %v1569
    %3219 = vmatprep.subr.bf16.mxu0 %v1578
    %3220 = vmatpush1.bf16.msra.mxu0 %v1577
    %3221 = vmatprep.subr.bf16.mxu0 %v1586
    %3222 = vmatpush1.bf16.msra.mxu0 %v1585
    %3223 = vmatprep.subr.bf16.mxu0 %v1594
    %3224 = vmatpush1.bf16.msra.mxu0 %v1593
    %3225 = vmatprep.subr.bf16.mxu0 %v1602
    %3226 = vmatpush1.bf16.msra.mxu0 %v1601
    %3227 = vmatprep.subr.bf16.mxu0 %v1610
    %3228 = vmatpush1.bf16.msra.mxu0 %v1609
    %3229 = vmatprep.subr.bf16.mxu0 %v1618
    %3230 = vmatpush1.bf16.msra.mxu0 %v1617
    %3231 = vmatprep.subr.bf16.mxu0 %v1626
    %3232 = vmatpush1.bf16.msra.mxu0 %v1625
    %3233 = vmatprep.mubr.bf16.mxu0 %v976
    %3234 = vmatmul.mubr.bf16.gmra.mrb[0].mxu0 %v975
    %v3235 = vpop.f32.mrb[0].mxu0
    %v3236 = vadd.f32 %v3195, %v3235
    %v3237 = vpop.f32.mrb[0].mxu0
    %v3238 = vadd.f32 %v3197, %v3237
    %v3239 = vpop.f32.mrb[0].mxu0
    %v3240 = vpop.f32.mrb[0].mxu0
    %3241 = vdwg.mxu0
    %3242 = vmatprep.subr.bf16.mxu0 %v1634
    %3243 = vmatpush1.bf16.msra.mxu0 %v1633
    %3244 = vmatprep.subr.bf16.mxu0 %v1642
    %3245 = vmatpush1.bf16.msra.mxu0 %v1641
    %3246 = vmatprep.subr.bf16.mxu0 %v1650
    %3247 = vmatpush1.bf16.msra.mxu0 %v1649
    %3248 = vmatprep.subr.bf16.mxu0 %v1658
    %3249 = vmatpush1.bf16.msra.mxu0 %v1657
    %3250 = vmatprep.subr.bf16.mxu0 %v1666
    %3251 = vmatpush1.bf16.msra.mxu0 %v1665
    %3252 = vmatprep.subr.bf16.mxu0 %v1674
    %3253 = vmatpush1.bf16.msra.mxu0 %v1673
    %3254 = vmatprep.subr.bf16.mxu0 %v1682
    %3255 = vmatpush1.bf16.msra.mxu0 %v1681
    %3256 = vmatprep.subr.bf16.mxu0 %v1690
    %3257 = vmatpush1.bf16.msra.mxu0 %v1689
    %3258 = vmatprep.subr.bf16.mxu0 %v1698
    %3259 = vmatpush1.bf16.msra.mxu0 %v1697
    %3260 = vmatprep.subr.bf16.mxu0 %v1706
    %3261 = vmatpush1.bf16.msra.mxu0 %v1705
    %3262 = vmatprep.subr.bf16.mxu0 %v1714
    %3263 = vmatpush1.bf16.msra.mxu0 %v1713
    %3264 = vmatprep.subr.bf16.mxu0 %v1722
    %3265 = vmatpush1.bf16.msra.mxu0 %v1721
    %3266 = vmatprep.subr.bf16.mxu0 %v1730
    %3267 = vmatpush1.bf16.msra.mxu0 %v1729
    %3268 = vmatprep.subr.bf16.mxu0 %v1738
    %3269 = vmatpush1.bf16.msra.mxu0 %v1737
    %3270 = vmatprep.subr.bf16.mxu0 %v1746
    %3271 = vmatpush1.bf16.msra.mxu0 %v1745
    %3272 = vmatprep.subr.bf16.mxu0 %v1754
    %3273 = vmatpush1.bf16.msra.mxu0 %v1753
    %3274 = vmatprep.mubr.bf16.mxu0 %v978
    %3275 = vmatmul.mubr.bf16.gmra.mrb[0].mxu0 %v977
    %v3276 = vpop.f32.mrb[0].mxu0
    %v3277 = vadd.f32 %v3236, %v3276
    %v3278 = vpop.f32.mrb[0].mxu0
    %v3279 = vadd.f32 %v3238, %v3278
    %v3280 = vpop.f32.mrb[0].mxu0
    %v3281 = vpop.f32.mrb[0].mxu0
    %3282 = vdwg.mxu0
    %3283 = vmatprep.subr.bf16.mxu0 %v1762
    %3284 = vmatpush1.bf16.msra.mxu0 %v1761
    %3285 = vmatprep.subr.bf16.mxu0 %v1770
    %3286 = vmatpush1.bf16.msra.mxu0 %v1769
    %3287 = vmatprep.subr.bf16.mxu0 %v1778
    %3288 = vmatpush1.bf16.msra.mxu0 %v1777
    %3289 = vmatprep.subr.bf16.mxu0 %v1786
    %3290 = vmatpush1.bf16.msra.mxu0 %v1785
    %3291 = vmatprep.subr.bf16.mxu0 %v1794
    %3292 = vmatpush1.bf16.msra.mxu0 %v1793
    %3293 = vmatprep.subr.bf16.mxu0 %v1802
    %3294 = vmatpush1.bf16.msra.mxu0 %v1801
    %3295 = vmatprep.subr.bf16.mxu0 %v1810
    %3296 = vmatpush1.bf16.msra.mxu0 %v1809
    %3297 = vmatprep.subr.bf16.mxu0 %v1818
    %3298 = vmatpush1.bf16.msra.mxu0 %v1817
    %3299 = vmatprep.subr.bf16.mxu0 %v1826
    %3300 = vmatpush1.bf16.msra.mxu0 %v1825
    %3301 = vmatprep.subr.bf16.mxu0 %v1834
    %3302 = vmatpush1.bf16.msra.mxu0 %v1833
    %3303 = vmatprep.subr.bf16.mxu0 %v1842
    %3304 = vmatpush1.bf16.msra.mxu0 %v1841
    %3305 = vmatprep.subr.bf16.mxu0 %v1850
    %3306 = vmatpush1.bf16.msra.mxu0 %v1849
    %3307 = vmatprep.subr.bf16.mxu0 %v1858
    %3308 = vmatpush1.bf16.msra.mxu0 %v1857
    %3309 = vmatprep.subr.bf16.mxu0 %v1866
    %3310 = vmatpush1.bf16.msra.mxu0 %v1865
    %3311 = vmatprep.subr.bf16.mxu0 %v1874
    %3312 = vmatpush1.bf16.msra.mxu0 %v1873
    %3313 = vmatprep.subr.bf16.mxu0 %v1882
    %3314 = vmatpush1.bf16.msra.mxu0 %v1881
    %3315 = vmatprep.mubr.bf16.mxu0 %v980
    %3316 = vmatmul.mubr.bf16.gmra.mrb[0].mxu0 %v979
    %v3317 = vpop.f32.mrb[0].mxu0
    %v3318 = vadd.f32 %v3277, %v3317
    %v3319 = vpop.f32.mrb[0].mxu0
    %v3320 = vadd.f32 %v3279, %v3319
    %v3321 = vpop.f32.mrb[0].mxu0
    %v3322 = vpop.f32.mrb[0].mxu0
    %3323 = vdwg.mxu0
    %3324 = vmatprep.subr.bf16.mxu0 %v1890
    %3325 = vmatpush1.bf16.msra.mxu0 %v1889
    %3326 = vmatprep.subr.bf16.mxu0 %v1898
    %3327 = vmatpush1.bf16.msra.mxu0 %v1897
    %3328 = vmatprep.subr.bf16.mxu0 %v1906
    %3329 = vmatpush1.bf16.msra.mxu0 %v1905
    %3330 = vmatprep.subr.bf16.mxu0 %v1914
    %3331 = vmatpush1.bf16.msra.mxu0 %v1913
    %3332 = vmatprep.subr.bf16.mxu0 %v1922
    %3333 = vmatpush1.bf16.msra.mxu0 %v1921
    %3334 = vmatprep.subr.bf16.mxu0 %v1930
    %3335 = vmatpush1.bf16.msra.mxu0 %v1929
    %3336 = vmatprep.subr.bf16.mxu0 %v1938
    %3337 = vmatpush1.bf16.msra.mxu0 %v1937
    %3338 = vmatprep.subr.bf16.mxu0 %v1946
    %3339 = vmatpush1.bf16.msra.mxu0 %v1945
    %3340 = vmatprep.subr.bf16.mxu0 %v1954
    %3341 = vmatpush1.bf16.msra.mxu0 %v1953
    %3342 = vmatprep.subr.bf16.mxu0 %v1962
    %3343 = vmatpush1.bf16.msra.mxu0 %v1961
    %3344 = vmatprep.subr.bf16.mxu0 %v1970
    %3345 = vmatpush1.bf16.msra.mxu0 %v1969
    %3346 = vmatprep.subr.bf16.mxu0 %v1978
    %3347 = vmatpush1.bf16.msra.mxu0 %v1977
    %3348 = vmatprep.subr.bf16.mxu0 %v1986
    %3349 = vmatpush1.bf16.msra.mxu0 %v1985
    %3350 = vmatprep.subr.bf16.mxu0 %v1994
    %3351 = vmatpush1.bf16.msra.mxu0 %v1993
    %3352 = vmatprep.subr.bf16.mxu0 %v2002
    %3353 = vmatpush1.bf16.msra.mxu0 %v2001
    %3354 = vmatprep.subr.bf16.mxu0 %v2010
    %3355 = vmatpush1.bf16.msra.mxu0 %v2009
    %3356 = vmatprep.mubr.bf16.mxu0 %v982
    %3357 = vmatmul.mubr.bf16.gmra.mrb[0].mxu0 %v981
    %v3358 = vpop.f32.mrb[0].mxu0
    %v3359 = vadd.f32 %v3318, %v3358
    %v3360 = vpop.f32.mrb[0].mxu0
    %v3361 = vadd.f32 %v3320, %v3360
    %v3362 = vpop.f32.mrb[0].mxu0
    %v3363 = vpop.f32.mrb[0].mxu0
    %3364 = vdwg.mxu0
    %v3365 = vmax.f32 %v2375, 0.0
    %v3366 = vmax.f32 %v2377, 0.0
    %v3367 = vmax.f32 %v2703, 0.0
    %v3368 = vmax.f32 %v2705, 0.0
    %v3369 = vmax.f32 %v3031, 0.0
    %v3370 = vmax.f32 %v3033, 0.0
    %v3371 = vmax.f32 %v3359, 0.0
    %v3372 = vmax.f32 %v3361, 0.0
    %v3373 = vpack.c.bf16 %v3365, %v3365
    %v3374 = vpack.c.bf16 %v3366, %v3366
    %v3375 = vpack.c.bf16 %v3367, %v3367
    %v3376 = vpack.c.bf16 %v3368, %v3368
    %v3377 = vpack.c.bf16 %v3369, %v3369
    %v3378 = vpack.c.bf16 %v3370, %v3370
    %v3379 = vpack.c.bf16 %v3371, %v3371
    %v3380 = vpack.c.bf16 %v3372, %v3372
    %v3381 = vld [vmem:[#allocation11] sm:$0xf]
    %v3382 = vld [vmem:[#allocation11 + $0x4] sm:$0xf]
    %v3383 = vld [vmem:[#allocation11 + $0x8] sm:$0xf]
    %v3384 = vld [vmem:[#allocation11 + $0xc] sm:$0xf]
    %v3385 = vld [vmem:[#allocation11 + $0x10] sm:$0xf]
    %v3386 = vld [vmem:[#allocation11 + $0x14] sm:$0xf]
    %v3387 = vld [vmem:[#allocation11 + $0x18] sm:$0xf]
    %v3388 = vld [vmem:[#allocation11 + $0x1c] sm:$0xf]
    %v3389 = vld [vmem:[#allocation11 + $0x20] sm:$0xf]
    %v3390 = vld [vmem:[#allocation11 + $0x24] sm:$0xf]
    %v3391 = vld [vmem:[#allocation11 + $0x28] sm:$0xf]
    %v3392 = vld [vmem:[#allocation11 + $0x2c] sm:$0xf]
    %v3393 = vld [vmem:[#allocation11 + $0x30] sm:$0xf]
    %v3394 = vld [vmem:[#allocation11 + $0x34] sm:$0xf]
    %v3395 = vld [vmem:[#allocation11 + $0x38] sm:$0xf]
    %v3396 = vld [vmem:[#allocation11 + $0x3c] sm:$0xf]
    %v3397 = vld [vmem:[#allocation11 + $0x40] sm:$0xf]
    %v3398 = vld [vmem:[#allocation11 + $0x44] sm:$0xf]
    %v3399 = vld [vmem:[#allocation11 + $0x48] sm:$0xf]
    %v3400 = vld [vmem:[#allocation11 + $0x4c] sm:$0xf]
    %v3401 = vld [vmem:[#allocation11 + $0x50] sm:$0xf]
    %v3402 = vld [vmem:[#allocation11 + $0x54] sm:$0xf]
    %v3403 = vld [vmem:[#allocation11 + $0x58] sm:$0xf]
    %v3404 = vld [vmem:[#allocation11 + $0x5c] sm:$0xf]
    %v3405 = vld [vmem:[#allocation11 + $0x60] sm:$0xf]
    %v3406 = vld [vmem:[#allocation11 + $0x64] sm:$0xf]
    %v3407 = vld [vmem:[#allocation11 + $0x68] sm:$0xf]
    %v3408 = vld [vmem:[#allocation11 + $0x6c] sm:$0xf]
    %v3409 = vld [vmem:[#allocation11 + $0x70] sm:$0xf]
    %v3410 = vld [vmem:[#allocation11 + $0x74] sm:$0xf]
    %v3411 = vld [vmem:[#allocation11 + $0x78] sm:$0xf]
    %v3412 = vld [vmem:[#allocation11 + $0x7c] sm:$0xf]
    %v3413 = vld [vmem:[#allocation11 + $0x80] sm:$0xf]
    %v3414 = vld [vmem:[#allocation11 + $0x84] sm:$0xf]
    %v3415 = vld [vmem:[#allocation11 + $0x88] sm:$0xf]
    %v3416 = vld [vmem:[#allocation11 + $0x8c] sm:$0xf]
    %v3417 = vld [vmem:[#allocation11 + $0x90] sm:$0xf]
    %v3418 = vld [vmem:[#allocation11 + $0x94] sm:$0xf]
    %v3419 = vld [vmem:[#allocation11 + $0x98] sm:$0xf]
    %v3420 = vld [vmem:[#allocation11 + $0x9c] sm:$0xf]
    %v3421 = vld [vmem:[#allocation11 + $0xa0] sm:$0xf]
    %v3422 = vld [vmem:[#allocation11 + $0xa4] sm:$0xf]
    %v3423 = vld [vmem:[#allocation11 + $0xa8] sm:$0xf]
    %v3424 = vld [vmem:[#allocation11 + $0xac] sm:$0xf]
    %v3425 = vld [vmem:[#allocation11 + $0xb0] sm:$0xf]
    %v3426 = vld [vmem:[#allocation11 + $0xb4] sm:$0xf]
    %v3427 = vld [vmem:[#allocation11 + $0xb8] sm:$0xf]
    %v3428 = vld [vmem:[#allocation11 + $0xbc] sm:$0xf]
    %v3429 = vld [vmem:[#allocation11 + $0xc0] sm:$0xf]
    %v3430 = vld [vmem:[#allocation11 + $0xc4] sm:$0xf]
    %v3431 = vld [vmem:[#allocation11 + $0xc8] sm:$0xf]
    %v3432 = vld [vmem:[#allocation11 + $0xcc] sm:$0xf]
    %v3433 = vld [vmem:[#allocation11 + $0xd0] sm:$0xf]
    %v3434 = vld [vmem:[#allocation11 + $0xd4] sm:$0xf]
    %v3435 = vld [vmem:[#allocation11 + $0xd8] sm:$0xf]
    %v3436 = vld [vmem:[#allocation11 + $0xdc] sm:$0xf]
    %v3437 = vld [vmem:[#allocation11 + $0xe0] sm:$0xf]
    %v3438 = vld [vmem:[#allocation11 + $0xe4] sm:$0xf]
    %v3439 = vld [vmem:[#allocation11 + $0xe8] sm:$0xf]
    %v3440 = vld [vmem:[#allocation11 + $0xec] sm:$0xf]
    %v3441 = vld [vmem:[#allocation11 + $0xf0] sm:$0xf]
    %v3442 = vld [vmem:[#allocation11 + $0xf4] sm:$0xf]
    %v3443 = vld [vmem:[#allocation11 + $0xf8] sm:$0xf]
    %v3444 = vld [vmem:[#allocation11 + $0xfc] sm:$0xf]
    %v3445 = vld [vmem:[#allocation11 + $0x100] sm:$0xf]
    %v3446 = vld [vmem:[#allocation11 + $0x104] sm:$0xf]
    %v3447 = vld [vmem:[#allocation11 + $0x108] sm:$0xf]
    %v3448 = vld [vmem:[#allocation11 + $0x10c] sm:$0xf]
    %v3449 = vld [vmem:[#allocation11 + $0x110] sm:$0xf]
    %v3450 = vld [vmem:[#allocation11 + $0x114] sm:$0xf]
    %v3451 = vld [vmem:[#allocation11 + $0x118] sm:$0xf]
    %v3452 = vld [vmem:[#allocation11 + $0x11c] sm:$0xf]
    %v3453 = vld [vmem:[#allocation11 + $0x120] sm:$0xf]
    %v3454 = vld [vmem:[#allocation11 + $0x124] sm:$0xf]
    %v3455 = vld [vmem:[#allocation11 + $0x128] sm:$0xf]
    %v3456 = vld [vmem:[#allocation11 + $0x12c] sm:$0xf]
    %v3457 = vld [vmem:[#allocation11 + $0x130] sm:$0xf]
    %v3458 = vld [vmem:[#allocation11 + $0x134] sm:$0xf]
    %v3459 = vld [vmem:[#allocation11 + $0x138] sm:$0xf]
    %v3460 = vld [vmem:[#allocation11 + $0x13c] sm:$0xf]
    %v3461 = vld [vmem:[#allocation11 + $0x140] sm:$0xf]
    %v3462 = vld [vmem:[#allocation11 + $0x144] sm:$0xf]
    %v3463 = vld [vmem:[#allocation11 + $0x148] sm:$0xf]
    %v3464 = vld [vmem:[#allocation11 + $0x14c] sm:$0xf]
    %v3465 = vld [vmem:[#allocation11 + $0x150] sm:$0xf]
    %v3466 = vld [vmem:[#allocation11 + $0x154] sm:$0xf]
    %v3467 = vld [vmem:[#allocation11 + $0x158] sm:$0xf]
    %v3468 = vld [vmem:[#allocation11 + $0x15c] sm:$0xf]
    %v3469 = vld [vmem:[#allocation11 + $0x160] sm:$0xf]
    %v3470 = vld [vmem:[#allocation11 + $0x164] sm:$0xf]
    %v3471 = vld [vmem:[#allocation11 + $0x168] sm:$0xf]
    %v3472 = vld [vmem:[#allocation11 + $0x16c] sm:$0xf]
    %v3473 = vld [vmem:[#allocation11 + $0x170] sm:$0xf]
    %v3474 = vld [vmem:[#allocation11 + $0x174] sm:$0xf]
    %v3475 = vld [vmem:[#allocation11 + $0x178] sm:$0xf]
    %v3476 = vld [vmem:[#allocation11 + $0x17c] sm:$0xf]
    %v3477 = vld [vmem:[#allocation11 + $0x180] sm:$0xf]
    %v3478 = vld [vmem:[#allocation11 + $0x184] sm:$0xf]
    %v3479 = vld [vmem:[#allocation11 + $0x188] sm:$0xf]
    %v3480 = vld [vmem:[#allocation11 + $0x18c] sm:$0xf]
    %v3481 = vld [vmem:[#allocation11 + $0x190] sm:$0xf]
    %v3482 = vld [vmem:[#allocation11 + $0x194] sm:$0xf]
    %v3483 = vld [vmem:[#allocation11 + $0x198] sm:$0xf]
    %v3484 = vld [vmem:[#allocation11 + $0x19c] sm:$0xf]
    %v3485 = vld [vmem:[#allocation11 + $0x1a0] sm:$0xf]
    %v3486 = vld [vmem:[#allocation11 + $0x1a4] sm:$0xf]
    %v3487 = vld [vmem:[#allocation11 + $0x1a8] sm:$0xf]
    %v3488 = vld [vmem:[#allocation11 + $0x1ac] sm:$0xf]
    %v3489 = vld [vmem:[#allocation11 + $0x1b0] sm:$0xf]
    %v3490 = vld [vmem:[#allocation11 + $0x1b4] sm:$0xf]
    %v3491 = vld [vmem:[#allocation11 + $0x1b8] sm:$0xf]
    %v3492 = vld [vmem:[#allocation11 + $0x1bc] sm:$0xf]
    %v3493 = vld [vmem:[#allocation11 + $0x1c0] sm:$0xf]
    %v3494 = vld [vmem:[#allocation11 + $0x1c4] sm:$0xf]
    %v3495 = vld [vmem:[#allocation11 + $0x1c8] sm:$0xf]
    %v3496 = vld [vmem:[#allocation11 + $0x1cc] sm:$0xf]
    %v3497 = vld [vmem:[#allocation11 + $0x1d0] sm:$0xf]
    %v3498 = vld [vmem:[#allocation11 + $0x1d4] sm:$0xf]
    %v3499 = vld [vmem:[#allocation11 + $0x1d8] sm:$0xf]
    %v3500 = vld [vmem:[#allocation11 + $0x1dc] sm:$0xf]
    %v3501 = vld [vmem:[#allocation11 + $0x1e0] sm:$0xf]
    %v3502 = vld [vmem:[#allocation11 + $0x1e4] sm:$0xf]
    %v3503 = vld [vmem:[#allocation11 + $0x1e8] sm:$0xf]
    %v3504 = vld [vmem:[#allocation11 + $0x1ec] sm:$0xf]
    %v3505 = vld [vmem:[#allocation11 + $0x1f0] sm:$0xf]
    %v3506 = vld [vmem:[#allocation11 + $0x1f4] sm:$0xf]
    %v3507 = vld [vmem:[#allocation11 + $0x1f8] sm:$0xf]
    %v3508 = vld [vmem:[#allocation11 + $0x1fc] sm:$0xf]
    %v3637 = vunpack.c.l.b16 %v3381
    %v3638 = vunpack.c.l.b16 %v3382
    %v3639 = vunpack.c.l.b16 %v3383
    %v3640 = vunpack.c.l.b16 %v3384
    %v3641 = vunpack.c.l.b16 %v3385
    %v3642 = vunpack.c.l.b16 %v3386
    %v3643 = vunpack.c.l.b16 %v3387
    %v3644 = vunpack.c.l.b16 %v3388
    %v3645 = vunpack.c.l.b16 %v3389
    %v3646 = vunpack.c.l.b16 %v3390
    %v3647 = vunpack.c.l.b16 %v3391
    %v3648 = vunpack.c.l.b16 %v3392
    %v3649 = vunpack.c.l.b16 %v3393
    %v3650 = vunpack.c.l.b16 %v3394
    %v3651 = vunpack.c.l.b16 %v3395
    %v3652 = vunpack.c.l.b16 %v3396
    %v3653 = vunpack.c.l.b16 %v3397
    %v3654 = vunpack.c.l.b16 %v3398
    %v3655 = vunpack.c.l.b16 %v3399
    %v3656 = vunpack.c.l.b16 %v3400
    %v3657 = vunpack.c.l.b16 %v3401
    %v3658 = vunpack.c.l.b16 %v3402
    %v3659 = vunpack.c.l.b16 %v3403
    %v3660 = vunpack.c.l.b16 %v3404
    %v3661 = vunpack.c.l.b16 %v3405
    %v3662 = vunpack.c.l.b16 %v3406
    %v3663 = vunpack.c.l.b16 %v3407
    %v3664 = vunpack.c.l.b16 %v3408
    %v3665 = vunpack.c.l.b16 %v3409
    %v3666 = vunpack.c.l.b16 %v3410
    %v3667 = vunpack.c.l.b16 %v3411
    %v3668 = vunpack.c.l.b16 %v3412
    %v3669 = vunpack.c.l.b16 %v3413
    %v3670 = vunpack.c.l.b16 %v3414
    %v3671 = vunpack.c.l.b16 %v3415
    %v3672 = vunpack.c.l.b16 %v3416
    %v3673 = vunpack.c.l.b16 %v3417
    %v3674 = vunpack.c.l.b16 %v3418
    %v3675 = vunpack.c.l.b16 %v3419
    %v3676 = vunpack.c.l.b16 %v3420
    %v3677 = vunpack.c.l.b16 %v3421
    %v3678 = vunpack.c.l.b16 %v3422
    %v3679 = vunpack.c.l.b16 %v3423
    %v3680 = vunpack.c.l.b16 %v3424
    %v3681 = vunpack.c.l.b16 %v3425
    %v3682 = vunpack.c.l.b16 %v3426
    %v3683 = vunpack.c.l.b16 %v3427
    %v3684 = vunpack.c.l.b16 %v3428
    %v3685 = vunpack.c.l.b16 %v3429
    %v3686 = vunpack.c.l.b16 %v3430
    %v3687 = vunpack.c.l.b16 %v3431
    %v3688 = vunpack.c.l.b16 %v3432
    %v3689 = vunpack.c.l.b16 %v3433
    %v3690 = vunpack.c.l.b16 %v3434
    %v3691 = vunpack.c.l.b16 %v3435
    %v3692 = vunpack.c.l.b16 %v3436
    %v3693 = vunpack.c.l.b16 %v3437
    %v3694 = vunpack.c.l.b16 %v3438
    %v3695 = vunpack.c.l.b16 %v3439
    %v3696 = vunpack.c.l.b16 %v3440
    %v3697 = vunpack.c.l.b16 %v3441
    %v3698 = vunpack.c.l.b16 %v3442
    %v3699 = vunpack.c.l.b16 %v3443
    %v3700 = vunpack.c.l.b16 %v3444
    %v3701 = vunpack.c.l.b16 %v3445
    %v3702 = vunpack.c.l.b16 %v3446
    %v3703 = vunpack.c.l.b16 %v3447
    %v3704 = vunpack.c.l.b16 %v3448
    %v3705 = vunpack.c.l.b16 %v3449
    %v3706 = vunpack.c.l.b16 %v3450
    %v3707 = vunpack.c.l.b16 %v3451
    %v3708 = vunpack.c.l.b16 %v3452
    %v3709 = vunpack.c.l.b16 %v3453
    %v3710 = vunpack.c.l.b16 %v3454
    %v3711 = vunpack.c.l.b16 %v3455
    %v3712 = vunpack.c.l.b16 %v3456
    %v3713 = vunpack.c.l.b16 %v3457
    %v3714 = vunpack.c.l.b16 %v3458
    %v3715 = vunpack.c.l.b16 %v3459
    %v3716 = vunpack.c.l.b16 %v3460
    %v3717 = vunpack.c.l.b16 %v3461
    %v3718 = vunpack.c.l.b16 %v3462
    %v3719 = vunpack.c.l.b16 %v3463
    %v3720 = vunpack.c.l.b16 %v3464
    %v3721 = vunpack.c.l.b16 %v3465
    %v3722 = vunpack.c.l.b16 %v3466
    %v3723 = vunpack.c.l.b16 %v3467
    %v3724 = vunpack.c.l.b16 %v3468
    %v3725 = vunpack.c.l.b16 %v3469
    %v3726 = vunpack.c.l.b16 %v3470
    %v3727 = vunpack.c.l.b16 %v3471
    %v3728 = vunpack.c.l.b16 %v3472
    %v3729 = vunpack.c.l.b16 %v3473
    %v3730 = vunpack.c.l.b16 %v3474
    %v3731 = vunpack.c.l.b16 %v3475
    %v3732 = vunpack.c.l.b16 %v3476
    %v3733 = vunpack.c.l.b16 %v3477
    %v3734 = vunpack.c.l.b16 %v3478
    %v3735 = vunpack.c.l.b16 %v3479
    %v3736 = vunpack.c.l.b16 %v3480
    %v3737 = vunpack.c.l.b16 %v3481
    %v3738 = vunpack.c.l.b16 %v3482
    %v3739 = vunpack.c.l.b16 %v3483
    %v3740 = vunpack.c.l.b16 %v3484
    %v3741 = vunpack.c.l.b16 %v3485
    %v3742 = vunpack.c.l.b16 %v3486
    %v3743 = vunpack.c.l.b16 %v3487
    %v3744 = vunpack.c.l.b16 %v3488
    %v3745 = vunpack.c.l.b16 %v3489
    %v3746 = vunpack.c.l.b16 %v3490
    %v3747 = vunpack.c.l.b16 %v3491
    %v3748 = vunpack.c.l.b16 %v3492
    %v3749 = vunpack.c.l.b16 %v3493
    %v3750 = vunpack.c.l.b16 %v3494
    %v3751 = vunpack.c.l.b16 %v3495
    %v3752 = vunpack.c.l.b16 %v3496
    %v3753 = vunpack.c.l.b16 %v3497
    %v3754 = vunpack.c.l.b16 %v3498
    %v3755 = vunpack.c.l.b16 %v3499
    %v3756 = vunpack.c.l.b16 %v3500
    %v3757 = vunpack.c.l.b16 %v3501
    %v3758 = vunpack.c.l.b16 %v3502
    %v3759 = vunpack.c.l.b16 %v3503
    %v3760 = vunpack.c.l.b16 %v3504
    %v3761 = vunpack.c.l.b16 %v3505
    %v3762 = vunpack.c.l.b16 %v3506
    %v3763 = vunpack.c.l.b16 %v3507
    %v3764 = vunpack.c.l.b16 %v3508
    %v3765 = vpack.c.b16 %v3638, %v3637
    %v3766 = vpack.c.b16 %v3640, %v3639
    %v3767 = vpack.c.b16 %v3642, %v3641
    %v3768 = vpack.c.b16 %v3644, %v3643
    %v3769 = vpack.c.b16 %v3646, %v3645
    %v3770 = vpack.c.b16 %v3648, %v3647
    %v3771 = vpack.c.b16 %v3650, %v3649
    %v3772 = vpack.c.b16 %v3652, %v3651
    %v3773 = vpack.c.b16 %v3654, %v3653
    %v3774 = vpack.c.b16 %v3656, %v3655
    %v3775 = vpack.c.b16 %v3658, %v3657
    %v3776 = vpack.c.b16 %v3660, %v3659
    %v3777 = vpack.c.b16 %v3662, %v3661
    %v3778 = vpack.c.b16 %v3664, %v3663
    %v3779 = vpack.c.b16 %v3666, %v3665
    %v3780 = vpack.c.b16 %v3668, %v3667
    %v3781 = vpack.c.b16 %v3670, %v3669
    %v3782 = vpack.c.b16 %v3672, %v3671
    %v3783 = vpack.c.b16 %v3674, %v3673
    %v3784 = vpack.c.b16 %v3676, %v3675
    %v3785 = vpack.c.b16 %v3678, %v3677
    %v3786 = vpack.c.b16 %v3680, %v3679
    %v3787 = vpack.c.b16 %v3682, %v3681
    %v3788 = vpack.c.b16 %v3684, %v3683
    %v3789 = vpack.c.b16 %v3686, %v3685
    %v3790 = vpack.c.b16 %v3688, %v3687
    %v3791 = vpack.c.b16 %v3690, %v3689
    %v3792 = vpack.c.b16 %v3692, %v3691
    %v3793 = vpack.c.b16 %v3694, %v3693
    %v3794 = vpack.c.b16 %v3696, %v3695
    %v3795 = vpack.c.b16 %v3698, %v3697
    %v3796 = vpack.c.b16 %v3700, %v3699
    %v3797 = vpack.c.b16 %v3702, %v3701
    %v3798 = vpack.c.b16 %v3704, %v3703
    %v3799 = vpack.c.b16 %v3706, %v3705
    %v3800 = vpack.c.b16 %v3708, %v3707
    %v3801 = vpack.c.b16 %v3710, %v3709
    %v3802 = vpack.c.b16 %v3712, %v3711
    %v3803 = vpack.c.b16 %v3714, %v3713
    %v3804 = vpack.c.b16 %v3716, %v3715
    %v3805 = vpack.c.b16 %v3718, %v3717
    %v3806 = vpack.c.b16 %v3720, %v3719
    %v3807 = vpack.c.b16 %v3722, %v3721
    %v3808 = vpack.c.b16 %v3724, %v3723
    %v3809 = vpack.c.b16 %v3726, %v3725
    %v3810 = vpack.c.b16 %v3728, %v3727
    %v3811 = vpack.c.b16 %v3730, %v3729
    %v3812 = vpack.c.b16 %v3732, %v3731
    %v3813 = vpack.c.b16 %v3734, %v3733
    %v3814 = vpack.c.b16 %v3736, %v3735
    %v3815 = vpack.c.b16 %v3738, %v3737
    %v3816 = vpack.c.b16 %v3740, %v3739
    %v3817 = vpack.c.b16 %v3742, %v3741
    %v3818 = vpack.c.b16 %v3744, %v3743
    %v3819 = vpack.c.b16 %v3746, %v3745
    %v3820 = vpack.c.b16 %v3748, %v3747
    %v3821 = vpack.c.b16 %v3750, %v3749
    %v3822 = vpack.c.b16 %v3752, %v3751
    %v3823 = vpack.c.b16 %v3754, %v3753
    %v3824 = vpack.c.b16 %v3756, %v3755
    %v3825 = vpack.c.b16 %v3758, %v3757
    %v3826 = vpack.c.b16 %v3760, %v3759
    %v3827 = vpack.c.b16 %v3762, %v3761
    %v3828 = vpack.c.b16 %v3764, %v3763
    %3893 = vmatprep.subr.bf16.mxu0 0
    %3894 = vmatpush1.bf16.msra.mxu0 %v3765
    %3895 = vmatprep.subr.bf16.mxu0 0
    %3896 = vmatpush1.bf16.msra.mxu0 %v3766
    %3897 = vmatprep.subr.bf16.mxu0 0
    %3898 = vmatpush1.bf16.msra.mxu0 %v3767
    %3899 = vmatprep.subr.bf16.mxu0 0
    %3900 = vmatpush1.bf16.msra.mxu0 %v3768
    %3901 = vmatprep.subr.bf16.mxu0 0
    %3902 = vmatpush1.bf16.msra.mxu0 %v3769
    %3903 = vmatprep.subr.bf16.mxu0 0
    %3904 = vmatpush1.bf16.msra.mxu0 %v3770
    %3905 = vmatprep.subr.bf16.mxu0 0
    %3906 = vmatpush1.bf16.msra.mxu0 %v3771
    %3907 = vmatprep.subr.bf16.mxu0 0
    %3908 = vmatpush1.bf16.msra.mxu0 %v3772
    %3909 = vmatprep.subr.bf16.mxu0 0
    %3910 = vmatpush1.bf16.msra.mxu0 %v3773
    %3911 = vmatprep.subr.bf16.mxu0 0
    %3912 = vmatpush1.bf16.msra.mxu0 %v3774
    %3913 = vmatprep.subr.bf16.mxu0 0
    %3914 = vmatpush1.bf16.msra.mxu0 %v3775
    %3915 = vmatprep.subr.bf16.mxu0 0
    %3916 = vmatpush1.bf16.msra.mxu0 %v3776
    %3917 = vmatprep.subr.bf16.mxu0 0
    %3918 = vmatpush1.bf16.msra.mxu0 %v3777
    %3919 = vmatprep.subr.bf16.mxu0 0
    %3920 = vmatpush1.bf16.msra.mxu0 %v3778
    %3921 = vmatprep.subr.bf16.mxu0 0
    %3922 = vmatpush1.bf16.msra.mxu0 %v3779
    %3923 = vmatprep.subr.bf16.mxu0 0
    %3924 = vmatpush1.bf16.msra.mxu0 %v3780
    %3925 = vmatprep.mubr.bf16.mxu0 %v3374
    %3926 = vmatmul.mubr.bf16.gmra.mrb[0].mxu0 %v3373
    %v3927 = vpop.f32.mrb[0].mxu0
    %v3928 = vadd.f32 0.0, %v3927
    %v3929 = vpop.f32.mrb[0].mxu0
    %v3930 = vpop.f32.mrb[0].mxu0
    %v3931 = vpop.f32.mrb[0].mxu0
    %3932 = vdwg.mxu0
    %3933 = vmatprep.subr.bf16.mxu0 0
    %3934 = vmatpush1.bf16.msra.mxu0 %v3781
    %3935 = vmatprep.subr.bf16.mxu0 0
    %3936 = vmatpush1.bf16.msra.mxu0 %v3782
    %3937 = vmatprep.subr.bf16.mxu0 0
    %3938 = vmatpush1.bf16.msra.mxu0 %v3783
    %3939 = vmatprep.subr.bf16.mxu0 0
    %3940 = vmatpush1.bf16.msra.mxu0 %v3784
    %3941 = vmatprep.subr.bf16.mxu0 0
    %3942 = vmatpush1.bf16.msra.mxu0 %v3785
    %3943 = vmatprep.subr.bf16.mxu0 0
    %3944 = vmatpush1.bf16.msra.mxu0 %v3786
    %3945 = vmatprep.subr.bf16.mxu0 0
    %3946 = vmatpush1.bf16.msra.mxu0 %v3787
    %3947 = vmatprep.subr.bf16.mxu0 0
    %3948 = vmatpush1.bf16.msra.mxu0 %v3788
    %3949 = vmatprep.subr.bf16.mxu0 0
    %3950 = vmatpush1.bf16.msra.mxu0 %v3789
    %3951 = vmatprep.subr.bf16.mxu0 0
    %3952 = vmatpush1.bf16.msra.mxu0 %v3790
    %3953 = vmatprep.subr.bf16.mxu0 0
    %3954 = vmatpush1.bf16.msra.mxu0 %v3791
    %3955 = vmatprep.subr.bf16.mxu0 0
    %3956 = vmatpush1.bf16.msra.mxu0 %v3792
    %3957 = vmatprep.subr.bf16.mxu0 0
    %3958 = vmatpush1.bf16.msra.mxu0 %v3793
    %3959 = vmatprep.subr.bf16.mxu0 0
    %3960 = vmatpush1.bf16.msra.mxu0 %v3794
    %3961 = vmatprep.subr.bf16.mxu0 0
    %3962 = vmatpush1.bf16.msra.mxu0 %v3795
    %3963 = vmatprep.subr.bf16.mxu0 0
    %3964 = vmatpush1.bf16.msra.mxu0 %v3796
    %3965 = vmatprep.mubr.bf16.mxu0 %v3376
    %3966 = vmatmul.mubr.bf16.gmra.mrb[0].mxu0 %v3375
    %v3967 = vpop.f32.mrb[0].mxu0
    %v3968 = vadd.f32 %v3928, %v3967
    %v3969 = vpop.f32.mrb[0].mxu0
    %v3970 = vpop.f32.mrb[0].mxu0
    %v3971 = vpop.f32.mrb[0].mxu0
    %3972 = vdwg.mxu0
    %3973 = vmatprep.subr.bf16.mxu0 0
    %3974 = vmatpush1.bf16.msra.mxu0 %v3797
    %3975 = vmatprep.subr.bf16.mxu0 0
    %3976 = vmatpush1.bf16.msra.mxu0 %v3798
    %3977 = vmatprep.subr.bf16.mxu0 0
    %3978 = vmatpush1.bf16.msra.mxu0 %v3799
    %3979 = vmatprep.subr.bf16.mxu0 0
    %3980 = vmatpush1.bf16.msra.mxu0 %v3800
    %3981 = vmatprep.subr.bf16.mxu0 0
    %3982 = vmatpush1.bf16.msra.mxu0 %v3801
    %3983 = vmatprep.subr.bf16.mxu0 0
    %3984 = vmatpush1.bf16.msra.mxu0 %v3802
    %3985 = vmatprep.subr.bf16.mxu0 0
    %3986 = vmatpush1.bf16.msra.mxu0 %v3803
    %3987 = vmatprep.subr.bf16.mxu0 0
    %3988 = vmatpush1.bf16.msra.mxu0 %v3804
    %3989 = vmatprep.subr.bf16.mxu0 0
    %3990 = vmatpush1.bf16.msra.mxu0 %v3805
    %3991 = vmatprep.subr.bf16.mxu0 0
    %3992 = vmatpush1.bf16.msra.mxu0 %v3806
    %3993 = vmatprep.subr.bf16.mxu0 0
    %3994 = vmatpush1.bf16.msra.mxu0 %v3807
    %3995 = vmatprep.subr.bf16.mxu0 0
    %3996 = vmatpush1.bf16.msra.mxu0 %v3808
    %3997 = vmatprep.subr.bf16.mxu0 0
    %3998 = vmatpush1.bf16.msra.mxu0 %v3809
    %3999 = vmatprep.subr.bf16.mxu0 0
    %4000 = vmatpush1.bf16.msra.mxu0 %v3810
    %4001 = vmatprep.subr.bf16.mxu0 0
    %4002 = vmatpush1.bf16.msra.mxu0 %v3811
    %4003 = vmatprep.subr.bf16.mxu0 0
    %4004 = vmatpush1.bf16.msra.mxu0 %v3812
    %4005 = vmatprep.mubr.bf16.mxu0 %v3378
    %4006 = vmatmul.mubr.bf16.gmra.mrb[0].mxu0 %v3377
    %v4007 = vpop.f32.mrb[0].mxu0
    %v4008 = vadd.f32 %v3968, %v4007
    %v4009 = vpop.f32.mrb[0].mxu0
    %v4010 = vpop.f32.mrb[0].mxu0
    %v4011 = vpop.f32.mrb[0].mxu0
    %4012 = vdwg.mxu0
    %4013 = vmatprep.subr.bf16.mxu0 0
    %4014 = vmatpush1.bf16.msra.mxu0 %v3813
    %4015 = vmatprep.subr.bf16.mxu0 0
    %4016 = vmatpush1.bf16.msra.mxu0 %v3814
    %4017 = vmatprep.subr.bf16.mxu0 0
    %4018 = vmatpush1.bf16.msra.mxu0 %v3815
    %4019 = vmatprep.subr.bf16.mxu0 0
    %4020 = vmatpush1.bf16.msra.mxu0 %v3816
    %4021 = vmatprep.subr.bf16.mxu0 0
    %4022 = vmatpush1.bf16.msra.mxu0 %v3817
    %4023 = vmatprep.subr.bf16.mxu0 0
    %4024 = vmatpush1.bf16.msra.mxu0 %v3818
    %4025 = vmatprep.subr.bf16.mxu0 0
    %4026 = vmatpush1.bf16.msra.mxu0 %v3819
    %4027 = vmatprep.subr.bf16.mxu0 0
    %4028 = vmatpush1.bf16.msra.mxu0 %v3820
    %4029 = vmatprep.subr.bf16.mxu0 0
    %4030 = vmatpush1.bf16.msra.mxu0 %v3821
    %4031 = vmatprep.subr.bf16.mxu0 0
    %4032 = vmatpush1.bf16.msra.mxu0 %v3822
    %4033 = vmatprep.subr.bf16.mxu0 0
    %4034 = vmatpush1.bf16.msra.mxu0 %v3823
    %4035 = vmatprep.subr.bf16.mxu0 0
    %4036 = vmatpush1.bf16.msra.mxu0 %v3824
    %4037 = vmatprep.subr.bf16.mxu0 0
    %4038 = vmatpush1.bf16.msra.mxu0 %v3825
    %4039 = vmatprep.subr.bf16.mxu0 0
    %4040 = vmatpush1.bf16.msra.mxu0 %v3826
    %4041 = vmatprep.subr.bf16.mxu0 0
    %4042 = vmatpush1.bf16.msra.mxu0 %v3827
    %4043 = vmatprep.subr.bf16.mxu0 0
    %4044 = vmatpush1.bf16.msra.mxu0 %v3828
    %4045 = vmatprep.mubr.bf16.mxu0 %v3380
    %4046 = vmatmul.mubr.bf16.gmra.mrb[0].mxu0 %v3379
    %v4047 = vpop.f32.mrb[0].mxu0
    %v4048 = vadd.f32 %v4008, %v4047
    %v4049 = vpop.f32.mrb[0].mxu0
    %v4050 = vpop.f32.mrb[0].mxu0
    %v4051 = vpop.f32.mrb[0].mxu0
    %4052 = vdwg.mxu0
    %4053 = vst [vmem:[%s7] sm:$0x3] %v4048
    // Predicated region
    $region46: #{inception_aux_forward.1} parent=1 // pred_check
      _
    $region47: #{inception_aux_forward.1} parent=1 // pred_check_branch
      %4055 = sbr.rel (0) target = $region49
    $region48: #{inception_aux_forward.1} parent=1 // pred_region
      _
    $region49: #{inception_aux_forward.1} parent=1 // pred_fallthru
      _
    // Predicated region
    $region50: #{inception_aux_forward.1} parent=1 // pred_check
      _
    $region51: #{inception_aux_forward.1} parent=1 // pred_check_branch
      %4057 = sbr.rel (0) target = $region53
    $region52: #{inception_aux_forward.1} parent=1 // pred_region
      _
    $region53: #{inception_aux_forward.1} parent=1 // pred_fallthru
      _
    %4058 = vsyncpa [#allocation5], 1
    %4059 = vsyncpa [#allocation7], 1
    %4060 = vsyncpa [#allocation10], 1
  %4061 = vsyncmov [#allocation3]
  %s4062 = vpop.sfrf %4061
  %p4063 = scmp.eq.s32.totalorder %s4062, 0
  %p4064 = pneg %p4063
  %4066 = shalt.err (%p4064)

</llo_original>
